<compile_context>
chip_gen: v6e
topology: v6e:2x2x1
jax: 0.10.0
libtpu: 0.0.40
codegen_flags: <defaults>
</compile_context>

<pallas_src>
import functools

import numpy as np

import jax
import jax.numpy as jnp
from jax.experimental import pallas as pl
from jax.experimental.pallas import tpu as pltpu


# --------------------------- in-kernel building blocks ----------------------

def _conv_bn(x, g_ref, w_ref, scale_ref, bias_ref, *, relu, residual=None):
    """Conv1d(bias=False) + folded BN (+ residual add) (+ ReLU).

    x         : (M_in, Cin) value (any float dtype), batch folded into rows.
    g_ref     : (K*M_out, M_in) bf16  0/1 gather matrix encoding tap shift,
                stride and zero padding, block-diagonal per batch element.
    w_ref     : (K*Cin, Cout) bf16    conv weight, tap-major.
    scale_ref : (1, Cout) f32         folded BatchNorm scale.
    bias_ref  : (1, Cout) f32         folded BatchNorm bias.
    Returns (M_out, Cout) f32.
    """
    m_in, cin = x.shape
    k_taps = w_ref.shape[0] // cin
    m_out = g_ref.shape[0] // k_taps

    xb = x.astype(jnp.bfloat16)
    # One MXU op gathers all K shifted / strided / zero-padded row sets.
    cols = jnp.dot(g_ref[...], xb, preferred_element_type=jnp.float32)
    cols = cols.astype(jnp.bfloat16)                         # (K*M_out, Cin)

    acc = None
    for k in range(k_taps):
        part = jnp.dot(cols[k * m_out:(k + 1) * m_out, :],
                       w_ref[k * cin:(k + 1) * cin, :],
                       preferred_element_type=jnp.float32)   # (M_out, Cout)
        acc = part if acc is None else acc + part

    # f32 epilogue (v5e has no bf16 VALU path).
    y = acc * scale_ref[...] + bias_ref[...]
    if residual is not None:
        y = y + residual
    if relu:
        y = jnp.maximum(y, 0.0)
    return y


def _maxpool_3_2_1(x, g_ref):
    """MaxPool1d(kernel=3, stride=2, padding=1).

    The input is post-ReLU (>= 0) and every window contains at least one real
    tap, so zero padding in the gather matmul is equivalent to -inf padding.
    """
    m_out = g_ref.shape[0] // 3
    taps = jnp.dot(g_ref[...], x.astype(jnp.bfloat16),
                   preferred_element_type=jnp.float32)       # (3*M_out, C)
    t0 = taps[0 * m_out:1 * m_out, :]
    t1 = taps[1 * m_out:2 * m_out, :]
    t2 = taps[2 * m_out:3 * m_out, :]
    return jnp.maximum(jnp.maximum(t0, t1), t2)


def _profile_cnn_kernel(treedef, batch, *refs):
    """Fused whole-network forward.  refs = (x_ref, *weight_refs, out_ref)."""
    x_ref = refs[0]
    o_ref = refs[-1]
    net = jax.tree_util.tree_unflatten(treedef, refs[1:-1])

    x = x_ref[...]                                           # (B*L, dim_in) bf16

    stem = net["stem"]
    x = _conv_bn(x, stem["g"], stem["w"], stem["scale"], stem["bias"], relu=True)
    x = _maxpool_3_2_1(x, net["pool_g"])

    for layer in net["layers"]:
        for blk in layer:
            identity = x                                     # f32
            c1 = blk["conv1"]
            out = _conv_bn(x, c1["g"], c1["w"], c1["scale"], c1["bias"],
                           relu=True)
            if "down" in blk:
                d = blk["down"]
                identity = _conv_bn(x, d["g"], d["w"], d["scale"], d["bias"],
                                    relu=False)
            c2 = blk["conv2"]
            # conv2 + bn2 + residual add + ReLU, all in f32 registers.
            x = _conv_bn(out, c2["g"], c2["w"], c2["scale"], c2["bias"],
                         relu=True, residual=identity)

    # AdaptiveMaxPool1d(1): max over the length rows of each batch element.
    l_final = x.shape[0] // batch
    for b in range(batch):
        seg = x[b * l_final:(b + 1) * l_final, :]
        o_ref[pl.ds(b, 1), :] = jnp.max(
            seg, axis=0, keepdims=True).astype(o_ref.dtype)


# --------------------------- wrapper-side constants --------------------------

def _make_gather(batch, l_in, k_taps, stride, pad, dtype=jnp.bfloat16):
    """0/1 gather matrix implementing tap shift + stride + zero padding.

    Shape (K * B*Lout, B*Lin), block-diagonal per batch element so that batch
    can be folded into the matmul M dimension.  Built with numpy → a true
    compile-time constant.
    """
    l_out = (l_in + 2 * pad - k_taps) // stride + 1
    g = np.zeros((k_taps, batch * l_out, batch * l_in), np.float32)
    for k in range(k_taps):
        for b in range(batch):
            for i in range(l_out):
                src = stride * i - pad + k
                if 0 <= src < l_in:
                    g[k, b * l_out + i, b * l_in + src] = 1.0
    g = g.reshape(k_taps * batch * l_out, batch * l_in)
    return jnp.asarray(g, dtype), l_out


def _conv_arrays(p, batch, l_in, stride):
    """Kernel-ready arrays for one Conv1d+BN: gather matrix, bf16 weight, BN."""
    k_taps, cin, cout = p["w"].shape
    pad = (k_taps - 1) // 2
    g, l_out = _make_gather(batch, l_in, k_taps, stride, pad)
    arrays = {
        "g": g,
        "w": p["w"].reshape(k_taps * cin, cout).astype(jnp.bfloat16),
        "scale": p["scale"].reshape(1, cout).astype(jnp.float32),
        "bias": p["bias"].reshape(1, cout).astype(jnp.float32),
    }
    return arrays, l_out


# --------------------------- Parameters (synthetic) --------------------------

def _conv_bn_params(key, k_taps, cin, cout):
    """Deterministic Conv1d weight + folded BatchNorm1d (eval-mode) affine."""
    k1, k2, k3, k4, k5 = jax.random.split(key, 5)
    w = jax.random.normal(k1, (k_taps, cin, cout), jnp.float32) / jnp.sqrt(k_taps * cin)
    gamma = 1.0 + 0.1 * jax.random.normal(k2, (cout,), jnp.float32)
    beta = 0.1 * jax.random.normal(k3, (cout,), jnp.float32)
    run_mean = 0.1 * jax.random.normal(k4, (cout,), jnp.float32)
    run_var = 1.0 + 0.5 * jax.random.uniform(k5, (cout,), jnp.float32)
    eps = 1e-5
    scale = gamma / jnp.sqrt(run_var + eps)
    bias = beta - run_mean * scale
    return {"w": w, "scale": scale, "bias": bias}


def init_profile_cnn_params(key, dim_in, base_channels, blocks):
    keys = iter(jax.random.split(key, 128))
    params = {"stem": _conv_bn_params(next(keys), 3, dim_in, base_channels)}
    in_ch = base_channels
    layer_cfg = [(blocks[0], base_channels, 1),
                 (blocks[1], base_channels * 2, 2),
                 (blocks[2], base_channels * 4, 2),
                 (blocks[3], base_channels * 8, 2)]
    layers = []
    for n_blk, ch, layer_stride in layer_cfg:
        layer = []
        for bi in range(n_blk):
            s = layer_stride if bi == 0 else 1
            blk = {
                "stride": s,
                "conv1": _conv_bn_params(next(keys), 3, in_ch, ch),
                "conv2": _conv_bn_params(next(keys), 3, ch, ch),
            }
            if s != 1 or in_ch != ch:
                blk["down"] = _conv_bn_params(next(keys), 1, in_ch, ch)
            in_ch = ch
            layer.append(blk)
        layers.append(layer)
    params["layers"] = layers
    return params


# ------------------------------ Forward pass ---------------------------------

def profile_cnn_forward(params, profile, profile_len):
    """profile: (B, L, dim_in) f32; profile_len: (B, 1). Returns (B, 8*base+1)."""
    batch, length, dim_in = profile.shape

    # Build the kernel-side constant/weight tree (gathers, bf16 weights, BN).
    net = {}
    net["stem"], l_cur = _conv_arrays(params["stem"], batch, length, stride=2)
    net["pool_g"], l_cur = _make_gather(batch, l_cur, 3, 2, 1)

    layers = []
    for layer in params["layers"]:
        blocks = []
        for blk in layer:
            entry = {}
            l_in = l_cur
            entry["conv1"], l_cur = _conv_arrays(blk["conv1"], batch, l_in,
                                                 blk["stride"])
            entry["conv2"], l_cur = _conv_arrays(blk["conv2"], batch, l_cur, 1)
            if "down" in blk:
                entry["down"], _ = _conv_arrays(blk["down"], batch, l_in,
                                                blk["stride"])
            blocks.append(entry)
        layers.append(blocks)
    net["layers"] = layers

    flat, treedef = jax.tree_util.tree_flatten(net)
    c_final = params["layers"][-1][-1]["conv2"]["w"].shape[-1]

    # Batch folded into rows; bf16 for the MXU path.
    x2 = profile.reshape(batch * length, dim_in).astype(jnp.bfloat16)

    vmem_spec = pl.BlockSpec(memory_space=pltpu.MemorySpace.VMEM)
    feat = pl.pallas_call(
        functools.partial(_profile_cnn_kernel, treedef, batch),
        out_shape=jax.ShapeDtypeStruct((batch, c_final), jnp.float32),
        in_specs=[vmem_spec] * (1 + len(flat)),
        out_specs=vmem_spec,
    )(x2, *flat)

    metadata = profile_len.astype(jnp.float32) / profile.shape[1]
    # Dropout: identity in eval mode.
    return jnp.concatenate([feat, metadata], axis=1)


# ---------------------------------- Main --------------------------------------

if __name__ == "__main__":
    key = jax.random.PRNGKey(0)
    dim_in, base_channels, blocks = 4, 32, (1, 1, 1, 1)
    B, L = 2, 16

    k_params, k_x, k_len = jax.random.split(key, 3)
    params = init_profile_cnn_params(k_params, dim_in, base_channels, blocks)
    profile = jax.random.normal(k_x, (B, L, dim_in), jnp.float32)
    profile_len = jax.random.randint(k_len, (B, 1), 1, L + 1)

    out = profile_cnn_forward(params, profile, profile_len)
    out = jax.block_until_ready(out)
    assert out.shape == (B, base_channels * 8 + 1), out.shape
    assert bool(jnp.all(jnp.isfinite(out)))
    print("KERNEL_OK")
</pallas_src>

<mosaic_0001>
module attributes {stable_mosaic.version = 11 : i64} {
  func.func @_profile_cnn_kernel(%arg0: memref<32x4xbf16, #tpu.memory_space<vmem>>, %arg1: memref<1x32xf32, #tpu.memory_space<vmem>>, %arg2: memref<24x8xbf16, #tpu.memory_space<vmem>>, %arg3: memref<1x32xf32, #tpu.memory_space<vmem>>, %arg4: memref<96x32xbf16, #tpu.memory_space<vmem>>, %arg5: memref<1x32xf32, #tpu.memory_space<vmem>>, %arg6: memref<24x8xbf16, #tpu.memory_space<vmem>>, %arg7: memref<1x32xf32, #tpu.memory_space<vmem>>, %arg8: memref<96x32xbf16, #tpu.memory_space<vmem>>, %arg9: memref<1x64xf32, #tpu.memory_space<vmem>>, %arg10: memref<12x8xbf16, #tpu.memory_space<vmem>>, %arg11: memref<1x64xf32, #tpu.memory_space<vmem>>, %arg12: memref<96x64xbf16, #tpu.memory_space<vmem>>, %arg13: memref<1x64xf32, #tpu.memory_space<vmem>>, %arg14: memref<12x4xbf16, #tpu.memory_space<vmem>>, %arg15: memref<1x64xf32, #tpu.memory_space<vmem>>, %arg16: memref<192x64xbf16, #tpu.memory_space<vmem>>, %arg17: memref<1x64xf32, #tpu.memory_space<vmem>>, %arg18: memref<4x8xbf16, #tpu.memory_space<vmem>>, %arg19: memref<1x64xf32, #tpu.memory_space<vmem>>, %arg20: memref<32x64xbf16, #tpu.memory_space<vmem>>, %arg21: memref<1x128xf32, #tpu.memory_space<vmem>>, %arg22: memref<6x4xbf16, #tpu.memory_space<vmem>>, %arg23: memref<1x128xf32, #tpu.memory_space<vmem>>, %arg24: memref<192x128xbf16, #tpu.memory_space<vmem>>, %arg25: memref<1x128xf32, #tpu.memory_space<vmem>>, %arg26: memref<6x2xbf16, #tpu.memory_space<vmem>>, %arg27: memref<1x128xf32, #tpu.memory_space<vmem>>, %arg28: memref<384x128xbf16, #tpu.memory_space<vmem>>, %arg29: memref<1x128xf32, #tpu.memory_space<vmem>>, %arg30: memref<2x4xbf16, #tpu.memory_space<vmem>>, %arg31: memref<1x128xf32, #tpu.memory_space<vmem>>, %arg32: memref<64x128xbf16, #tpu.memory_space<vmem>>, %arg33: memref<1x256xf32, #tpu.memory_space<vmem>>, %arg34: memref<6x2xbf16, #tpu.memory_space<vmem>>, %arg35: memref<1x256xf32, #tpu.memory_space<vmem>>, %arg36: memref<384x256xbf16, #tpu.memory_space<vmem>>, %arg37: memref<1x256xf32, #tpu.memory_space<vmem>>, %arg38: memref<6x2xbf16, #tpu.memory_space<vmem>>, %arg39: memref<1x256xf32, #tpu.memory_space<vmem>>, %arg40: memref<768x256xbf16, #tpu.memory_space<vmem>>, %arg41: memref<1x256xf32, #tpu.memory_space<vmem>>, %arg42: memref<2x2xbf16, #tpu.memory_space<vmem>>, %arg43: memref<1x256xf32, #tpu.memory_space<vmem>>, %arg44: memref<128x256xbf16, #tpu.memory_space<vmem>>, %arg45: memref<24x16xbf16, #tpu.memory_space<vmem>>, %arg46: memref<1x32xf32, #tpu.memory_space<vmem>>, %arg47: memref<48x32xbf16, #tpu.memory_space<vmem>>, %arg48: memref<1x32xf32, #tpu.memory_space<vmem>>, %arg49: memref<12x32xbf16, #tpu.memory_space<vmem>>, %arg50: memref<2x256xf32, #tpu.memory_space<vmem>>) attributes {dimension_semantics = [], scalar_prefetch = 0 : i64, scratch_operands = 0 : i64, tpu.core_type = #tpu.core_type<tc>} {
    %c0 = arith.constant 0 : index
    %c0_0 = arith.constant 0 : index
    %0 = vector.load %arg0[%c0, %c0_0] : memref<32x4xbf16, #tpu.memory_space<vmem>>, vector<32x4xbf16>
    %c0_1 = arith.constant 0 : index
    %c0_2 = arith.constant 0 : index
    %1 = vector.load %arg47[%c0_1, %c0_2] : memref<48x32xbf16, #tpu.memory_space<vmem>>, vector<48x32xbf16>
    %cst = arith.constant dense<0.000000e+00> : vector<48x4xf32>
    %2 = tpu.matmul %1, %0, %cst {dimension_numbers = #tpu.dot_dimension_numbers<[1], [0], [0], [1], [0, 0, 1, 1], [], []>} : vector<48x32xbf16>, vector<32x4xbf16>, vector<48x4xf32> -> vector<48x4xf32>
    %3 = arith.truncf %2 : vector<48x4xf32> to vector<48x4xbf16>
    %4 = vector.extract_strided_slice %3 {offsets = [0, 0], sizes = [16, 4], strides = [1, 1]} : vector<48x4xbf16> to vector<16x4xbf16>
    %c0_3 = arith.constant 0 : index
    %c0_4 = arith.constant 0 : index
    %5 = vector.load %arg49[%c0_3, %c0_4] : memref<12x32xbf16, #tpu.memory_space<vmem>>, vector<4x32xbf16>
    %cst_5 = arith.constant dense<0.000000e+00> : vector<16x32xf32>
    %6 = tpu.matmul %4, %5, %cst_5 {dimension_numbers = #tpu.dot_dimension_numbers<[1], [0], [0], [1], [0, 0, 1, 1], [], []>} : vector<16x4xbf16>, vector<4x32xbf16>, vector<16x32xf32> -> vector<16x32xf32>
    %7 = vector.extract_strided_slice %3 {offsets = [16, 0], sizes = [16, 4], strides = [1, 1]} : vector<48x4xbf16> to vector<16x4xbf16>
    %c4 = arith.constant 4 : index
    %c0_6 = arith.constant 0 : index
    %8 = vector.load %arg49[%c4, %c0_6] : memref<12x32xbf16, #tpu.memory_space<vmem>>, vector<4x32xbf16>
    %cst_7 = arith.constant dense<0.000000e+00> : vector<16x32xf32>
    %9 = tpu.matmul %7, %8, %cst_7 {dimension_numbers = #tpu.dot_dimension_numbers<[1], [0], [0], [1], [0, 0, 1, 1], [], []>} : vector<16x4xbf16>, vector<4x32xbf16>, vector<16x32xf32> -> vector<16x32xf32>
    %10 = arith.addf %6, %9 : vector<16x32xf32>
    %11 = vector.extract_strided_slice %3 {offsets = [32, 0], sizes = [16, 4], strides = [1, 1]} : vector<48x4xbf16> to vector<16x4xbf16>
    %c8 = arith.constant 8 : index
    %c0_8 = arith.constant 0 : index
    %12 = vector.load %arg49[%c8, %c0_8] : memref<12x32xbf16, #tpu.memory_space<vmem>>, vector<4x32xbf16>
    %cst_9 = arith.constant dense<0.000000e+00> : vector<16x32xf32>
    %13 = tpu.matmul %11, %12, %cst_9 {dimension_numbers = #tpu.dot_dimension_numbers<[1], [0], [0], [1], [0, 0, 1, 1], [], []>} : vector<16x4xbf16>, vector<4x32xbf16>, vector<16x32xf32> -> vector<16x32xf32>
    %14 = arith.addf %10, %13 : vector<16x32xf32>
    %c0_10 = arith.constant 0 : index
    %c0_11 = arith.constant 0 : index
    %15 = vector.load %arg48[%c0_10, %c0_11] : memref<1x32xf32, #tpu.memory_space<vmem>>, vector<1x32xf32>
    %16 = vector.broadcast %15 : vector<1x32xf32> to vector<16x32xf32>
    %17 = arith.mulf %14, %16 : vector<16x32xf32>
    %c0_12 = arith.constant 0 : index
    %c0_13 = arith.constant 0 : index
    %18 = vector.load %arg46[%c0_12, %c0_13] : memref<1x32xf32, #tpu.memory_space<vmem>>, vector<1x32xf32>
    %19 = vector.broadcast %18 : vector<1x32xf32> to vector<16x32xf32>
    %20 = arith.addf %17, %19 : vector<16x32xf32>
    %cst_14 = arith.constant 0.000000e+00 : f32
    %21 = vector.broadcast %cst_14 : f32 to vector<16x32xf32>
    %22 = arith.maximumf %20, %21 : vector<16x32xf32>
    %c0_15 = arith.constant 0 : index
    %c0_16 = arith.constant 0 : index
    %23 = vector.load %arg45[%c0_15, %c0_16] : memref<24x16xbf16, #tpu.memory_space<vmem>>, vector<24x16xbf16>
    %24 = arith.truncf %22 : vector<16x32xf32> to vector<16x32xbf16>
    %cst_17 = arith.constant dense<0.000000e+00> : vector<24x32xf32>
    %25 = tpu.matmul %23, %24, %cst_17 {dimension_numbers = #tpu.dot_dimension_numbers<[1], [0], [0], [1], [0, 0, 1, 1], [], []>} : vector<24x16xbf16>, vector<16x32xbf16>, vector<24x32xf32> -> vector<24x32xf32>
    %26 = vector.extract_strided_slice %25 {offsets = [0, 0], sizes = [8, 32], strides = [1, 1]} : vector<24x32xf32> to vector<8x32xf32>
    %27 = vector.extract_strided_slice %25 {offsets = [8, 0], sizes = [8, 32], strides = [1, 1]} : vector<24x32xf32> to vector<8x32xf32>
    %28 = vector.extract_strided_slice %25 {offsets = [16, 0], sizes = [8, 32], strides = [1, 1]} : vector<24x32xf32> to vector<8x32xf32>
    %29 = arith.maximumf %26, %27 : vector<8x32xf32>
    %30 = arith.maximumf %29, %28 : vector<8x32xf32>
    %31 = arith.truncf %30 : vector<8x32xf32> to vector<8x32xbf16>
    %c0_18 = arith.constant 0 : index
    %c0_19 = arith.constant 0 : index
    %32 = vector.load %arg2[%c0_18, %c0_19] : memref<24x8xbf16, #tpu.memory_space<vmem>>, vector<24x8xbf16>
    %cst_20 = arith.constant dense<0.000000e+00> : vector<24x32xf32>
    %33 = tpu.matmul %32, %31, %cst_20 {dimension_numbers = #tpu.dot_dimension_numbers<[1], [0], [0], [1], [0, 0, 1, 1], [], []>} : vector<24x8xbf16>, vector<8x32xbf16>, vector<24x32xf32> -> vector<24x32xf32>
    %34 = arith.truncf %33 : vector<24x32xf32> to vector<24x32xbf16>
    %35 = vector.extract_strided_slice %34 {offsets = [0, 0], sizes = [8, 32], strides = [1, 1]} : vector<24x32xbf16> to vector<8x32xbf16>
    %c0_21 = arith.constant 0 : index
    %c0_22 = arith.constant 0 : index
    %36 = vector.load %arg4[%c0_21, %c0_22] : memref<96x32xbf16, #tpu.memory_space<vmem>>, vector<32x32xbf16>
    %cst_23 = arith.constant dense<0.000000e+00> : vector<8x32xf32>
    %37 = tpu.matmul %35, %36, %cst_23 {dimension_numbers = #tpu.dot_dimension_numbers<[1], [0], [0], [1], [0, 0, 1, 1], [], []>} : vector<8x32xbf16>, vector<32x32xbf16>, vector<8x32xf32> -> vector<8x32xf32>
    %38 = vector.extract_strided_slice %34 {offsets = [8, 0], sizes = [8, 32], strides = [1, 1]} : vector<24x32xbf16> to vector<8x32xbf16>
    %c32 = arith.constant 32 : index
    %c0_24 = arith.constant 0 : index
    %39 = vector.load %arg4[%c32, %c0_24] : memref<96x32xbf16, #tpu.memory_space<vmem>>, vector<32x32xbf16>
    %cst_25 = arith.constant dense<0.000000e+00> : vector<8x32xf32>
    %40 = tpu.matmul %38, %39, %cst_25 {dimension_numbers = #tpu.dot_dimension_numbers<[1], [0], [0], [1], [0, 0, 1, 1], [], []>} : vector<8x32xbf16>, vector<32x32xbf16>, vector<8x32xf32> -> vector<8x32xf32>
    %41 = arith.addf %37, %40 : vector<8x32xf32>
    %42 = vector.extract_strided_slice %34 {offsets = [16, 0], sizes = [8, 32], strides = [1, 1]} : vector<24x32xbf16> to vector<8x32xbf16>
    %c64 = arith.constant 64 : index
    %c0_26 = arith.constant 0 : index
    %43 = vector.load %arg4[%c64, %c0_26] : memref<96x32xbf16, #tpu.memory_space<vmem>>, vector<32x32xbf16>
    %cst_27 = arith.constant dense<0.000000e+00> : vector<8x32xf32>
    %44 = tpu.matmul %42, %43, %cst_27 {dimension_numbers = #tpu.dot_dimension_numbers<[1], [0], [0], [1], [0, 0, 1, 1], [], []>} : vector<8x32xbf16>, vector<32x32xbf16>, vector<8x32xf32> -> vector<8x32xf32>
    %45 = arith.addf %41, %44 : vector<8x32xf32>
    %c0_28 = arith.constant 0 : index
    %c0_29 = arith.constant 0 : index
    %46 = vector.load %arg3[%c0_28, %c0_29] : memref<1x32xf32, #tpu.memory_space<vmem>>, vector<1x32xf32>
    %47 = vector.broadcast %46 : vector<1x32xf32> to vector<8x32xf32>
    %48 = arith.mulf %45, %47 : vector<8x32xf32>
    %c0_30 = arith.constant 0 : index
    %c0_31 = arith.constant 0 : index
    %49 = vector.load %arg1[%c0_30, %c0_31] : memref<1x32xf32, #tpu.memory_space<vmem>>, vector<1x32xf32>
    %50 = vector.broadcast %49 : vector<1x32xf32> to vector<8x32xf32>
    %51 = arith.addf %48, %50 : vector<8x32xf32>
    %cst_32 = arith.constant 0.000000e+00 : f32
    %52 = vector.broadcast %cst_32 : f32 to vector<8x32xf32>
    %53 = arith.maximumf %51, %52 : vector<8x32xf32>
    %54 = arith.truncf %53 : vector<8x32xf32> to vector<8x32xbf16>
    %c0_33 = arith.constant 0 : index
    %c0_34 = arith.constant 0 : index
    %55 = vector.load %arg6[%c0_33, %c0_34] : memref<24x8xbf16, #tpu.memory_space<vmem>>, vector<24x8xbf16>
    %cst_35 = arith.constant dense<0.000000e+00> : vector<24x32xf32>
    %56 = tpu.matmul %55, %54, %cst_35 {dimension_numbers = #tpu.dot_dimension_numbers<[1], [0], [0], [1], [0, 0, 1, 1], [], []>} : vector<24x8xbf16>, vector<8x32xbf16>, vector<24x32xf32> -> vector<24x32xf32>
    %57 = arith.truncf %56 : vector<24x32xf32> to vector<24x32xbf16>
    %58 = vector.extract_strided_slice %57 {offsets = [0, 0], sizes = [8, 32], strides = [1, 1]} : vector<24x32xbf16> to vector<8x32xbf16>
    %c0_36 = arith.constant 0 : index
    %c0_37 = arith.constant 0 : index
    %59 = vector.load %arg8[%c0_36, %c0_37] : memref<96x32xbf16, #tpu.memory_space<vmem>>, vector<32x32xbf16>
    %cst_38 = arith.constant dense<0.000000e+00> : vector<8x32xf32>
    %60 = tpu.matmul %58, %59, %cst_38 {dimension_numbers = #tpu.dot_dimension_numbers<[1], [0], [0], [1], [0, 0, 1, 1], [], []>} : vector<8x32xbf16>, vector<32x32xbf16>, vector<8x32xf32> -> vector<8x32xf32>
    %61 = vector.extract_strided_slice %57 {offsets = [8, 0], sizes = [8, 32], strides = [1, 1]} : vector<24x32xbf16> to vector<8x32xbf16>
    %c32_39 = arith.constant 32 : index
    %c0_40 = arith.constant 0 : index
    %62 = vector.load %arg8[%c32_39, %c0_40] : memref<96x32xbf16, #tpu.memory_space<vmem>>, vector<32x32xbf16>
    %cst_41 = arith.constant dense<0.000000e+00> : vector<8x32xf32>
    %63 = tpu.matmul %61, %62, %cst_41 {dimension_numbers = #tpu.dot_dimension_numbers<[1], [0], [0], [1], [0, 0, 1, 1], [], []>} : vector<8x32xbf16>, vector<32x32xbf16>, vector<8x32xf32> -> vector<8x32xf32>
    %64 = arith.addf %60, %63 : vector<8x32xf32>
    %65 = vector.extract_strided_slice %57 {offsets = [16, 0], sizes = [8, 32], strides = [1, 1]} : vector<24x32xbf16> to vector<8x32xbf16>
    %c64_42 = arith.constant 64 : index
    %c0_43 = arith.constant 0 : index
    %66 = vector.load %arg8[%c64_42, %c0_43] : memref<96x32xbf16, #tpu.memory_space<vmem>>, vector<32x32xbf16>
    %cst_44 = arith.constant dense<0.000000e+00> : vector<8x32xf32>
    %67 = tpu.matmul %65, %66, %cst_44 {dimension_numbers = #tpu.dot_dimension_numbers<[1], [0], [0], [1], [0, 0, 1, 1], [], []>} : vector<8x32xbf16>, vector<32x32xbf16>, vector<8x32xf32> -> vector<8x32xf32>
    %68 = arith.addf %64, %67 : vector<8x32xf32>
    %c0_45 = arith.constant 0 : index
    %c0_46 = arith.constant 0 : index
    %69 = vector.load %arg7[%c0_45, %c0_46] : memref<1x32xf32, #tpu.memory_space<vmem>>, vector<1x32xf32>
    %70 = vector.broadcast %69 : vector<1x32xf32> to vector<8x32xf32>
    %71 = arith.mulf %68, %70 : vector<8x32xf32>
    %c0_47 = arith.constant 0 : index
    %c0_48 = arith.constant 0 : index
    %72 = vector.load %arg5[%c0_47, %c0_48] : memref<1x32xf32, #tpu.memory_space<vmem>>, vector<1x32xf32>
    %73 = vector.broadcast %72 : vector<1x32xf32> to vector<8x32xf32>
    %74 = arith.addf %71, %73 : vector<8x32xf32>
    %75 = arith.addf %74, %30 : vector<8x32xf32>
    %cst_49 = arith.constant 0.000000e+00 : f32
    %76 = vector.broadcast %cst_49 : f32 to vector<8x32xf32>
    %77 = arith.maximumf %75, %76 : vector<8x32xf32>
    %78 = arith.truncf %77 : vector<8x32xf32> to vector<8x32xbf16>
    %c0_50 = arith.constant 0 : index
    %c0_51 = arith.constant 0 : index
    %79 = vector.load %arg10[%c0_50, %c0_51] : memref<12x8xbf16, #tpu.memory_space<vmem>>, vector<12x8xbf16>
    %cst_52 = arith.constant dense<0.000000e+00> : vector<12x32xf32>
    %80 = tpu.matmul %79, %78, %cst_52 {dimension_numbers = #tpu.dot_dimension_numbers<[1], [0], [0], [1], [0, 0, 1, 1], [], []>} : vector<12x8xbf16>, vector<8x32xbf16>, vector<12x32xf32> -> vector<12x32xf32>
    %81 = arith.truncf %80 : vector<12x32xf32> to vector<12x32xbf16>
    %82 = vector.extract_strided_slice %81 {offsets = [0, 0], sizes = [4, 32], strides = [1, 1]} : vector<12x32xbf16> to vector<4x32xbf16>
    %c0_53 = arith.constant 0 : index
    %c0_54 = arith.constant 0 : index
    %83 = vector.load %arg12[%c0_53, %c0_54] : memref<96x64xbf16, #tpu.memory_space<vmem>>, vector<32x64xbf16>
    %cst_55 = arith.constant dense<0.000000e+00> : vector<4x64xf32>
    %84 = tpu.matmul %82, %83, %cst_55 {dimension_numbers = #tpu.dot_dimension_numbers<[1], [0], [0], [1], [0, 0, 1, 1], [], []>} : vector<4x32xbf16>, vector<32x64xbf16>, vector<4x64xf32> -> vector<4x64xf32>
    %85 = vector.extract_strided_slice %81 {offsets = [4, 0], sizes = [4, 32], strides = [1, 1]} : vector<12x32xbf16> to vector<4x32xbf16>
    %c32_56 = arith.constant 32 : index
    %c0_57 = arith.constant 0 : index
    %86 = vector.load %arg12[%c32_56, %c0_57] : memref<96x64xbf16, #tpu.memory_space<vmem>>, vector<32x64xbf16>
    %cst_58 = arith.constant dense<0.000000e+00> : vector<4x64xf32>
    %87 = tpu.matmul %85, %86, %cst_58 {dimension_numbers = #tpu.dot_dimension_numbers<[1], [0], [0], [1], [0, 0, 1, 1], [], []>} : vector<4x32xbf16>, vector<32x64xbf16>, vector<4x64xf32> -> vector<4x64xf32>
    %88 = arith.addf %84, %87 : vector<4x64xf32>
    %89 = vector.extract_strided_slice %81 {offsets = [8, 0], sizes = [4, 32], strides = [1, 1]} : vector<12x32xbf16> to vector<4x32xbf16>
    %c64_59 = arith.constant 64 : index
    %c0_60 = arith.constant 0 : index
    %90 = vector.load %arg12[%c64_59, %c0_60] : memref<96x64xbf16, #tpu.memory_space<vmem>>, vector<32x64xbf16>
    %cst_61 = arith.constant dense<0.000000e+00> : vector<4x64xf32>
    %91 = tpu.matmul %89, %90, %cst_61 {dimension_numbers = #tpu.dot_dimension_numbers<[1], [0], [0], [1], [0, 0, 1, 1], [], []>} : vector<4x32xbf16>, vector<32x64xbf16>, vector<4x64xf32> -> vector<4x64xf32>
    %92 = arith.addf %88, %91 : vector<4x64xf32>
    %c0_62 = arith.constant 0 : index
    %c0_63 = arith.constant 0 : index
    %93 = vector.load %arg11[%c0_62, %c0_63] : memref<1x64xf32, #tpu.memory_space<vmem>>, vector<1x64xf32>
    %94 = vector.broadcast %93 : vector<1x64xf32> to vector<4x64xf32>
    %95 = arith.mulf %92, %94 : vector<4x64xf32>
    %c0_64 = arith.constant 0 : index
    %c0_65 = arith.constant 0 : index
    %96 = vector.load %arg9[%c0_64, %c0_65] : memref<1x64xf32, #tpu.memory_space<vmem>>, vector<1x64xf32>
    %97 = vector.broadcast %96 : vector<1x64xf32> to vector<4x64xf32>
    %98 = arith.addf %95, %97 : vector<4x64xf32>
    %cst_66 = arith.constant 0.000000e+00 : f32
    %99 = vector.broadcast %cst_66 : f32 to vector<4x64xf32>
    %100 = arith.maximumf %98, %99 : vector<4x64xf32>
    %101 = arith.truncf %77 : vector<8x32xf32> to vector<8x32xbf16>
    %c0_67 = arith.constant 0 : index
    %c0_68 = arith.constant 0 : index
    %102 = vector.load %arg18[%c0_67, %c0_68] : memref<4x8xbf16, #tpu.memory_space<vmem>>, vector<4x8xbf16>
    %cst_69 = arith.constant dense<0.000000e+00> : vector<4x32xf32>
    %103 = tpu.matmul %102, %101, %cst_69 {dimension_numbers = #tpu.dot_dimension_numbers<[1], [0], [0], [1], [0, 0, 1, 1], [], []>} : vector<4x8xbf16>, vector<8x32xbf16>, vector<4x32xf32> -> vector<4x32xf32>
    %104 = arith.truncf %103 : vector<4x32xf32> to vector<4x32xbf16>
    %c0_70 = arith.constant 0 : index
    %c0_71 = arith.constant 0 : index
    %105 = vector.load %arg20[%c0_70, %c0_71] : memref<32x64xbf16, #tpu.memory_space<vmem>>, vector<32x64xbf16>
    %cst_72 = arith.constant dense<0.000000e+00> : vector<4x64xf32>
    %106 = tpu.matmul %104, %105, %cst_72 {dimension_numbers = #tpu.dot_dimension_numbers<[1], [0], [0], [1], [0, 0, 1, 1], [], []>} : vector<4x32xbf16>, vector<32x64xbf16>, vector<4x64xf32> -> vector<4x64xf32>
    %c0_73 = arith.constant 0 : index
    %c0_74 = arith.constant 0 : index
    %107 = vector.load %arg19[%c0_73, %c0_74] : memref<1x64xf32, #tpu.memory_space<vmem>>, vector<1x64xf32>
    %108 = vector.broadcast %107 : vector<1x64xf32> to vector<4x64xf32>
    %109 = arith.mulf %106, %108 : vector<4x64xf32>
    %c0_75 = arith.constant 0 : index
    %c0_76 = arith.constant 0 : index
    %110 = vector.load %arg17[%c0_75, %c0_76] : memref<1x64xf32, #tpu.memory_space<vmem>>, vector<1x64xf32>
    %111 = vector.broadcast %110 : vector<1x64xf32> to vector<4x64xf32>
    %112 = arith.addf %109, %111 : vector<4x64xf32>
    %113 = arith.truncf %100 : vector<4x64xf32> to vector<4x64xbf16>
    %c0_77 = arith.constant 0 : index
    %c0_78 = arith.constant 0 : index
    %114 = vector.load %arg14[%c0_77, %c0_78] : memref<12x4xbf16, #tpu.memory_space<vmem>>, vector<12x4xbf16>
    %cst_79 = arith.constant dense<0.000000e+00> : vector<12x64xf32>
    %115 = tpu.matmul %114, %113, %cst_79 {dimension_numbers = #tpu.dot_dimension_numbers<[1], [0], [0], [1], [0, 0, 1, 1], [], []>} : vector<12x4xbf16>, vector<4x64xbf16>, vector<12x64xf32> -> vector<12x64xf32>
    %116 = arith.truncf %115 : vector<12x64xf32> to vector<12x64xbf16>
    %117 = vector.extract_strided_slice %116 {offsets = [0, 0], sizes = [4, 64], strides = [1, 1]} : vector<12x64xbf16> to vector<4x64xbf16>
    %c0_80 = arith.constant 0 : index
    %c0_81 = arith.constant 0 : index
    %118 = vector.load %arg16[%c0_80, %c0_81] : memref<192x64xbf16, #tpu.memory_space<vmem>>, vector<64x64xbf16>
    %cst_82 = arith.constant dense<0.000000e+00> : vector<4x64xf32>
    %119 = tpu.matmul %117, %118, %cst_82 {dimension_numbers = #tpu.dot_dimension_numbers<[1], [0], [0], [1], [0, 0, 1, 1], [], []>} : vector<4x64xbf16>, vector<64x64xbf16>, vector<4x64xf32> -> vector<4x64xf32>
    %120 = vector.extract_strided_slice %116 {offsets = [4, 0], sizes = [4, 64], strides = [1, 1]} : vector<12x64xbf16> to vector<4x64xbf16>
    %c64_83 = arith.constant 64 : index
    %c0_84 = arith.constant 0 : index
    %121 = vector.load %arg16[%c64_83, %c0_84] : memref<192x64xbf16, #tpu.memory_space<vmem>>, vector<64x64xbf16>
    %cst_85 = arith.constant dense<0.000000e+00> : vector<4x64xf32>
    %122 = tpu.matmul %120, %121, %cst_85 {dimension_numbers = #tpu.dot_dimension_numbers<[1], [0], [0], [1], [0, 0, 1, 1], [], []>} : vector<4x64xbf16>, vector<64x64xbf16>, vector<4x64xf32> -> vector<4x64xf32>
    %123 = arith.addf %119, %122 : vector<4x64xf32>
    %124 = vector.extract_strided_slice %116 {offsets = [8, 0], sizes = [4, 64], strides = [1, 1]} : vector<12x64xbf16> to vector<4x64xbf16>
    %c128 = arith.constant 128 : index
    %c0_86 = arith.constant 0 : index
    %125 = vector.load %arg16[%c128, %c0_86] : memref<192x64xbf16, #tpu.memory_space<vmem>>, vector<64x64xbf16>
    %cst_87 = arith.constant dense<0.000000e+00> : vector<4x64xf32>
    %126 = tpu.matmul %124, %125, %cst_87 {dimension_numbers = #tpu.dot_dimension_numbers<[1], [0], [0], [1], [0, 0, 1, 1], [], []>} : vector<4x64xbf16>, vector<64x64xbf16>, vector<4x64xf32> -> vector<4x64xf32>
    %127 = arith.addf %123, %126 : vector<4x64xf32>
    %c0_88 = arith.constant 0 : index
    %c0_89 = arith.constant 0 : index
    %128 = vector.load %arg15[%c0_88, %c0_89] : memref<1x64xf32, #tpu.memory_space<vmem>>, vector<1x64xf32>
    %129 = vector.broadcast %128 : vector<1x64xf32> to vector<4x64xf32>
    %130 = arith.mulf %127, %129 : vector<4x64xf32>
    %c0_90 = arith.constant 0 : index
    %c0_91 = arith.constant 0 : index
    %131 = vector.load %arg13[%c0_90, %c0_91] : memref<1x64xf32, #tpu.memory_space<vmem>>, vector<1x64xf32>
    %132 = vector.broadcast %131 : vector<1x64xf32> to vector<4x64xf32>
    %133 = arith.addf %130, %132 : vector<4x64xf32>
    %134 = arith.addf %133, %112 : vector<4x64xf32>
    %cst_92 = arith.constant 0.000000e+00 : f32
    %135 = vector.broadcast %cst_92 : f32 to vector<4x64xf32>
    %136 = arith.maximumf %134, %135 : vector<4x64xf32>
    %137 = arith.truncf %136 : vector<4x64xf32> to vector<4x64xbf16>
    %c0_93 = arith.constant 0 : index
    %c0_94 = arith.constant 0 : index
    %138 = vector.load %arg22[%c0_93, %c0_94] : memref<6x4xbf16, #tpu.memory_space<vmem>>, vector<6x4xbf16>
    %cst_95 = arith.constant dense<0.000000e+00> : vector<6x64xf32>
    %139 = tpu.matmul %138, %137, %cst_95 {dimension_numbers = #tpu.dot_dimension_numbers<[1], [0], [0], [1], [0, 0, 1, 1], [], []>} : vector<6x4xbf16>, vector<4x64xbf16>, vector<6x64xf32> -> vector<6x64xf32>
    %140 = arith.truncf %139 : vector<6x64xf32> to vector<6x64xbf16>
    %141 = vector.extract_strided_slice %140 {offsets = [0, 0], sizes = [2, 64], strides = [1, 1]} : vector<6x64xbf16> to vector<2x64xbf16>
    %c0_96 = arith.constant 0 : index
    %c0_97 = arith.constant 0 : index
    %142 = vector.load %arg24[%c0_96, %c0_97] : memref<192x128xbf16, #tpu.memory_space<vmem>>, vector<64x128xbf16>
    %cst_98 = arith.constant dense<0.000000e+00> : vector<2x128xf32>
    %143 = tpu.matmul %141, %142, %cst_98 {dimension_numbers = #tpu.dot_dimension_numbers<[1], [0], [0], [1], [0, 0, 1, 1], [], []>} : vector<2x64xbf16>, vector<64x128xbf16>, vector<2x128xf32> -> vector<2x128xf32>
    %144 = vector.extract_strided_slice %140 {offsets = [2, 0], sizes = [2, 64], strides = [1, 1]} : vector<6x64xbf16> to vector<2x64xbf16>
    %c64_99 = arith.constant 64 : index
    %c0_100 = arith.constant 0 : index
    %145 = vector.load %arg24[%c64_99, %c0_100] : memref<192x128xbf16, #tpu.memory_space<vmem>>, vector<64x128xbf16>
    %cst_101 = arith.constant dense<0.000000e+00> : vector<2x128xf32>
    %146 = tpu.matmul %144, %145, %cst_101 {dimension_numbers = #tpu.dot_dimension_numbers<[1], [0], [0], [1], [0, 0, 1, 1], [], []>} : vector<2x64xbf16>, vector<64x128xbf16>, vector<2x128xf32> -> vector<2x128xf32>
    %147 = arith.addf %143, %146 : vector<2x128xf32>
    %148 = vector.extract_strided_slice %140 {offsets = [4, 0], sizes = [2, 64], strides = [1, 1]} : vector<6x64xbf16> to vector<2x64xbf16>
    %c128_102 = arith.constant 128 : index
    %c0_103 = arith.constant 0 : index
    %149 = vector.load %arg24[%c128_102, %c0_103] : memref<192x128xbf16, #tpu.memory_space<vmem>>, vector<64x128xbf16>
    %cst_104 = arith.constant dense<0.000000e+00> : vector<2x128xf32>
    %150 = tpu.matmul %148, %149, %cst_104 {dimension_numbers = #tpu.dot_dimension_numbers<[1], [0], [0], [1], [0, 0, 1, 1], [], []>} : vector<2x64xbf16>, vector<64x128xbf16>, vector<2x128xf32> -> vector<2x128xf32>
    %151 = arith.addf %147, %150 : vector<2x128xf32>
    %c0_105 = arith.constant 0 : index
    %c0_106 = arith.constant 0 : index
    %152 = vector.load %arg23[%c0_105, %c0_106] : memref<1x128xf32, #tpu.memory_space<vmem>>, vector<1x128xf32>
    %153 = vector.broadcast %152 : vector<1x128xf32> to vector<2x128xf32>
    %154 = arith.mulf %151, %153 : vector<2x128xf32>
    %c0_107 = arith.constant 0 : index
    %c0_108 = arith.constant 0 : index
    %155 = vector.load %arg21[%c0_107, %c0_108] : memref<1x128xf32, #tpu.memory_space<vmem>>, vector<1x128xf32>
    %156 = vector.broadcast %155 : vector<1x128xf32> to vector<2x128xf32>
    %157 = arith.addf %154, %156 : vector<2x128xf32>
    %cst_109 = arith.constant 0.000000e+00 : f32
    %158 = vector.broadcast %cst_109 : f32 to vector<2x128xf32>
    %159 = arith.maximumf %157, %158 : vector<2x128xf32>
    %160 = arith.truncf %136 : vector<4x64xf32> to vector<4x64xbf16>
    %c0_110 = arith.constant 0 : index
    %c0_111 = arith.constant 0 : index
    %161 = vector.load %arg30[%c0_110, %c0_111] : memref<2x4xbf16, #tpu.memory_space<vmem>>, vector<2x4xbf16>
    %cst_112 = arith.constant dense<0.000000e+00> : vector<2x64xf32>
    %162 = tpu.matmul %161, %160, %cst_112 {dimension_numbers = #tpu.dot_dimension_numbers<[1], [0], [0], [1], [0, 0, 1, 1], [], []>} : vector<2x4xbf16>, vector<4x64xbf16>, vector<2x64xf32> -> vector<2x64xf32>
    %163 = arith.truncf %162 : vector<2x64xf32> to vector<2x64xbf16>
    %c0_113 = arith.constant 0 : index
    %c0_114 = arith.constant 0 : index
    %164 = vector.load %arg32[%c0_113, %c0_114] : memref<64x128xbf16, #tpu.memory_space<vmem>>, vector<64x128xbf16>
    %cst_115 = arith.constant dense<0.000000e+00> : vector<2x128xf32>
    %165 = tpu.matmul %163, %164, %cst_115 {dimension_numbers = #tpu.dot_dimension_numbers<[1], [0], [0], [1], [0, 0, 1, 1], [], []>} : vector<2x64xbf16>, vector<64x128xbf16>, vector<2x128xf32> -> vector<2x128xf32>
    %c0_116 = arith.constant 0 : index
    %c0_117 = arith.constant 0 : index
    %166 = vector.load %arg31[%c0_116, %c0_117] : memref<1x128xf32, #tpu.memory_space<vmem>>, vector<1x128xf32>
    %167 = vector.broadcast %166 : vector<1x128xf32> to vector<2x128xf32>
    %168 = arith.mulf %165, %167 : vector<2x128xf32>
    %c0_118 = arith.constant 0 : index
    %c0_119 = arith.constant 0 : index
    %169 = vector.load %arg29[%c0_118, %c0_119] : memref<1x128xf32, #tpu.memory_space<vmem>>, vector<1x128xf32>
    %170 = vector.broadcast %169 : vector<1x128xf32> to vector<2x128xf32>
    %171 = arith.addf %168, %170 : vector<2x128xf32>
    %172 = arith.truncf %159 : vector<2x128xf32> to vector<2x128xbf16>
    %c0_120 = arith.constant 0 : index
    %c0_121 = arith.constant 0 : index
    %173 = vector.load %arg26[%c0_120, %c0_121] : memref<6x2xbf16, #tpu.memory_space<vmem>>, vector<6x2xbf16>
    %cst_122 = arith.constant dense<0.000000e+00> : vector<6x128xf32>
    %174 = tpu.matmul %173, %172, %cst_122 {dimension_numbers = #tpu.dot_dimension_numbers<[1], [0], [0], [1], [0, 0, 1, 1], [], []>} : vector<6x2xbf16>, vector<2x128xbf16>, vector<6x128xf32> -> vector<6x128xf32>
    %175 = arith.truncf %174 : vector<6x128xf32> to vector<6x128xbf16>
    %176 = vector.extract_strided_slice %175 {offsets = [0, 0], sizes = [2, 128], strides = [1, 1]} : vector<6x128xbf16> to vector<2x128xbf16>
    %c0_123 = arith.constant 0 : index
    %c0_124 = arith.constant 0 : index
    %177 = vector.load %arg28[%c0_123, %c0_124] : memref<384x128xbf16, #tpu.memory_space<vmem>>, vector<128x128xbf16>
    %cst_125 = arith.constant dense<0.000000e+00> : vector<2x128xf32>
    %178 = tpu.matmul %176, %177, %cst_125 {dimension_numbers = #tpu.dot_dimension_numbers<[1], [0], [0], [1], [0, 0, 1, 1], [], []>} : vector<2x128xbf16>, vector<128x128xbf16>, vector<2x128xf32> -> vector<2x128xf32>
    %179 = vector.extract_strided_slice %175 {offsets = [2, 0], sizes = [2, 128], strides = [1, 1]} : vector<6x128xbf16> to vector<2x128xbf16>
    %c128_126 = arith.constant 128 : index
    %c0_127 = arith.constant 0 : index
    %180 = vector.load %arg28[%c128_126, %c0_127] : memref<384x128xbf16, #tpu.memory_space<vmem>>, vector<128x128xbf16>
    %cst_128 = arith.constant dense<0.000000e+00> : vector<2x128xf32>
    %181 = tpu.matmul %179, %180, %cst_128 {dimension_numbers = #tpu.dot_dimension_numbers<[1], [0], [0], [1], [0, 0, 1, 1], [], []>} : vector<2x128xbf16>, vector<128x128xbf16>, vector<2x128xf32> -> vector<2x128xf32>
    %182 = arith.addf %178, %181 : vector<2x128xf32>
    %183 = vector.extract_strided_slice %175 {offsets = [4, 0], sizes = [2, 128], strides = [1, 1]} : vector<6x128xbf16> to vector<2x128xbf16>
    %c256 = arith.constant 256 : index
    %c0_129 = arith.constant 0 : index
    %184 = vector.load %arg28[%c256, %c0_129] : memref<384x128xbf16, #tpu.memory_space<vmem>>, vector<128x128xbf16>
    %cst_130 = arith.constant dense<0.000000e+00> : vector<2x128xf32>
    %185 = tpu.matmul %183, %184, %cst_130 {dimension_numbers = #tpu.dot_dimension_numbers<[1], [0], [0], [1], [0, 0, 1, 1], [], []>} : vector<2x128xbf16>, vector<128x128xbf16>, vector<2x128xf32> -> vector<2x128xf32>
    %186 = arith.addf %182, %185 : vector<2x128xf32>
    %c0_131 = arith.constant 0 : index
    %c0_132 = arith.constant 0 : index
    %187 = vector.load %arg27[%c0_131, %c0_132] : memref<1x128xf32, #tpu.memory_space<vmem>>, vector<1x128xf32>
    %188 = vector.broadcast %187 : vector<1x128xf32> to vector<2x128xf32>
    %189 = arith.mulf %186, %188 : vector<2x128xf32>
    %c0_133 = arith.constant 0 : index
    %c0_134 = arith.constant 0 : index
    %190 = vector.load %arg25[%c0_133, %c0_134] : memref<1x128xf32, #tpu.memory_space<vmem>>, vector<1x128xf32>
    %191 = vector.broadcast %190 : vector<1x128xf32> to vector<2x128xf32>
    %192 = arith.addf %189, %191 : vector<2x128xf32>
    %193 = arith.addf %192, %171 : vector<2x128xf32>
    %cst_135 = arith.constant 0.000000e+00 : f32
    %194 = vector.broadcast %cst_135 : f32 to vector<2x128xf32>
    %195 = arith.maximumf %193, %194 : vector<2x128xf32>
    %196 = arith.truncf %195 : vector<2x128xf32> to vector<2x128xbf16>
    %c0_136 = arith.constant 0 : index
    %c0_137 = arith.constant 0 : index
    %197 = vector.load %arg34[%c0_136, %c0_137] : memref<6x2xbf16, #tpu.memory_space<vmem>>, vector<6x2xbf16>
    %cst_138 = arith.constant dense<0.000000e+00> : vector<6x128xf32>
    %198 = tpu.matmul %197, %196, %cst_138 {dimension_numbers = #tpu.dot_dimension_numbers<[1], [0], [0], [1], [0, 0, 1, 1], [], []>} : vector<6x2xbf16>, vector<2x128xbf16>, vector<6x128xf32> -> vector<6x128xf32>
    %199 = arith.truncf %198 : vector<6x128xf32> to vector<6x128xbf16>
    %200 = vector.extract_strided_slice %199 {offsets = [0, 0], sizes = [2, 128], strides = [1, 1]} : vector<6x128xbf16> to vector<2x128xbf16>
    %c0_139 = arith.constant 0 : index
    %c0_140 = arith.constant 0 : index
    %201 = vector.load %arg36[%c0_139, %c0_140] : memref<384x256xbf16, #tpu.memory_space<vmem>>, vector<128x256xbf16>
    %cst_141 = arith.constant dense<0.000000e+00> : vector<2x256xf32>
    %202 = tpu.matmul %200, %201, %cst_141 {dimension_numbers = #tpu.dot_dimension_numbers<[1], [0], [0], [1], [0, 0, 1, 1], [], []>} : vector<2x128xbf16>, vector<128x256xbf16>, vector<2x256xf32> -> vector<2x256xf32>
    %203 = vector.extract_strided_slice %199 {offsets = [2, 0], sizes = [2, 128], strides = [1, 1]} : vector<6x128xbf16> to vector<2x128xbf16>
    %c128_142 = arith.constant 128 : index
    %c0_143 = arith.constant 0 : index
    %204 = vector.load %arg36[%c128_142, %c0_143] : memref<384x256xbf16, #tpu.memory_space<vmem>>, vector<128x256xbf16>
    %cst_144 = arith.constant dense<0.000000e+00> : vector<2x256xf32>
    %205 = tpu.matmul %203, %204, %cst_144 {dimension_numbers = #tpu.dot_dimension_numbers<[1], [0], [0], [1], [0, 0, 1, 1], [], []>} : vector<2x128xbf16>, vector<128x256xbf16>, vector<2x256xf32> -> vector<2x256xf32>
    %206 = arith.addf %202, %205 : vector<2x256xf32>
    %207 = vector.extract_strided_slice %199 {offsets = [4, 0], sizes = [2, 128], strides = [1, 1]} : vector<6x128xbf16> to vector<2x128xbf16>
    %c256_145 = arith.constant 256 : index
    %c0_146 = arith.constant 0 : index
    %208 = vector.load %arg36[%c256_145, %c0_146] : memref<384x256xbf16, #tpu.memory_space<vmem>>, vector<128x256xbf16>
    %cst_147 = arith.constant dense<0.000000e+00> : vector<2x256xf32>
    %209 = tpu.matmul %207, %208, %cst_147 {dimension_numbers = #tpu.dot_dimension_numbers<[1], [0], [0], [1], [0, 0, 1, 1], [], []>} : vector<2x128xbf16>, vector<128x256xbf16>, vector<2x256xf32> -> vector<2x256xf32>
    %210 = arith.addf %206, %209 : vector<2x256xf32>
    %c0_148 = arith.constant 0 : index
    %c0_149 = arith.constant 0 : index
    %211 = vector.load %arg35[%c0_148, %c0_149] : memref<1x256xf32, #tpu.memory_space<vmem>>, vector<1x256xf32>
    %212 = vector.broadcast %211 : vector<1x256xf32> to vector<2x256xf32>
    %213 = arith.mulf %210, %212 : vector<2x256xf32>
    %c0_150 = arith.constant 0 : index
    %c0_151 = arith.constant 0 : index
    %214 = vector.load %arg33[%c0_150, %c0_151] : memref<1x256xf32, #tpu.memory_space<vmem>>, vector<1x256xf32>
    %215 = vector.broadcast %214 : vector<1x256xf32> to vector<2x256xf32>
    %216 = arith.addf %213, %215 : vector<2x256xf32>
    %cst_152 = arith.constant 0.000000e+00 : f32
    %217 = vector.broadcast %cst_152 : f32 to vector<2x256xf32>
    %218 = arith.maximumf %216, %217 : vector<2x256xf32>
    %219 = arith.truncf %195 : vector<2x128xf32> to vector<2x128xbf16>
    %c0_153 = arith.constant 0 : index
    %c0_154 = arith.constant 0 : index
    %220 = vector.load %arg42[%c0_153, %c0_154] : memref<2x2xbf16, #tpu.memory_space<vmem>>, vector<2x2xbf16>
    %cst_155 = arith.constant dense<0.000000e+00> : vector<2x128xf32>
    %221 = tpu.matmul %220, %219, %cst_155 {dimension_numbers = #tpu.dot_dimension_numbers<[1], [0], [0], [1], [0, 0, 1, 1], [], []>} : vector<2x2xbf16>, vector<2x128xbf16>, vector<2x128xf32> -> vector<2x128xf32>
    %222 = arith.truncf %221 : vector<2x128xf32> to vector<2x128xbf16>
    %c0_156 = arith.constant 0 : index
    %c0_157 = arith.constant 0 : index
    %223 = vector.load %arg44[%c0_156, %c0_157] : memref<128x256xbf16, #tpu.memory_space<vmem>>, vector<128x256xbf16>
    %cst_158 = arith.constant dense<0.000000e+00> : vector<2x256xf32>
    %224 = tpu.matmul %222, %223, %cst_158 {dimension_numbers = #tpu.dot_dimension_numbers<[1], [0], [0], [1], [0, 0, 1, 1], [], []>} : vector<2x128xbf16>, vector<128x256xbf16>, vector<2x256xf32> -> vector<2x256xf32>
    %c0_159 = arith.constant 0 : index
    %c0_160 = arith.constant 0 : index
    %225 = vector.load %arg43[%c0_159, %c0_160] : memref<1x256xf32, #tpu.memory_space<vmem>>, vector<1x256xf32>
    %226 = vector.broadcast %225 : vector<1x256xf32> to vector<2x256xf32>
    %227 = arith.mulf %224, %226 : vector<2x256xf32>
    %c0_161 = arith.constant 0 : index
    %c0_162 = arith.constant 0 : index
    %228 = vector.load %arg41[%c0_161, %c0_162] : memref<1x256xf32, #tpu.memory_space<vmem>>, vector<1x256xf32>
    %229 = vector.broadcast %228 : vector<1x256xf32> to vector<2x256xf32>
    %230 = arith.addf %227, %229 : vector<2x256xf32>
    %231 = arith.truncf %218 : vector<2x256xf32> to vector<2x256xbf16>
    %c0_163 = arith.constant 0 : index
    %c0_164 = arith.constant 0 : index
    %232 = vector.load %arg38[%c0_163, %c0_164] : memref<6x2xbf16, #tpu.memory_space<vmem>>, vector<6x2xbf16>
    %cst_165 = arith.constant dense<0.000000e+00> : vector<6x256xf32>
    %233 = tpu.matmul %232, %231, %cst_165 {dimension_numbers = #tpu.dot_dimension_numbers<[1], [0], [0], [1], [0, 0, 1, 1], [], []>} : vector<6x2xbf16>, vector<2x256xbf16>, vector<6x256xf32> -> vector<6x256xf32>
    %234 = arith.truncf %233 : vector<6x256xf32> to vector<6x256xbf16>
    %235 = vector.extract_strided_slice %234 {offsets = [0, 0], sizes = [2, 256], strides = [1, 1]} : vector<6x256xbf16> to vector<2x256xbf16>
    %c0_166 = arith.constant 0 : index
    %c0_167 = arith.constant 0 : index
    %236 = vector.load %arg40[%c0_166, %c0_167] : memref<768x256xbf16, #tpu.memory_space<vmem>>, vector<256x256xbf16>
    %cst_168 = arith.constant dense<0.000000e+00> : vector<2x256xf32>
    %237 = tpu.matmul %235, %236, %cst_168 {dimension_numbers = #tpu.dot_dimension_numbers<[1], [0], [0], [1], [0, 0, 1, 1], [], []>} : vector<2x256xbf16>, vector<256x256xbf16>, vector<2x256xf32> -> vector<2x256xf32>
    %238 = vector.extract_strided_slice %234 {offsets = [2, 0], sizes = [2, 256], strides = [1, 1]} : vector<6x256xbf16> to vector<2x256xbf16>
    %c256_169 = arith.constant 256 : index
    %c0_170 = arith.constant 0 : index
    %239 = vector.load %arg40[%c256_169, %c0_170] : memref<768x256xbf16, #tpu.memory_space<vmem>>, vector<256x256xbf16>
    %cst_171 = arith.constant dense<0.000000e+00> : vector<2x256xf32>
    %240 = tpu.matmul %238, %239, %cst_171 {dimension_numbers = #tpu.dot_dimension_numbers<[1], [0], [0], [1], [0, 0, 1, 1], [], []>} : vector<2x256xbf16>, vector<256x256xbf16>, vector<2x256xf32> -> vector<2x256xf32>
    %241 = arith.addf %237, %240 : vector<2x256xf32>
    %242 = vector.extract_strided_slice %234 {offsets = [4, 0], sizes = [2, 256], strides = [1, 1]} : vector<6x256xbf16> to vector<2x256xbf16>
    %c512 = arith.constant 512 : index
    %c0_172 = arith.constant 0 : index
    %243 = vector.load %arg40[%c512, %c0_172] : memref<768x256xbf16, #tpu.memory_space<vmem>>, vector<256x256xbf16>
    %cst_173 = arith.constant dense<0.000000e+00> : vector<2x256xf32>
    %244 = tpu.matmul %242, %243, %cst_173 {dimension_numbers = #tpu.dot_dimension_numbers<[1], [0], [0], [1], [0, 0, 1, 1], [], []>} : vector<2x256xbf16>, vector<256x256xbf16>, vector<2x256xf32> -> vector<2x256xf32>
    %245 = arith.addf %241, %244 : vector<2x256xf32>
    %c0_174 = arith.constant 0 : index
    %c0_175 = arith.constant 0 : index
    %246 = vector.load %arg39[%c0_174, %c0_175] : memref<1x256xf32, #tpu.memory_space<vmem>>, vector<1x256xf32>
    %247 = vector.broadcast %246 : vector<1x256xf32> to vector<2x256xf32>
    %248 = arith.mulf %245, %247 : vector<2x256xf32>
    %c0_176 = arith.constant 0 : index
    %c0_177 = arith.constant 0 : index
    %249 = vector.load %arg37[%c0_176, %c0_177] : memref<1x256xf32, #tpu.memory_space<vmem>>, vector<1x256xf32>
    %250 = vector.broadcast %249 : vector<1x256xf32> to vector<2x256xf32>
    %251 = arith.addf %248, %250 : vector<2x256xf32>
    %252 = arith.addf %251, %230 : vector<2x256xf32>
    %cst_178 = arith.constant 0.000000e+00 : f32
    %253 = vector.broadcast %cst_178 : f32 to vector<2x256xf32>
    %254 = arith.maximumf %252, %253 : vector<2x256xf32>
    %255 = vector.extract_strided_slice %254 {offsets = [0, 0], sizes = [1, 256], strides = [1, 1]} : vector<2x256xf32> to vector<1x256xf32>
    %cst_179 = arith.constant dense<0xFF800000> : vector<256xf32>
    %256 = vector.multi_reduction <maximumf>, %255, %cst_179 [0] : vector<1x256xf32> to vector<256xf32>
    %257 = vector.shape_cast %256 : vector<256xf32> to vector<1x256xf32>
    %c0_180 = arith.constant 0 : index
    %c0_181 = arith.constant 0 : index
    %258 = vector.load %arg50[%c0_180, %c0_181] : memref<2x256xf32, #tpu.memory_space<vmem>>, vector<1x256xf32>
    tpu.vector_store %arg50[%c0_180, %c0_181], %257 {strides = array<i32>} : memref<2x256xf32, #tpu.memory_space<vmem>>, vector<1x256xf32>,
    %259 = vector.extract_strided_slice %254 {offsets = [1, 0], sizes = [1, 256], strides = [1, 1]} : vector<2x256xf32> to vector<1x256xf32>
    %cst_182 = arith.constant dense<0xFF800000> : vector<256xf32>
    %260 = vector.multi_reduction <maximumf>, %259, %cst_182 [0] : vector<1x256xf32> to vector<256xf32>
    %261 = vector.shape_cast %260 : vector<256xf32> to vector<1x256xf32>
    %c1 = arith.constant 1 : index
    %c0_183 = arith.constant 0 : index
    %262 = vector.load %arg50[%c1, %c0_183] : memref<2x256xf32, #tpu.memory_space<vmem>>, vector<1x256xf32>
    tpu.vector_store %arg50[%c1, %c0_183], %261 {strides = array<i32>} : memref<2x256xf32, #tpu.memory_space<vmem>>, vector<1x256xf32>,
    return
  }
}

</mosaic_0001>

<llo_original>
// kernel: tpu_custom_call.1
$region0: #{tpu_custom_call.1}
  #allocation0 [shape = 'u32[]', space=smem, size = 0x4, offset = 0x4, fixed_abs, tag = 'smem constant byte address 0x4 - core index']
  #allocation1 [shape = 'u32[144,128]{1,0:T(1,128)}', space=vmem, size = 0x12000, scoped, tag = 'internal scratch']
  %s0 = inlined_call_operand.smem [shape: u32[51], index: -1, kind: input, shape index: {}]
  %s1 = sld [smem:[%s0]]
  %s2 = scalar_lea.smem %s0, 1
  %s3 = sld [smem:[%s2]]
  %s4 = scalar_lea.smem %s0, 2
  %s5 = sld [smem:[%s4]]
  %s6 = scalar_lea.smem %s0, 3
  %s7 = sld [smem:[%s6]]
  %s8 = scalar_lea.smem %s0, 4
  %s9 = sld [smem:[%s8]]
  %s10 = scalar_lea.smem %s0, 5
  %s11 = sld [smem:[%s10]]
  %s12 = scalar_lea.smem %s0, 6
  %s13 = sld [smem:[%s12]]
  %s14 = scalar_lea.smem %s0, 7
  %s15 = sld [smem:[%s14]]
  %s16 = scalar_lea.smem %s0, 8
  %s17 = sld [smem:[%s16]]
  %s18 = scalar_lea.smem %s0, 9
  %s19 = sld [smem:[%s18]]
  %s20 = scalar_lea.smem %s0, 10
  %s21 = sld [smem:[%s20]]
  %s22 = scalar_lea.smem %s0, 11
  %s23 = sld [smem:[%s22]]
  %s24 = scalar_lea.smem %s0, 12
  %s25 = sld [smem:[%s24]]
  %s26 = scalar_lea.smem %s0, 13
  %s27 = sld [smem:[%s26]]
  %s28 = scalar_lea.smem %s0, 14
  %s29 = sld [smem:[%s28]]
  %s30 = scalar_lea.smem %s0, 15
  %s31 = sld [smem:[%s30]]
  %s32 = scalar_lea.smem %s0, 16
  %s33 = sld [smem:[%s32]]
  %s34 = scalar_lea.smem %s0, 17
  %s35 = sld [smem:[%s34]]
  %s36 = scalar_lea.smem %s0, 18
  %s37 = sld [smem:[%s36]]
  %s38 = scalar_lea.smem %s0, 19
  %s39 = sld [smem:[%s38]]
  %s40 = scalar_lea.smem %s0, 20
  %s41 = sld [smem:[%s40]]
  %s42 = scalar_lea.smem %s0, 21
  %s43 = sld [smem:[%s42]]
  %s44 = scalar_lea.smem %s0, 22
  %s45 = sld [smem:[%s44]]
  %s46 = scalar_lea.smem %s0, 23
  %s47 = sld [smem:[%s46]]
  %s48 = scalar_lea.smem %s0, 24
  %s49 = sld [smem:[%s48]]
  %s50 = scalar_lea.smem %s0, 25
  %s51 = sld [smem:[%s50]]
  %s52 = scalar_lea.smem %s0, 26
  %s53 = sld [smem:[%s52]]
  %s54 = scalar_lea.smem %s0, 27
  %s55 = sld [smem:[%s54]]
  %s56 = scalar_lea.smem %s0, 28
  %s57 = sld [smem:[%s56]]
  %s58 = scalar_lea.smem %s0, 29
  %s59 = sld [smem:[%s58]]
  %s60 = scalar_lea.smem %s0, 30
  %s61 = sld [smem:[%s60]]
  %s62 = scalar_lea.smem %s0, 31
  %s63 = sld [smem:[%s62]]
  %s64 = scalar_lea.smem %s0, 32
  %s65 = sld [smem:[%s64]]
  %s66 = scalar_lea.smem %s0, 33
  %s67 = sld [smem:[%s66]]
  %s68 = scalar_lea.smem %s0, 34
  %s69 = sld [smem:[%s68]]
  %s70 = scalar_lea.smem %s0, 35
  %s71 = sld [smem:[%s70]]
  %s72 = scalar_lea.smem %s0, 36
  %s73 = sld [smem:[%s72]]
  %s74 = scalar_lea.smem %s0, 37
  %s75 = sld [smem:[%s74]]
  %s76 = scalar_lea.smem %s0, 38
  %s77 = sld [smem:[%s76]]
  %s78 = scalar_lea.smem %s0, 39
  %s79 = sld [smem:[%s78]]
  %s80 = scalar_lea.smem %s0, 40
  %s81 = sld [smem:[%s80]]
  %s82 = scalar_lea.smem %s0, 41
  %s83 = sld [smem:[%s82]]
  %s84 = scalar_lea.smem %s0, 42
  %s85 = sld [smem:[%s84]]
  %s86 = scalar_lea.smem %s0, 43
  %s87 = sld [smem:[%s86]]
  %s88 = scalar_lea.smem %s0, 44
  %s89 = sld [smem:[%s88]]
  %s90 = scalar_lea.smem %s0, 45
  %s91 = sld [smem:[%s90]]
  %s92 = scalar_lea.smem %s0, 46
  %s93 = sld [smem:[%s92]]
  %s94 = scalar_lea.smem %s0, 47
  %s95 = sld [smem:[%s94]]
  %s96 = scalar_lea.smem %s0, 48
  %s97 = sld [smem:[%s96]]
  %s98 = scalar_lea.smem %s0, 49
  %s99 = sld [smem:[%s98]]
  %s100 = scalar_lea.smem %s0, 50
  %s101 = sld [smem:[%s100]]
  %s102 = sld [smem:[#allocation0]]
  $region338: #{tpu_custom_call.1} parent=0
    _
  %s104 = ssub.s32 1, %s102
  %s105 = scalar_select 0, %s104, %s102
  $region1: #{tpu_custom_call.1} parent=0
    #allocation2 [shape = 'u8[512]{0}', space=vmem, size = 0x400, scoped, tag = 'input window, operand 1, single buffered']
    #allocation3 [shape = 's32[1]{0}', space=sflag, size = 0x4, scoped, tag = 'scoped memory for tpu_custom_call.1']
    #allocation4 [shape = 's32[1]{0}', space=sflag, size = 0x4, scoped, tag = 'scoped memory for tpu_custom_call.1']
    #allocation5 [shape = 'u8[512]{0}', space=vmem, size = 0x400, scoped, tag = 'input window, operand 3, single buffered']
    #allocation6 [shape = 's32[1]{0}', space=sflag, size = 0x4, scoped, tag = 'scoped memory for tpu_custom_call.1']
    #allocation7 [shape = 'u8[512]{0}', space=vmem, size = 0x400, scoped, tag = 'input window, operand 5, single buffered']
    #allocation8 [shape = 'u8[512]{0}', space=vmem, size = 0x400, scoped, tag = 'input window, operand 7, single buffered']
    #allocation9 [shape = 's32[1]{0}', space=sflag, size = 0x4, scoped, tag = 'scoped memory for tpu_custom_call.1']
    #allocation10 [shape = 'u8[512]{0}', space=vmem, size = 0x400, scoped, tag = 'input window, operand 9, single buffered']
    #allocation11 [shape = 'u8[512]{0}', space=vmem, size = 0x400, scoped, tag = 'input window, operand 11, single buffered']
    #allocation12 [shape = 's32[1]{0}', space=sflag, size = 0x4, scoped, tag = 'scoped memory for tpu_custom_call.1']
    #allocation13 [shape = 'u8[512]{0}', space=vmem, size = 0x400, scoped, tag = 'input window, operand 13, single buffered']
    #allocation14 [shape = 'u8[512]{0}', space=vmem, size = 0x400, scoped, tag = 'input window, operand 15, single buffered']
    #allocation15 [shape = 's32[1]{0}', space=sflag, size = 0x4, scoped, tag = 'scoped memory for tpu_custom_call.1']
    #allocation16 [shape = 'u8[512]{0}', space=vmem, size = 0x400, scoped, tag = 'input window, operand 17, single buffered']
    #allocation17 [shape = 'u8[1024]{0}', space=vmem, size = 0x400, scoped, tag = 'input window, operand 18, single buffered']
    #allocation18 [shape = 's32[1]{0}', space=sflag, size = 0x4, scoped, tag = 'scoped memory for tpu_custom_call.1']
    #allocation19 [shape = 'u8[512]{0}', space=vmem, size = 0x400, scoped, tag = 'input window, operand 19, single buffered']
    #allocation20 [shape = 'u8[8192]{0}', space=vmem, size = 0x2000, scoped, tag = 'input window, operand 20, single buffered']
    #allocation21 [shape = 's32[1]{0}', space=sflag, size = 0x4, scoped, tag = 'scoped memory for tpu_custom_call.1']
    #allocation22 [shape = 'u8[512]{0}', space=vmem, size = 0x400, scoped, tag = 'input window, operand 21, single buffered']
    #allocation23 [shape = 'u8[512]{0}', space=vmem, size = 0x400, scoped, tag = 'input window, operand 23, single buffered']
    #allocation24 [shape = 's32[1]{0}', space=sflag, size = 0x4, scoped, tag = 'scoped memory for tpu_custom_call.1']
    #allocation25 [shape = 'u8[49152]{0}', space=vmem, size = 0xc000, scoped, tag = 'input window, operand 24, single buffered']
    #allocation26 [shape = 'u8[512]{0}', space=vmem, size = 0x400, scoped, tag = 'input window, operand 25, single buffered']
    #allocation27 [shape = 's32[1]{0}', space=sflag, size = 0x4, scoped, tag = 'scoped memory for tpu_custom_call.1']
    #allocation28 [shape = 'u8[512]{0}', space=vmem, size = 0x400, scoped, tag = 'input window, operand 27, single buffered']
    #allocation29 [shape = 'u8[512]{0}', space=vmem, size = 0x400, scoped, tag = 'input window, operand 29, single buffered']
    #allocation30 [shape = 's32[1]{0}', space=sflag, size = 0x4, scoped, tag = 'scoped memory for tpu_custom_call.1']
    #allocation31 [shape = 'u8[512]{0}', space=vmem, size = 0x400, scoped, tag = 'input window, operand 30, single buffered']
    #allocation32 [shape = 'u8[512]{0}', space=vmem, size = 0x400, scoped, tag = 'input window, operand 31, single buffered']
    #allocation33 [shape = 's32[1]{0}', space=sflag, size = 0x4, scoped, tag = 'scoped memory for tpu_custom_call.1']
    #allocation34 [shape = 'u8[16384]{0}', space=vmem, size = 0x4000, scoped, tag = 'input window, operand 32, single buffered']
    #allocation35 [shape = 'u8[1024]{0}', space=vmem, size = 0x400, scoped, tag = 'input window, operand 33, single buffered']
    #allocation36 [shape = 's32[1]{0}', space=sflag, size = 0x4, scoped, tag = 'scoped memory for tpu_custom_call.1']
    #allocation37 [shape = 'u8[1024]{0}', space=vmem, size = 0x400, scoped, tag = 'input window, operand 35, single buffered']
    #allocation38 [shape = 'u8[1024]{0}', space=vmem, size = 0x400, scoped, tag = 'input window, operand 37, single buffered']
    #allocation39 [shape = 's32[1]{0}', space=sflag, size = 0x4, scoped, tag = 'scoped memory for tpu_custom_call.1']
    #allocation40 [shape = 'u8[1024]{0}', space=vmem, size = 0x400, scoped, tag = 'input window, operand 39, single buffered']
    #allocation41 [shape = 'u8[393216]{0}', space=vmem, size = 0x60000, scoped, tag = 'input window, operand 40, single buffered']
    #allocation42 [shape = 's32[1]{0}', space=sflag, size = 0x4, scoped, tag = 'scoped memory for tpu_custom_call.1']
    #allocation43 [shape = 'u8[1024]{0}', space=vmem, size = 0x400, scoped, tag = 'input window, operand 41, single buffered']
    #allocation44 [shape = 'u8[512]{0}', space=vmem, size = 0x400, scoped, tag = 'input window, operand 42, single buffered']
    #allocation45 [shape = 's32[1]{0}', space=sflag, size = 0x4, scoped, tag = 'scoped memory for tpu_custom_call.1']
    #allocation46 [shape = 'u8[1024]{0}', space=vmem, size = 0x400, scoped, tag = 'input window, operand 43, single buffered']
    #allocation47 [shape = 'u8[65536]{0}', space=vmem, size = 0x10000, scoped, tag = 'input window, operand 44, single buffered']
    #allocation48 [shape = 's32[1]{0}', space=sflag, size = 0x4, scoped, tag = 'scoped memory for tpu_custom_call.1']
    #allocation49 [shape = 'u8[512]{0}', space=vmem, size = 0x400, scoped, tag = 'input window, operand 46, single buffered']
    #allocation50 [shape = 'u8[512]{0}', space=vmem, size = 0x400, scoped, tag = 'input window, operand 48, single buffered']
    #allocation51 [shape = 's32[1]{0}', space=sflag, size = 0x4, scoped, tag = 'scoped memory for tpu_custom_call.1']
    #allocation52 [shape = 'u8[2048]{0}', space=vmem, size = 0x800, scoped, tag = 'output window, operand 0, single buffered']
    %106 = vsyncpa [#allocation3], 0
    %107 = vsyncpa [#allocation6], 0
    %108 = vsyncpa [#allocation9], 0
    %109 = vsyncpa [#allocation12], 0
    %110 = vsyncpa [#allocation15], 0
    %111 = vsyncpa [#allocation18], 0
    %112 = vsyncpa [#allocation21], 0
    %113 = vsyncpa [#allocation24], 0
    %114 = vsyncpa [#allocation27], 0
    %115 = vsyncpa [#allocation30], 0
    %116 = vsyncpa [#allocation33], 0
    %117 = vsyncpa [#allocation36], 0
    %118 = vsyncpa [#allocation39], 0
    %119 = vsyncpa [#allocation42], 0
    %120 = vsyncpa [#allocation45], 0
    %121 = vsyncpa [#allocation48], 0
    %122 = vsyncpa [#allocation51], 0
    %123 = vsyncpa [#allocation4], 0
    // Predicated region
    $region2: #{tpu_custom_call.1} parent=1 // pred_check
      _
    $region3: #{tpu_custom_call.1} parent=1 // pred_check_branch
      %125 = sbr.rel (0) target = $region5
    $region4: #{tpu_custom_call.1} parent=1 // pred_region
      _
    $region5: #{tpu_custom_call.1} parent=1 // pred_fallthru
      _
    // Predicated region
    $region6: #{tpu_custom_call.1} parent=1 // pred_check
      _
    $region7: #{tpu_custom_call.1} parent=1 // pred_check_branch
      %127 = sbr.rel (0) target = $region9
    $region8: #{tpu_custom_call.1} parent=1 // pred_region
      %s129 = ssub.s32 16, 16
      %130 = vsyncadd [#allocation3], %s129
      %s132 = sshll.u32 [#allocation2], 4
      %s133 = int_to_ptr.vmem [resolvable:$true] %s132
      %135 = dma.hbm_to_vmem [thread:$0]  %s3, 16, %s133, [#allocation3]
    $region9: #{tpu_custom_call.1} parent=1 // pred_fallthru
      _
    // Predicated region
    $region10: #{tpu_custom_call.1} parent=1 // pred_check
      _
    $region11: #{tpu_custom_call.1} parent=1 // pred_check_branch
      %137 = sbr.rel (0) target = $region13
    $region12: #{tpu_custom_call.1} parent=1 // pred_region
      _
    $region13: #{tpu_custom_call.1} parent=1 // pred_fallthru
      _
    // Predicated region
    $region14: #{tpu_custom_call.1} parent=1 // pred_check
      _
    $region15: #{tpu_custom_call.1} parent=1 // pred_check_branch
      %139 = sbr.rel (0) target = $region17
    $region16: #{tpu_custom_call.1} parent=1 // pred_region
      %s141 = ssub.s32 16, 16
      %142 = vsyncadd [#allocation6], %s141
      %s144 = sshll.u32 [#allocation5], 4
      %s145 = int_to_ptr.vmem [resolvable:$true] %s144
      %147 = dma.hbm_to_vmem [thread:$0]  %s7, 16, %s145, [#allocation6]
    $region17: #{tpu_custom_call.1} parent=1 // pred_fallthru
      _
    // Predicated region
    $region18: #{tpu_custom_call.1} parent=1 // pred_check
      _
    $region19: #{tpu_custom_call.1} parent=1 // pred_check_branch
      %149 = sbr.rel (0) target = $region21
    $region20: #{tpu_custom_call.1} parent=1 // pred_region
      _
    $region21: #{tpu_custom_call.1} parent=1 // pred_fallthru
      _
    // Predicated region
    $region22: #{tpu_custom_call.1} parent=1 // pred_check
      _
    $region23: #{tpu_custom_call.1} parent=1 // pred_check_branch
      %151 = sbr.rel (0) target = $region25
    $region24: #{tpu_custom_call.1} parent=1 // pred_region
      %s153 = ssub.s32 16, 16
      %154 = vsyncadd [#allocation6], %s153
      %s156 = sshll.u32 [#allocation7], 4
      %s157 = int_to_ptr.vmem [resolvable:$true] %s156
      %159 = dma.hbm_to_vmem [thread:$0]  %s11, 16, %s157, [#allocation6]
    $region25: #{tpu_custom_call.1} parent=1 // pred_fallthru
      _
    // Predicated region
    $region26: #{tpu_custom_call.1} parent=1 // pred_check
      _
    $region27: #{tpu_custom_call.1} parent=1 // pred_check_branch
      %161 = sbr.rel (0) target = $region29
    $region28: #{tpu_custom_call.1} parent=1 // pred_region
      _
    $region29: #{tpu_custom_call.1} parent=1 // pred_fallthru
      _
    // Predicated region
    $region30: #{tpu_custom_call.1} parent=1 // pred_check
      _
    $region31: #{tpu_custom_call.1} parent=1 // pred_check_branch
      %163 = sbr.rel (0) target = $region33
    $region32: #{tpu_custom_call.1} parent=1 // pred_region
      %s165 = ssub.s32 16, 16
      %166 = vsyncadd [#allocation9], %s165
      %s168 = sshll.u32 [#allocation8], 4
      %s169 = int_to_ptr.vmem [resolvable:$true] %s168
      %171 = dma.hbm_to_vmem [thread:$0]  %s15, 16, %s169, [#allocation9]
    $region33: #{tpu_custom_call.1} parent=1 // pred_fallthru
      _
    // Predicated region
    $region34: #{tpu_custom_call.1} parent=1 // pred_check
      _
    $region35: #{tpu_custom_call.1} parent=1 // pred_check_branch
      %173 = sbr.rel (0) target = $region37
    $region36: #{tpu_custom_call.1} parent=1 // pred_region
      _
    $region37: #{tpu_custom_call.1} parent=1 // pred_fallthru
      _
    // Predicated region
    $region38: #{tpu_custom_call.1} parent=1 // pred_check
      _
    $region39: #{tpu_custom_call.1} parent=1 // pred_check_branch
      %175 = sbr.rel (0) target = $region41
    $region40: #{tpu_custom_call.1} parent=1 // pred_region
      %s177 = ssub.s32 16, 16
      %178 = vsyncadd [#allocation9], %s177
      %s180 = sshll.u32 [#allocation10], 4
      %s181 = int_to_ptr.vmem [resolvable:$true] %s180
      %183 = dma.hbm_to_vmem [thread:$0]  %s19, 16, %s181, [#allocation9]
    $region41: #{tpu_custom_call.1} parent=1 // pred_fallthru
      _
    // Predicated region
    $region42: #{tpu_custom_call.1} parent=1 // pred_check
      _
    $region43: #{tpu_custom_call.1} parent=1 // pred_check_branch
      %185 = sbr.rel (0) target = $region45
    $region44: #{tpu_custom_call.1} parent=1 // pred_region
      _
    $region45: #{tpu_custom_call.1} parent=1 // pred_fallthru
      _
    // Predicated region
    $region46: #{tpu_custom_call.1} parent=1 // pred_check
      _
    $region47: #{tpu_custom_call.1} parent=1 // pred_check_branch
      %187 = sbr.rel (0) target = $region49
    $region48: #{tpu_custom_call.1} parent=1 // pred_region
      %s189 = ssub.s32 16, 16
      %190 = vsyncadd [#allocation12], %s189
      %s192 = sshll.u32 [#allocation11], 4
      %s193 = int_to_ptr.vmem [resolvable:$true] %s192
      %195 = dma.hbm_to_vmem [thread:$0]  %s23, 16, %s193, [#allocation12]
    $region49: #{tpu_custom_call.1} parent=1 // pred_fallthru
      _
    // Predicated region
    $region50: #{tpu_custom_call.1} parent=1 // pred_check
      _
    $region51: #{tpu_custom_call.1} parent=1 // pred_check_branch
      %197 = sbr.rel (0) target = $region53
    $region52: #{tpu_custom_call.1} parent=1 // pred_region
      _
    $region53: #{tpu_custom_call.1} parent=1 // pred_fallthru
      _
    // Predicated region
    $region54: #{tpu_custom_call.1} parent=1 // pred_check
      _
    $region55: #{tpu_custom_call.1} parent=1 // pred_check_branch
      %199 = sbr.rel (0) target = $region57
    $region56: #{tpu_custom_call.1} parent=1 // pred_region
      %s201 = ssub.s32 16, 16
      %202 = vsyncadd [#allocation12], %s201
      %s204 = sshll.u32 [#allocation13], 4
      %s205 = int_to_ptr.vmem [resolvable:$true] %s204
      %207 = dma.hbm_to_vmem [thread:$0]  %s27, 16, %s205, [#allocation12]
    $region57: #{tpu_custom_call.1} parent=1 // pred_fallthru
      _
    // Predicated region
    $region58: #{tpu_custom_call.1} parent=1 // pred_check
      _
    $region59: #{tpu_custom_call.1} parent=1 // pred_check_branch
      %209 = sbr.rel (0) target = $region61
    $region60: #{tpu_custom_call.1} parent=1 // pred_region
      _
    $region61: #{tpu_custom_call.1} parent=1 // pred_fallthru
      _
    // Predicated region
    $region62: #{tpu_custom_call.1} parent=1 // pred_check
      _
    $region63: #{tpu_custom_call.1} parent=1 // pred_check_branch
      %211 = sbr.rel (0) target = $region65
    $region64: #{tpu_custom_call.1} parent=1 // pred_region
      %s213 = ssub.s32 16, 16
      %214 = vsyncadd [#allocation15], %s213
      %s216 = sshll.u32 [#allocation14], 4
      %s217 = int_to_ptr.vmem [resolvable:$true] %s216
      %219 = dma.hbm_to_vmem [thread:$0]  %s31, 16, %s217, [#allocation15]
    $region65: #{tpu_custom_call.1} parent=1 // pred_fallthru
      _
    // Predicated region
    $region66: #{tpu_custom_call.1} parent=1 // pred_check
      _
    $region67: #{tpu_custom_call.1} parent=1 // pred_check_branch
      %221 = sbr.rel (0) target = $region69
    $region68: #{tpu_custom_call.1} parent=1 // pred_region
      _
    $region69: #{tpu_custom_call.1} parent=1 // pred_fallthru
      _
    // Predicated region
    $region70: #{tpu_custom_call.1} parent=1 // pred_check
      _
    $region71: #{tpu_custom_call.1} parent=1 // pred_check_branch
      %223 = sbr.rel (0) target = $region73
    $region72: #{tpu_custom_call.1} parent=1 // pred_region
      %s225 = ssub.s32 16, 16
      %226 = vsyncadd [#allocation15], %s225
      %s228 = sshll.u32 [#allocation16], 4
      %s229 = int_to_ptr.vmem [resolvable:$true] %s228
      %231 = dma.hbm_to_vmem [thread:$0]  %s35, 16, %s229, [#allocation15]
    $region73: #{tpu_custom_call.1} parent=1 // pred_fallthru
      _
    // Predicated region
    $region74: #{tpu_custom_call.1} parent=1 // pred_check
      _
    $region75: #{tpu_custom_call.1} parent=1 // pred_check_branch
      %233 = sbr.rel (0) target = $region77
    $region76: #{tpu_custom_call.1} parent=1 // pred_region
      %s235 = ssub.s32 32, 32
      %236 = vsyncadd [#allocation18], %s235
      %s238 = sshll.u32 [#allocation17], 4
      %s239 = int_to_ptr.vmem [resolvable:$true] %s238
      %241 = dma.hbm_to_vmem [thread:$0]  %s37, 32, %s239, [#allocation18]
    $region77: #{tpu_custom_call.1} parent=1 // pred_fallthru
      _
    // Predicated region
    $region78: #{tpu_custom_call.1} parent=1 // pred_check
      _
    $region79: #{tpu_custom_call.1} parent=1 // pred_check_branch
      %243 = sbr.rel (0) target = $region81
    $region80: #{tpu_custom_call.1} parent=1 // pred_region
      %s245 = ssub.s32 16, 16
      %246 = vsyncadd [#allocation18], %s245
      %s248 = sshll.u32 [#allocation19], 4
      %s249 = int_to_ptr.vmem [resolvable:$true] %s248
      %251 = dma.hbm_to_vmem [thread:$0]  %s39, 16, %s249, [#allocation18]
    $region81: #{tpu_custom_call.1} parent=1 // pred_fallthru
      _
    // Predicated region
    $region82: #{tpu_custom_call.1} parent=1 // pred_check
      _
    $region83: #{tpu_custom_call.1} parent=1 // pred_check_branch
      %253 = sbr.rel (0) target = $region85
    $region84: #{tpu_custom_call.1} parent=1 // pred_region
      %s255 = ssub.s32 256, 256
      %256 = vsyncadd [#allocation21], %s255
      %s257 = sshll.u32 [#allocation20], 4
      %s258 = int_to_ptr.vmem [resolvable:$true] %s257
      %263 = dma.hbm_to_vmem [thread:$0]  %s41, 256, %s258, [#allocation21], 64, 64, 4
    $region85: #{tpu_custom_call.1} parent=1 // pred_fallthru
      _
    // Predicated region
    $region86: #{tpu_custom_call.1} parent=1 // pred_check
      _
    $region87: #{tpu_custom_call.1} parent=1 // pred_check_branch
      %265 = sbr.rel (0) target = $region89
    $region88: #{tpu_custom_call.1} parent=1 // pred_region
      %s267 = ssub.s32 16, 16
      %268 = vsyncadd [#allocation21], %s267
      %s270 = sshll.u32 [#allocation22], 4
      %s271 = int_to_ptr.vmem [resolvable:$true] %s270
      %273 = dma.hbm_to_vmem [thread:$0]  %s43, 16, %s271, [#allocation21]
    $region89: #{tpu_custom_call.1} parent=1 // pred_fallthru
      _
    // Predicated region
    $region90: #{tpu_custom_call.1} parent=1 // pred_check
      _
    $region91: #{tpu_custom_call.1} parent=1 // pred_check_branch
      %275 = sbr.rel (0) target = $region93
    $region92: #{tpu_custom_call.1} parent=1 // pred_region
      _
    $region93: #{tpu_custom_call.1} parent=1 // pred_fallthru
      _
    // Predicated region
    $region94: #{tpu_custom_call.1} parent=1 // pred_check
      _
    $region95: #{tpu_custom_call.1} parent=1 // pred_check_branch
      %277 = sbr.rel (0) target = $region97
    $region96: #{tpu_custom_call.1} parent=1 // pred_region
      %s279 = ssub.s32 16, 16
      %280 = vsyncadd [#allocation24], %s279
      %s282 = sshll.u32 [#allocation23], 4
      %s283 = int_to_ptr.vmem [resolvable:$true] %s282
      %285 = dma.hbm_to_vmem [thread:$0]  %s47, 16, %s283, [#allocation24]
    $region97: #{tpu_custom_call.1} parent=1 // pred_fallthru
      _
    // Predicated region
    $region98: #{tpu_custom_call.1} parent=1 // pred_check
      _
    $region99: #{tpu_custom_call.1} parent=1 // pred_check_branch
      %287 = sbr.rel (0) target = $region101
    $region100: #{tpu_custom_call.1} parent=1 // pred_region
      %s289 = ssub.s32 1536, 1536
      %290 = vsyncadd [#allocation24], %s289
      %s291 = sshll.u32 [#allocation25], 4
      %s292 = int_to_ptr.vmem [resolvable:$true] %s291
      %297 = dma.hbm_to_vmem [thread:$0]  %s49, 1536, %s292, [#allocation24], 64, 64, 4
    $region101: #{tpu_custom_call.1} parent=1 // pred_fallthru
      _
    // Predicated region
    $region102: #{tpu_custom_call.1} parent=1 // pred_check
      _
    $region103: #{tpu_custom_call.1} parent=1 // pred_check_branch
      %299 = sbr.rel (0) target = $region105
    $region104: #{tpu_custom_call.1} parent=1 // pred_region
      %s301 = ssub.s32 16, 16
      %302 = vsyncadd [#allocation27], %s301
      %s304 = sshll.u32 [#allocation26], 4
      %s305 = int_to_ptr.vmem [resolvable:$true] %s304
      %307 = dma.hbm_to_vmem [thread:$0]  %s51, 16, %s305, [#allocation27]
    $region105: #{tpu_custom_call.1} parent=1 // pred_fallthru
      _
    // Predicated region
    $region106: #{tpu_custom_call.1} parent=1 // pred_check
      _
    $region107: #{tpu_custom_call.1} parent=1 // pred_check_branch
      %309 = sbr.rel (0) target = $region109
    $region108: #{tpu_custom_call.1} parent=1 // pred_region
      _
    $region109: #{tpu_custom_call.1} parent=1 // pred_fallthru
      _
    // Predicated region
    $region110: #{tpu_custom_call.1} parent=1 // pred_check
      _
    $region111: #{tpu_custom_call.1} parent=1 // pred_check_branch
      %311 = sbr.rel (0) target = $region113
    $region112: #{tpu_custom_call.1} parent=1 // pred_region
      %s313 = ssub.s32 16, 16
      %314 = vsyncadd [#allocation27], %s313
      %s316 = sshll.u32 [#allocation28], 4
      %s317 = int_to_ptr.vmem [resolvable:$true] %s316
      %319 = dma.hbm_to_vmem [thread:$0]  %s55, 16, %s317, [#allocation27]
    $region113: #{tpu_custom_call.1} parent=1 // pred_fallthru
      _
    // Predicated region
    $region114: #{tpu_custom_call.1} parent=1 // pred_check
      _
    $region115: #{tpu_custom_call.1} parent=1 // pred_check_branch
      %321 = sbr.rel (0) target = $region117
    $region116: #{tpu_custom_call.1} parent=1 // pred_region
      _
    $region117: #{tpu_custom_call.1} parent=1 // pred_fallthru
      _
    // Predicated region
    $region118: #{tpu_custom_call.1} parent=1 // pred_check
      _
    $region119: #{tpu_custom_call.1} parent=1 // pred_check_branch
      %323 = sbr.rel (0) target = $region121
    $region120: #{tpu_custom_call.1} parent=1 // pred_region
      %s325 = ssub.s32 16, 16
      %326 = vsyncadd [#allocation30], %s325
      %s328 = sshll.u32 [#allocation29], 4
      %s329 = int_to_ptr.vmem [resolvable:$true] %s328
      %331 = dma.hbm_to_vmem [thread:$0]  %s59, 16, %s329, [#allocation30]
    $region121: #{tpu_custom_call.1} parent=1 // pred_fallthru
      _
    // Predicated region
    $region122: #{tpu_custom_call.1} parent=1 // pred_check
      _
    $region123: #{tpu_custom_call.1} parent=1 // pred_check_branch
      %333 = sbr.rel (0) target = $region125
    $region124: #{tpu_custom_call.1} parent=1 // pred_region
      %s335 = ssub.s32 16, 16
      %336 = vsyncadd [#allocation30], %s335
      %s338 = sshll.u32 [#allocation31], 4
      %s339 = int_to_ptr.vmem [resolvable:$true] %s338
      %341 = dma.hbm_to_vmem [thread:$0]  %s61, 16, %s339, [#allocation30]
    $region125: #{tpu_custom_call.1} parent=1 // pred_fallthru
      _
    // Predicated region
    $region126: #{tpu_custom_call.1} parent=1 // pred_check
      _
    $region127: #{tpu_custom_call.1} parent=1 // pred_check_branch
      %343 = sbr.rel (0) target = $region129
    $region128: #{tpu_custom_call.1} parent=1 // pred_region
      %s345 = ssub.s32 16, 16
      %346 = vsyncadd [#allocation33], %s345
      %s348 = sshll.u32 [#allocation32], 4
      %s349 = int_to_ptr.vmem [resolvable:$true] %s348
      %351 = dma.hbm_to_vmem [thread:$0]  %s63, 16, %s349, [#allocation33]
    $region129: #{tpu_custom_call.1} parent=1 // pred_fallthru
      _
    // Predicated region
    $region130: #{tpu_custom_call.1} parent=1 // pred_check
      _
    $region131: #{tpu_custom_call.1} parent=1 // pred_check_branch
      %353 = sbr.rel (0) target = $region133
    $region132: #{tpu_custom_call.1} parent=1 // pred_region
      %s355 = ssub.s32 512, 512
      %356 = vsyncadd [#allocation33], %s355
      %s357 = sshll.u32 [#allocation34], 4
      %s358 = int_to_ptr.vmem [resolvable:$true] %s357
      %363 = dma.hbm_to_vmem [thread:$0]  %s65, 512, %s358, [#allocation33], 64, 64, 4
    $region133: #{tpu_custom_call.1} parent=1 // pred_fallthru
      _
    // Predicated region
    $region134: #{tpu_custom_call.1} parent=1 // pred_check
      _
    $region135: #{tpu_custom_call.1} parent=1 // pred_check_branch
      %365 = sbr.rel (0) target = $region137
    $region136: #{tpu_custom_call.1} parent=1 // pred_region
      %s367 = ssub.s32 32, 32
      %368 = vsyncadd [#allocation36], %s367
      %s370 = sshll.u32 [#allocation35], 4
      %s371 = int_to_ptr.vmem [resolvable:$true] %s370
      %373 = dma.hbm_to_vmem [thread:$0]  %s67, 32, %s371, [#allocation36]
    $region137: #{tpu_custom_call.1} parent=1 // pred_fallthru
      _
    // Predicated region
    $region138: #{tpu_custom_call.1} parent=1 // pred_check
      _
    $region139: #{tpu_custom_call.1} parent=1 // pred_check_branch
      %375 = sbr.rel (0) target = $region141
    $region140: #{tpu_custom_call.1} parent=1 // pred_region
      _
    $region141: #{tpu_custom_call.1} parent=1 // pred_fallthru
      _
    // Predicated region
    $region142: #{tpu_custom_call.1} parent=1 // pred_check
      _
    $region143: #{tpu_custom_call.1} parent=1 // pred_check_branch
      %377 = sbr.rel (0) target = $region145
    $region144: #{tpu_custom_call.1} parent=1 // pred_region
      %s379 = ssub.s32 32, 32
      %380 = vsyncadd [#allocation36], %s379
      %s382 = sshll.u32 [#allocation37], 4
      %s383 = int_to_ptr.vmem [resolvable:$true] %s382
      %385 = dma.hbm_to_vmem [thread:$0]  %s71, 32, %s383, [#allocation36]
    $region145: #{tpu_custom_call.1} parent=1 // pred_fallthru
      _
    // Predicated region
    $region146: #{tpu_custom_call.1} parent=1 // pred_check
      _
    $region147: #{tpu_custom_call.1} parent=1 // pred_check_branch
      %387 = sbr.rel (0) target = $region149
    $region148: #{tpu_custom_call.1} parent=1 // pred_region
      _
    $region149: #{tpu_custom_call.1} parent=1 // pred_fallthru
      _
    // Predicated region
    $region150: #{tpu_custom_call.1} parent=1 // pred_check
      _
    $region151: #{tpu_custom_call.1} parent=1 // pred_check_branch
      %389 = sbr.rel (0) target = $region153
    $region152: #{tpu_custom_call.1} parent=1 // pred_region
      %s391 = ssub.s32 32, 32
      %392 = vsyncadd [#allocation39], %s391
      %s394 = sshll.u32 [#allocation38], 4
      %s395 = int_to_ptr.vmem [resolvable:$true] %s394
      %397 = dma.hbm_to_vmem [thread:$0]  %s75, 32, %s395, [#allocation39]
    $region153: #{tpu_custom_call.1} parent=1 // pred_fallthru
      _
    // Predicated region
    $region154: #{tpu_custom_call.1} parent=1 // pred_check
      _
    $region155: #{tpu_custom_call.1} parent=1 // pred_check_branch
      %399 = sbr.rel (0) target = $region157
    $region156: #{tpu_custom_call.1} parent=1 // pred_region
      _
    $region157: #{tpu_custom_call.1} parent=1 // pred_fallthru
      _
    // Predicated region
    $region158: #{tpu_custom_call.1} parent=1 // pred_check
      _
    $region159: #{tpu_custom_call.1} parent=1 // pred_check_branch
      %401 = sbr.rel (0) target = $region161
    $region160: #{tpu_custom_call.1} parent=1 // pred_region
      %s403 = ssub.s32 32, 32
      %404 = vsyncadd [#allocation39], %s403
      %s406 = sshll.u32 [#allocation40], 4
      %s407 = int_to_ptr.vmem [resolvable:$true] %s406
      %409 = dma.hbm_to_vmem [thread:$0]  %s79, 32, %s407, [#allocation39]
    $region161: #{tpu_custom_call.1} parent=1 // pred_fallthru
      _
    // Predicated region
    $region162: #{tpu_custom_call.1} parent=1 // pred_check
      _
    $region163: #{tpu_custom_call.1} parent=1 // pred_check_branch
      %411 = sbr.rel (0) target = $region165
    $region164: #{tpu_custom_call.1} parent=1 // pred_region
      %s413 = ssub.s32 12288, 12288
      %414 = vsyncadd [#allocation42], %s413
      %s415 = sshll.u32 [#allocation41], 4
      %s416 = int_to_ptr.vmem [resolvable:$true] %s415
      %421 = dma.hbm_to_vmem [thread:$0]  %s81, 12288, %s416, [#allocation42], 128, 128, 8
    $region165: #{tpu_custom_call.1} parent=1 // pred_fallthru
      _
    // Predicated region
    $region166: #{tpu_custom_call.1} parent=1 // pred_check
      _
    $region167: #{tpu_custom_call.1} parent=1 // pred_check_branch
      %423 = sbr.rel (0) target = $region169
    $region168: #{tpu_custom_call.1} parent=1 // pred_region
      %s425 = ssub.s32 32, 32
      %426 = vsyncadd [#allocation42], %s425
      %s428 = sshll.u32 [#allocation43], 4
      %s429 = int_to_ptr.vmem [resolvable:$true] %s428
      %431 = dma.hbm_to_vmem [thread:$0]  %s83, 32, %s429, [#allocation42]
    $region169: #{tpu_custom_call.1} parent=1 // pred_fallthru
      _
    // Predicated region
    $region170: #{tpu_custom_call.1} parent=1 // pred_check
      _
    $region171: #{tpu_custom_call.1} parent=1 // pred_check_branch
      %433 = sbr.rel (0) target = $region173
    $region172: #{tpu_custom_call.1} parent=1 // pred_region
      %s435 = ssub.s32 16, 16
      %436 = vsyncadd [#allocation45], %s435
      %s438 = sshll.u32 [#allocation44], 4
      %s439 = int_to_ptr.vmem [resolvable:$true] %s438
      %441 = dma.hbm_to_vmem [thread:$0]  %s85, 16, %s439, [#allocation45]
    $region173: #{tpu_custom_call.1} parent=1 // pred_fallthru
      _
    // Predicated region
    $region174: #{tpu_custom_call.1} parent=1 // pred_check
      _
    $region175: #{tpu_custom_call.1} parent=1 // pred_check_branch
      %443 = sbr.rel (0) target = $region177
    $region176: #{tpu_custom_call.1} parent=1 // pred_region
      %s445 = ssub.s32 32, 32
      %446 = vsyncadd [#allocation45], %s445
      %s448 = sshll.u32 [#allocation46], 4
      %s449 = int_to_ptr.vmem [resolvable:$true] %s448
      %451 = dma.hbm_to_vmem [thread:$0]  %s87, 32, %s449, [#allocation45]
    $region177: #{tpu_custom_call.1} parent=1 // pred_fallthru
      _
    // Predicated region
    $region178: #{tpu_custom_call.1} parent=1 // pred_check
      _
    $region179: #{tpu_custom_call.1} parent=1 // pred_check_branch
      %453 = sbr.rel (0) target = $region181
    $region180: #{tpu_custom_call.1} parent=1 // pred_region
      %s455 = ssub.s32 2048, 2048
      %456 = vsyncadd [#allocation48], %s455
      %s457 = sshll.u32 [#allocation47], 4
      %s458 = int_to_ptr.vmem [resolvable:$true] %s457
      %463 = dma.hbm_to_vmem [thread:$0]  %s89, 2048, %s458, [#allocation48], 128, 128, 8
    $region181: #{tpu_custom_call.1} parent=1 // pred_fallthru
      _
    // Predicated region
    $region182: #{tpu_custom_call.1} parent=1 // pred_check
      _
    $region183: #{tpu_custom_call.1} parent=1 // pred_check_branch
      %465 = sbr.rel (0) target = $region185
    $region184: #{tpu_custom_call.1} parent=1 // pred_region
      _
    $region185: #{tpu_custom_call.1} parent=1 // pred_fallthru
      _
    // Predicated region
    $region186: #{tpu_custom_call.1} parent=1 // pred_check
      _
    $region187: #{tpu_custom_call.1} parent=1 // pred_check_branch
      %467 = sbr.rel (0) target = $region189
    $region188: #{tpu_custom_call.1} parent=1 // pred_region
      %s469 = ssub.s32 16, 16
      %470 = vsyncadd [#allocation48], %s469
      %s472 = sshll.u32 [#allocation49], 4
      %s473 = int_to_ptr.vmem [resolvable:$true] %s472
      %475 = dma.hbm_to_vmem [thread:$0]  %s93, 16, %s473, [#allocation48]
    $region189: #{tpu_custom_call.1} parent=1 // pred_fallthru
      _
    // Predicated region
    $region190: #{tpu_custom_call.1} parent=1 // pred_check
      _
    $region191: #{tpu_custom_call.1} parent=1 // pred_check_branch
      %477 = sbr.rel (0) target = $region193
    $region192: #{tpu_custom_call.1} parent=1 // pred_region
      _
    $region193: #{tpu_custom_call.1} parent=1 // pred_fallthru
      _
    // Predicated region
    $region194: #{tpu_custom_call.1} parent=1 // pred_check
      _
    $region195: #{tpu_custom_call.1} parent=1 // pred_check_branch
      %479 = sbr.rel (0) target = $region197
    $region196: #{tpu_custom_call.1} parent=1 // pred_region
      %s481 = ssub.s32 16, 16
      %482 = vsyncadd [#allocation51], %s481
      %s484 = sshll.u32 [#allocation50], 4
      %s485 = int_to_ptr.vmem [resolvable:$true] %s484
      %487 = dma.hbm_to_vmem [thread:$0]  %s97, 16, %s485, [#allocation51]
    $region197: #{tpu_custom_call.1} parent=1 // pred_fallthru
      _
    // Predicated region
    $region198: #{tpu_custom_call.1} parent=1 // pred_check
      _
    $region199: #{tpu_custom_call.1} parent=1 // pred_check_branch
      %489 = sbr.rel (0) target = $region201
    $region200: #{tpu_custom_call.1} parent=1 // pred_region
      _
    $region201: #{tpu_custom_call.1} parent=1 // pred_fallthru
      _
    // Predicated region
    $region202: #{tpu_custom_call.1} parent=1 // pred_check
      _
    $region203: #{tpu_custom_call.1} parent=1 // pred_check_branch
      %491 = sbr.rel (0) target = $region205
    $region204: #{tpu_custom_call.1} parent=1 // pred_region
      %492 = dma.done [#allocation3], 16
    $region205: #{tpu_custom_call.1} parent=1 // pred_fallthru
      _
    // Predicated region
    $region206: #{tpu_custom_call.1} parent=1 // pred_check
      _
    $region207: #{tpu_custom_call.1} parent=1 // pred_check_branch
      %494 = sbr.rel (0) target = $region209
    $region208: #{tpu_custom_call.1} parent=1 // pred_region
      %495 = dma.done [#allocation6], 16
    $region209: #{tpu_custom_call.1} parent=1 // pred_fallthru
      _
    // Predicated region
    $region210: #{tpu_custom_call.1} parent=1 // pred_check
      _
    $region211: #{tpu_custom_call.1} parent=1 // pred_check_branch
      %497 = sbr.rel (0) target = $region213
    $region212: #{tpu_custom_call.1} parent=1 // pred_region
      %498 = dma.done [#allocation6], 16
    $region213: #{tpu_custom_call.1} parent=1 // pred_fallthru
      _
    // Predicated region
    $region214: #{tpu_custom_call.1} parent=1 // pred_check
      _
    $region215: #{tpu_custom_call.1} parent=1 // pred_check_branch
      %500 = sbr.rel (0) target = $region217
    $region216: #{tpu_custom_call.1} parent=1 // pred_region
      %501 = dma.done [#allocation9], 16
    $region217: #{tpu_custom_call.1} parent=1 // pred_fallthru
      _
    // Predicated region
    $region218: #{tpu_custom_call.1} parent=1 // pred_check
      _
    $region219: #{tpu_custom_call.1} parent=1 // pred_check_branch
      %503 = sbr.rel (0) target = $region221
    $region220: #{tpu_custom_call.1} parent=1 // pred_region
      %504 = dma.done [#allocation9], 16
    $region221: #{tpu_custom_call.1} parent=1 // pred_fallthru
      _
    // Predicated region
    $region222: #{tpu_custom_call.1} parent=1 // pred_check
      _
    $region223: #{tpu_custom_call.1} parent=1 // pred_check_branch
      %506 = sbr.rel (0) target = $region225
    $region224: #{tpu_custom_call.1} parent=1 // pred_region
      %507 = dma.done [#allocation12], 16
    $region225: #{tpu_custom_call.1} parent=1 // pred_fallthru
      _
    // Predicated region
    $region226: #{tpu_custom_call.1} parent=1 // pred_check
      _
    $region227: #{tpu_custom_call.1} parent=1 // pred_check_branch
      %509 = sbr.rel (0) target = $region229
    $region228: #{tpu_custom_call.1} parent=1 // pred_region
      %510 = dma.done [#allocation12], 16
    $region229: #{tpu_custom_call.1} parent=1 // pred_fallthru
      _
    // Predicated region
    $region230: #{tpu_custom_call.1} parent=1 // pred_check
      _
    $region231: #{tpu_custom_call.1} parent=1 // pred_check_branch
      %512 = sbr.rel (0) target = $region233
    $region232: #{tpu_custom_call.1} parent=1 // pred_region
      %513 = dma.done [#allocation15], 16
    $region233: #{tpu_custom_call.1} parent=1 // pred_fallthru
      _
    // Predicated region
    $region234: #{tpu_custom_call.1} parent=1 // pred_check
      _
    $region235: #{tpu_custom_call.1} parent=1 // pred_check_branch
      %515 = sbr.rel (0) target = $region237
    $region236: #{tpu_custom_call.1} parent=1 // pred_region
      %516 = dma.done [#allocation15], 16
    $region237: #{tpu_custom_call.1} parent=1 // pred_fallthru
      _
    // Predicated region
    $region238: #{tpu_custom_call.1} parent=1 // pred_check
      _
    $region239: #{tpu_custom_call.1} parent=1 // pred_check_branch
      %518 = sbr.rel (0) target = $region241
    $region240: #{tpu_custom_call.1} parent=1 // pred_region
      %519 = dma.done [#allocation18], 32
    $region241: #{tpu_custom_call.1} parent=1 // pred_fallthru
      _
    // Predicated region
    $region242: #{tpu_custom_call.1} parent=1 // pred_check
      _
    $region243: #{tpu_custom_call.1} parent=1 // pred_check_branch
      %521 = sbr.rel (0) target = $region245
    $region244: #{tpu_custom_call.1} parent=1 // pred_region
      %522 = dma.done [#allocation18], 16
    $region245: #{tpu_custom_call.1} parent=1 // pred_fallthru
      _
    // Predicated region
    $region246: #{tpu_custom_call.1} parent=1 // pred_check
      _
    $region247: #{tpu_custom_call.1} parent=1 // pred_check_branch
      %524 = sbr.rel (0) target = $region249
    $region248: #{tpu_custom_call.1} parent=1 // pred_region
      %525 = dma.done [#allocation21], 256
    $region249: #{tpu_custom_call.1} parent=1 // pred_fallthru
      _
    // Predicated region
    $region250: #{tpu_custom_call.1} parent=1 // pred_check
      _
    $region251: #{tpu_custom_call.1} parent=1 // pred_check_branch
      %527 = sbr.rel (0) target = $region253
    $region252: #{tpu_custom_call.1} parent=1 // pred_region
      %528 = dma.done [#allocation21], 16
    $region253: #{tpu_custom_call.1} parent=1 // pred_fallthru
      _
    // Predicated region
    $region254: #{tpu_custom_call.1} parent=1 // pred_check
      _
    $region255: #{tpu_custom_call.1} parent=1 // pred_check_branch
      %530 = sbr.rel (0) target = $region257
    $region256: #{tpu_custom_call.1} parent=1 // pred_region
      %531 = dma.done [#allocation24], 16
    $region257: #{tpu_custom_call.1} parent=1 // pred_fallthru
      _
    // Predicated region
    $region258: #{tpu_custom_call.1} parent=1 // pred_check
      _
    $region259: #{tpu_custom_call.1} parent=1 // pred_check_branch
      %533 = sbr.rel (0) target = $region261
    $region260: #{tpu_custom_call.1} parent=1 // pred_region
      %534 = dma.done [#allocation24], 1536
    $region261: #{tpu_custom_call.1} parent=1 // pred_fallthru
      _
    // Predicated region
    $region262: #{tpu_custom_call.1} parent=1 // pred_check
      _
    $region263: #{tpu_custom_call.1} parent=1 // pred_check_branch
      %536 = sbr.rel (0) target = $region265
    $region264: #{tpu_custom_call.1} parent=1 // pred_region
      %537 = dma.done [#allocation27], 16
    $region265: #{tpu_custom_call.1} parent=1 // pred_fallthru
      _
    // Predicated region
    $region266: #{tpu_custom_call.1} parent=1 // pred_check
      _
    $region267: #{tpu_custom_call.1} parent=1 // pred_check_branch
      %539 = sbr.rel (0) target = $region269
    $region268: #{tpu_custom_call.1} parent=1 // pred_region
      %540 = dma.done [#allocation27], 16
    $region269: #{tpu_custom_call.1} parent=1 // pred_fallthru
      _
    // Predicated region
    $region270: #{tpu_custom_call.1} parent=1 // pred_check
      _
    $region271: #{tpu_custom_call.1} parent=1 // pred_check_branch
      %542 = sbr.rel (0) target = $region273
    $region272: #{tpu_custom_call.1} parent=1 // pred_region
      %543 = dma.done [#allocation30], 16
    $region273: #{tpu_custom_call.1} parent=1 // pred_fallthru
      _
    // Predicated region
    $region274: #{tpu_custom_call.1} parent=1 // pred_check
      _
    $region275: #{tpu_custom_call.1} parent=1 // pred_check_branch
      %545 = sbr.rel (0) target = $region277
    $region276: #{tpu_custom_call.1} parent=1 // pred_region
      %546 = dma.done [#allocation30], 16
    $region277: #{tpu_custom_call.1} parent=1 // pred_fallthru
      _
    // Predicated region
    $region278: #{tpu_custom_call.1} parent=1 // pred_check
      _
    $region279: #{tpu_custom_call.1} parent=1 // pred_check_branch
      %548 = sbr.rel (0) target = $region281
    $region280: #{tpu_custom_call.1} parent=1 // pred_region
      %549 = dma.done [#allocation33], 16
    $region281: #{tpu_custom_call.1} parent=1 // pred_fallthru
      _
    // Predicated region
    $region282: #{tpu_custom_call.1} parent=1 // pred_check
      _
    $region283: #{tpu_custom_call.1} parent=1 // pred_check_branch
      %551 = sbr.rel (0) target = $region285
    $region284: #{tpu_custom_call.1} parent=1 // pred_region
      %552 = dma.done [#allocation33], 512
    $region285: #{tpu_custom_call.1} parent=1 // pred_fallthru
      _
    // Predicated region
    $region286: #{tpu_custom_call.1} parent=1 // pred_check
      _
    $region287: #{tpu_custom_call.1} parent=1 // pred_check_branch
      %554 = sbr.rel (0) target = $region289
    $region288: #{tpu_custom_call.1} parent=1 // pred_region
      %555 = dma.done [#allocation36], 32
    $region289: #{tpu_custom_call.1} parent=1 // pred_fallthru
      _
    // Predicated region
    $region290: #{tpu_custom_call.1} parent=1 // pred_check
      _
    $region291: #{tpu_custom_call.1} parent=1 // pred_check_branch
      %557 = sbr.rel (0) target = $region293
    $region292: #{tpu_custom_call.1} parent=1 // pred_region
      %558 = dma.done [#allocation36], 32
    $region293: #{tpu_custom_call.1} parent=1 // pred_fallthru
      _
    // Predicated region
    $region294: #{tpu_custom_call.1} parent=1 // pred_check
      _
    $region295: #{tpu_custom_call.1} parent=1 // pred_check_branch
      %560 = sbr.rel (0) target = $region297
    $region296: #{tpu_custom_call.1} parent=1 // pred_region
      %561 = dma.done [#allocation39], 32
    $region297: #{tpu_custom_call.1} parent=1 // pred_fallthru
      _
    // Predicated region
    $region298: #{tpu_custom_call.1} parent=1 // pred_check
      _
    $region299: #{tpu_custom_call.1} parent=1 // pred_check_branch
      %563 = sbr.rel (0) target = $region301
    $region300: #{tpu_custom_call.1} parent=1 // pred_region
      %564 = dma.done [#allocation39], 32
    $region301: #{tpu_custom_call.1} parent=1 // pred_fallthru
      _
    // Predicated region
    $region302: #{tpu_custom_call.1} parent=1 // pred_check
      _
    $region303: #{tpu_custom_call.1} parent=1 // pred_check_branch
      %566 = sbr.rel (0) target = $region305
    $region304: #{tpu_custom_call.1} parent=1 // pred_region
      %567 = dma.done [#allocation42], 12288
    $region305: #{tpu_custom_call.1} parent=1 // pred_fallthru
      _
    // Predicated region
    $region306: #{tpu_custom_call.1} parent=1 // pred_check
      _
    $region307: #{tpu_custom_call.1} parent=1 // pred_check_branch
      %569 = sbr.rel (0) target = $region309
    $region308: #{tpu_custom_call.1} parent=1 // pred_region
      %570 = dma.done [#allocation42], 32
    $region309: #{tpu_custom_call.1} parent=1 // pred_fallthru
      _
    // Predicated region
    $region310: #{tpu_custom_call.1} parent=1 // pred_check
      _
    $region311: #{tpu_custom_call.1} parent=1 // pred_check_branch
      %572 = sbr.rel (0) target = $region313
    $region312: #{tpu_custom_call.1} parent=1 // pred_region
      %573 = dma.done [#allocation45], 16
    $region313: #{tpu_custom_call.1} parent=1 // pred_fallthru
      _
    // Predicated region
    $region314: #{tpu_custom_call.1} parent=1 // pred_check
      _
    $region315: #{tpu_custom_call.1} parent=1 // pred_check_branch
      %575 = sbr.rel (0) target = $region317
    $region316: #{tpu_custom_call.1} parent=1 // pred_region
      %576 = dma.done [#allocation45], 32
    $region317: #{tpu_custom_call.1} parent=1 // pred_fallthru
      _
    // Predicated region
    $region318: #{tpu_custom_call.1} parent=1 // pred_check
      _
    $region319: #{tpu_custom_call.1} parent=1 // pred_check_branch
      %578 = sbr.rel (0) target = $region321
    $region320: #{tpu_custom_call.1} parent=1 // pred_region
      %579 = dma.done [#allocation48], 2048
    $region321: #{tpu_custom_call.1} parent=1 // pred_fallthru
      _
    // Predicated region
    $region322: #{tpu_custom_call.1} parent=1 // pred_check
      _
    $region323: #{tpu_custom_call.1} parent=1 // pred_check_branch
      %581 = sbr.rel (0) target = $region325
    $region324: #{tpu_custom_call.1} parent=1 // pred_region
      %582 = dma.done [#allocation48], 16
    $region325: #{tpu_custom_call.1} parent=1 // pred_fallthru
      _
    // Predicated region
    $region326: #{tpu_custom_call.1} parent=1 // pred_check
      _
    $region327: #{tpu_custom_call.1} parent=1 // pred_check_branch
      %584 = sbr.rel (0) target = $region329
    $region328: #{tpu_custom_call.1} parent=1 // pred_region
      %585 = dma.done [#allocation51], 16
    $region329: #{tpu_custom_call.1} parent=1 // pred_fallthru
      _
    %v587 = vld [vmem:[%s1] sm:$0xf]
    %v588 = vld [vmem:[%s1 + $0x4] sm:$0xf]
    %v589 = vld [vmem:[%s1 + $0x8] sm:$0xf]
    %v590 = vld [vmem:[%s1 + $0xc] sm:$0xf]
    %v591 = vld [vmem:[%s95] sm:$0xf]
    %v592 = vld [vmem:[%s95 + $0x4] sm:$0xf]
    %v593 = vld [vmem:[%s95 + $0x8] sm:$0xf]
    %v594 = vld [vmem:[%s95 + $0xc] sm:$0xf]
    %v595 = vld [vmem:[%s95 + $0x10] sm:$0xf]
    %v596 = vld [vmem:[%s95 + $0x14] sm:$0xf]
    %v603 = vunpack.c.l.b16 %v591
    %v604 = vunpack.c.l.b16 %v592
    %v605 = vunpack.c.l.b16 %v593
    %v606 = vunpack.c.l.b16 %v594
    %v607 = vunpack.c.l.b16 %v595
    %v608 = vunpack.c.l.b16 %v596
    %v609 = vpack.c.b16 %v604, %v603
    %v610 = vpack.c.b16 %v606, %v605
    %v611 = vpack.c.b16 %v608, %v607
    %v616 = vunpack.c.l.b16 %v587
    %v617 = vunpack.c.l.b16 %v588
    %v618 = vunpack.c.l.b16 %v589
    %v619 = vunpack.c.l.b16 %v590
    %v620 = vpack.c.b16 %v617, %v616
    %v621 = vpack.c.b16 %v619, %v618
    %vm624 = vcmask 261120
    %v626 = vsel %vm624, %v609, 0
    %v629 = vsel %vm624, %v610, 0
    %v632 = vsel %vm624, %v611, 0
    %634 = vmatprep.subr.bf16.mxu0 0
    %635 = vmatpush1.bf16.msra.mxu0 0
    %636 = vmatprep.subr.bf16.mxu0 0
    %637 = vmatpush1.bf16.msra.mxu0 0
    %638 = vmatprep.subr.bf16.mxu0 0
    %639 = vmatpush1.bf16.msra.mxu0 0
    %640 = vmatprep.subr.bf16.mxu0 0
    %641 = vmatpush1.bf16.msra.mxu0 0
    %642 = vmatprep.subr.bf16.mxu0 0
    %643 = vmatpush1.bf16.msra.mxu0 0
    %644 = vmatprep.subr.bf16.mxu0 0
    %645 = vmatpush1.bf16.msra.mxu0 0
    %646 = vmatprep.subr.bf16.mxu0 0
    %647 = vmatpush1.bf16.msra.mxu0 %v621
    %648 = vmatprep.subr.bf16.mxu0 0
    %649 = vmatpush1.bf16.msra.mxu0 %v620
    %650 = vmatprep.subr.bf16.mxu0 0
    %651 = vmatpush2.bf16.msra.mxu0 0
    %652 = vmatprep.subr.bf16.mxu0 0
    %653 = vmatpush2.bf16.msra.mxu0 0
    %654 = vmatprep.subr.bf16.mxu0 0
    %655 = vmatpush2.bf16.msra.mxu0 0
    %656 = vmatprep.subr.bf16.mxu0 0
    %657 = vmatpush2.bf16.msra.mxu0 0
    %658 = vmatprep.subr.bf16.mxu0 0
    %659 = vmatpush2.bf16.msra.mxu0 0
    %660 = vmatprep.subr.bf16.mxu0 0
    %661 = vmatpush2.bf16.msra.mxu0 0
    %662 = vmatprep.subr.bf16.mxu0 0
    %663 = vmatpush2.bf16.msra.mxu0 0
    %664 = vmatprep.subr.bf16.mxu0 0
    %665 = vmatpush2.bf16.msra.mxu0 0
    %666 = vmatprep.mubr.bf16.mxu0 0
    %667 = vmatmul.mubr.bf16.gmra.mxu0 %v626
    %v668 = vpop.f32.mrf.mxu0
    %v669 = vadd.f32 0.0, %v668
    %v670 = vpop.f32.mrf.mxu0
    %v671 = vpop.f32.mrf.mxu0
    %v672 = vadd.f32 0.0, %v671
    %v673 = vpop.f32.mrf.mxu0
    %674 = vmatprep.mubr.bf16.mxu0 0
    %675 = vmatmul.mubr.bf16.gmra.mxu0 %v629
    %v676 = vpop.f32.mrf.mxu0
    %v677 = vadd.f32 0.0, %v676
    %v678 = vpop.f32.mrf.mxu0
    %v679 = vpop.f32.mrf.mxu0
    %v680 = vadd.f32 0.0, %v679
    %v681 = vpop.f32.mrf.mxu0
    %682 = vmatprep.mubr.bf16.mxu0 0
    %683 = vmatmul.mubr.bf16.gmra.mxu0 %v632
    %v684 = vpop.f32.mrf.mxu0
    %v685 = vadd.f32 0.0, %v684
    %v686 = vpop.f32.mrf.mxu0
    %v687 = vpop.f32.mrf.mxu0
    %v688 = vadd.f32 0.0, %v687
    %v689 = vpop.f32.mrf.mxu0
    %690 = vdwg.mxu0
    %v691 = vpack.c.bf16 %v672, %v669
    %v692 = vpack.c.bf16 %v680, %v677
    %v693 = vpack.c.bf16 %v688, %v685
    %v694 = vld [vmem:[%s99] sm:$0x3]
    %v695 = vld [vmem:[%s99] sm:$0xc]
    %v697 = vunpack.c.l.b16 %v695
    %v698 = vpack.c.b16 %v697, %v697
    %v699 = vrot.slane %v698, 2
    %vm700 = vcmask 31744
    %v702 = vsel %vm700, %v692, 0
    %vm704 = vcmask 1041408
    %v706 = vsel %vm704, %v699, 0
    %708 = vmatprep.subr.bf16.mxu0 0
    %709 = vmatpush1.bf16.msra.mxu0 0
    %710 = vmatprep.subr.bf16.mxu0 0
    %711 = vmatpush1.bf16.msra.mxu0 0
    %712 = vmatprep.subr.bf16.mxu0 0
    %713 = vmatpush1.bf16.msra.mxu0 0
    %714 = vmatprep.subr.bf16.mxu0 0
    %715 = vmatpush1.bf16.msra.mxu0 0
    %716 = vmatprep.subr.bf16.mxu0 0
    %717 = vmatpush1.bf16.msra.mxu0 0
    %718 = vmatprep.subr.bf16.mxu0 0
    %719 = vmatpush1.bf16.msra.mxu0 0
    %720 = vmatprep.subr.bf16.mxu0 0
    %721 = vmatpush1.bf16.msra.mxu0 0
    %722 = vmatprep.subr.bf16.mxu0 0
    %723 = vmatpush1.bf16.msra.mxu0 %v706
    %724 = vmatprep.subr.bf16.mxu0 0
    %725 = vmatpush2.bf16.msra.mxu0 0
    %726 = vmatprep.subr.bf16.mxu0 0
    %727 = vmatpush2.bf16.msra.mxu0 0
    %728 = vmatprep.subr.bf16.mxu0 0
    %729 = vmatpush2.bf16.msra.mxu0 0
    %730 = vmatprep.subr.bf16.mxu0 0
    %731 = vmatpush2.bf16.msra.mxu0 0
    %732 = vmatprep.subr.bf16.mxu0 0
    %733 = vmatpush2.bf16.msra.mxu0 0
    %734 = vmatprep.subr.bf16.mxu0 0
    %735 = vmatpush2.bf16.msra.mxu0 0
    %736 = vmatprep.subr.bf16.mxu0 0
    %737 = vmatpush2.bf16.msra.mxu0 0
    %738 = vmatprep.subr.bf16.mxu0 0
    %739 = vmatpush2.bf16.msra.mxu0 0
    %740 = vmatprep.mubr.bf16.mxu0 0
    %741 = vmatmul.mubr.bf16.gmra.mxu0 %v702
    %v742 = vpop.f32.mrf.mxu0
    %v743 = vadd.f32 0.0, %v742
    %v744 = vpop.f32.mrf.mxu0
    %v745 = vpop.f32.mrf.mxu0
    %v746 = vadd.f32 0.0, %v745
    %v747 = vpop.f32.mrf.mxu0
    %748 = vdwg.mxu0
    %v750 = vsel %vm700, %v691, 0
    %v753 = vsel %vm704, %v694, 0
    %755 = vmatprep.subr.bf16.mxu0 0
    %756 = vmatpush1.bf16.msra.mxu0 0
    %757 = vmatprep.subr.bf16.mxu0 0
    %758 = vmatpush1.bf16.msra.mxu0 0
    %759 = vmatprep.subr.bf16.mxu0 0
    %760 = vmatpush1.bf16.msra.mxu0 0
    %761 = vmatprep.subr.bf16.mxu0 0
    %762 = vmatpush1.bf16.msra.mxu0 0
    %763 = vmatprep.subr.bf16.mxu0 0
    %764 = vmatpush1.bf16.msra.mxu0 0
    %765 = vmatprep.subr.bf16.mxu0 0
    %766 = vmatpush1.bf16.msra.mxu0 0
    %767 = vmatprep.subr.bf16.mxu0 0
    %768 = vmatpush1.bf16.msra.mxu0 0
    %769 = vmatprep.subr.bf16.mxu0 0
    %770 = vmatpush1.bf16.msra.mxu0 %v753
    %771 = vmatprep.subr.bf16.mxu0 0
    %772 = vmatpush2.bf16.msra.mxu0 0
    %773 = vmatprep.subr.bf16.mxu0 0
    %774 = vmatpush2.bf16.msra.mxu0 0
    %775 = vmatprep.subr.bf16.mxu0 0
    %776 = vmatpush2.bf16.msra.mxu0 0
    %777 = vmatprep.subr.bf16.mxu0 0
    %778 = vmatpush2.bf16.msra.mxu0 0
    %779 = vmatprep.subr.bf16.mxu0 0
    %780 = vmatpush2.bf16.msra.mxu0 0
    %781 = vmatprep.subr.bf16.mxu0 0
    %782 = vmatpush2.bf16.msra.mxu0 0
    %783 = vmatprep.subr.bf16.mxu0 0
    %784 = vmatpush2.bf16.msra.mxu0 0
    %785 = vmatprep.subr.bf16.mxu0 0
    %786 = vmatpush2.bf16.msra.mxu0 0
    %787 = vmatprep.mubr.bf16.mxu0 0
    %788 = vmatmul.mubr.bf16.gmra.mxu0 %v750
    %v789 = vpop.f32.mrf.mxu0
    %v790 = vadd.f32 %v743, %v789
    %v791 = vpop.f32.mrf.mxu0
    %v792 = vpop.f32.mrf.mxu0
    %v793 = vadd.f32 %v746, %v792
    %v794 = vpop.f32.mrf.mxu0
    %795 = vdwg.mxu0
    %v796 = vld [vmem:[%s99 + $0x4] sm:$0x3]
    %v798 = vsel %vm700, %v693, 0
    %v801 = vsel %vm704, %v796, 0
    %803 = vmatprep.subr.bf16.mxu0 0
    %804 = vmatpush1.bf16.msra.mxu0 0
    %805 = vmatprep.subr.bf16.mxu0 0
    %806 = vmatpush1.bf16.msra.mxu0 0
    %807 = vmatprep.subr.bf16.mxu0 0
    %808 = vmatpush1.bf16.msra.mxu0 0
    %809 = vmatprep.subr.bf16.mxu0 0
    %810 = vmatpush1.bf16.msra.mxu0 0
    %811 = vmatprep.subr.bf16.mxu0 0
    %812 = vmatpush1.bf16.msra.mxu0 0
    %813 = vmatprep.subr.bf16.mxu0 0
    %814 = vmatpush1.bf16.msra.mxu0 0
    %815 = vmatprep.subr.bf16.mxu0 0
    %816 = vmatpush1.bf16.msra.mxu0 0
    %817 = vmatprep.subr.bf16.mxu0 0
    %818 = vmatpush1.bf16.msra.mxu0 %v801
    %819 = vmatprep.subr.bf16.mxu0 0
    %820 = vmatpush2.bf16.msra.mxu0 0
    %821 = vmatprep.subr.bf16.mxu0 0
    %822 = vmatpush2.bf16.msra.mxu0 0
    %823 = vmatprep.subr.bf16.mxu0 0
    %824 = vmatpush2.bf16.msra.mxu0 0
    %825 = vmatprep.subr.bf16.mxu0 0
    %826 = vmatpush2.bf16.msra.mxu0 0
    %827 = vmatprep.subr.bf16.mxu0 0
    %828 = vmatpush2.bf16.msra.mxu0 0
    %829 = vmatprep.subr.bf16.mxu0 0
    %830 = vmatpush2.bf16.msra.mxu0 0
    %831 = vmatprep.subr.bf16.mxu0 0
    %832 = vmatpush2.bf16.msra.mxu0 0
    %833 = vmatprep.subr.bf16.mxu0 0
    %834 = vmatpush2.bf16.msra.mxu0 0
    %835 = vmatprep.mubr.bf16.mxu0 0
    %836 = vmatmul.mubr.bf16.gmra.mxu0 %v798
    %v837 = vpop.f32.mrf.mxu0
    %v838 = vadd.f32 0.0, %v837
    %v839 = vpop.f32.mrf.mxu0
    %v840 = vpop.f32.mrf.mxu0
    %v841 = vadd.f32 0.0, %v840
    %v842 = vpop.f32.mrf.mxu0
    %843 = vdwg.mxu0
    %v844 = vadd.f32 %v790, %v838
    %v845 = vadd.f32 %v793, %v841
    %v846 = vld [vmem:[#allocation50] sm:$0x1]
    %v848 = vlaneseq
    %v849 = vshrl.u32 %v848, 7
    %v850 = vsub.s32 0, %v849
    %v851 = vrot.slane %v846, %v850
    %v853 = vmul.f32 %v844, %v851
    %v854 = vmul.f32 %v845, %v851
    %v855 = vld [vmem:[#allocation49] sm:$0x1]
    %v857 = vlaneseq
    %v858 = vshrl.u32 %v857, 7
    %v859 = vsub.s32 0, %v858
    %v860 = vrot.slane %v855, %v859
    %v862 = vadd.f32 %v853, %v860
    %v863 = vadd.f32 %v854, %v860
    %v864 = vmax.f32 %v862, 0.0
    %v865 = vmax.f32 %v863, 0.0
    %v866 = vld [vmem:[%s91] sm:$0xf]
    %v867 = vld [vmem:[%s91 + $0x4] sm:$0xf]
    %v868 = vld [vmem:[%s91 + $0x8] sm:$0xf]
    %v869 = vpack.c.bf16 %v865, %v864
    %v873 = vunpack.c.l.b16 %v866
    %v874 = vunpack.c.l.b16 %v867
    %v875 = vunpack.c.l.b16 %v868
    %v876 = vpack.c.b16 %v874, %v873
    %v877 = vpack.c.b16 %v875, %v875
    %vm878 = vcmask 130048
    %v880 = vsel %vm878, %v876, 0
    %v883 = vsel %vm878, %v877, 0
    %885 = vmatprep.subr.bf16.mxu0 0
    %886 = vmatpush1.bf16.msra.mxu0 0
    %887 = vmatprep.subr.bf16.mxu0 0
    %888 = vmatpush1.bf16.msra.mxu0 0
    %889 = vmatprep.subr.bf16.mxu0 0
    %890 = vmatpush1.bf16.msra.mxu0 0
    %891 = vmatprep.subr.bf16.mxu0 0
    %892 = vmatpush1.bf16.msra.mxu0 0
    %893 = vmatprep.subr.bf16.mxu0 0
    %894 = vmatpush1.bf16.msra.mxu0 0
    %895 = vmatprep.subr.bf16.mxu0 0
    %896 = vmatpush1.bf16.msra.mxu0 0
    %897 = vmatprep.subr.bf16.mxu0 0
    %898 = vmatpush1.bf16.msra.mxu0 0
    %899 = vmatprep.subr.bf16.mxu0 0
    %900 = vmatpush1.bf16.msra.mxu0 %v869
    %901 = vmatprep.subr.bf16.mxu0 0
    %902 = vmatpush2.bf16.msra.mxu0 0
    %903 = vmatprep.subr.bf16.mxu0 0
    %904 = vmatpush2.bf16.msra.mxu0 0
    %905 = vmatprep.subr.bf16.mxu0 0
    %906 = vmatpush2.bf16.msra.mxu0 0
    %907 = vmatprep.subr.bf16.mxu0 0
    %908 = vmatpush2.bf16.msra.mxu0 0
    %909 = vmatprep.subr.bf16.mxu0 0
    %910 = vmatpush2.bf16.msra.mxu0 0
    %911 = vmatprep.subr.bf16.mxu0 0
    %912 = vmatpush2.bf16.msra.mxu0 0
    %913 = vmatprep.subr.bf16.mxu0 0
    %914 = vmatpush2.bf16.msra.mxu0 0
    %915 = vmatprep.subr.bf16.mxu0 0
    %916 = vmatpush2.bf16.msra.mxu0 0
    %917 = vmatprep.mubr.bf16.mxu0 0
    %918 = vmatmul.mubr.bf16.gmra.mxu0 %v880
    %v919 = vpop.f32.mrf.mxu0
    %v920 = vadd.f32 0.0, %v919
    %v921 = vpop.f32.mrf.mxu0
    %v922 = vpop.f32.mrf.mxu0
    %v923 = vadd.f32 0.0, %v922
    %v924 = vpop.f32.mrf.mxu0
    %925 = vmatprep.mubr.bf16.mxu0 0
    %926 = vmatmul.mubr.bf16.gmra.mxu0 %v883
    %v927 = vpop.f32.mrf.mxu0
    %v928 = vadd.f32 0.0, %v927
    %v929 = vpop.f32.mrf.mxu0
    %v930 = vpop.f32.mrf.mxu0
    %v931 = vpop.f32.mrf.mxu0
    %932 = vdwg.mxu0
    %v933 = vmax.f32 %v920, %v923
    %v934 = vmax.f32 %v933, %v928
    %v935 = vpack.c.bf16 %v934, %v934
    %v936 = vld [vmem:[%s5] sm:$0xf]
    %v937 = vld [vmem:[%s5 + $0x4] sm:$0xf]
    %v938 = vld [vmem:[%s5 + $0x8] sm:$0xf]
    %v942 = vunpack.c.l.b16 %v936
    %v943 = vunpack.c.l.b16 %v937
    %v944 = vunpack.c.l.b16 %v938
    %v945 = vpack.c.b16 %v943, %v942
    %v946 = vpack.c.b16 %v944, %v944
    %vm947 = vcmask 64512
    %v949 = vsel %vm947, %v945, 0
    %v952 = vsel %vm947, %v946, 0
    %vm954 = vcmask 1043456
    %v956 = vsel %vm954, %v935, 0
    %958 = vmatprep.subr.bf16.mxu0 0
    %959 = vmatpush1.bf16.msra.mxu0 0
    %960 = vmatprep.subr.bf16.mxu0 0
    %961 = vmatpush1.bf16.msra.mxu0 0
    %962 = vmatprep.subr.bf16.mxu0 0
    %963 = vmatpush1.bf16.msra.mxu0 0
    %964 = vmatprep.subr.bf16.mxu0 0
    %965 = vmatpush1.bf16.msra.mxu0 0
    %966 = vmatprep.subr.bf16.mxu0 0
    %967 = vmatpush1.bf16.msra.mxu0 0
    %968 = vmatprep.subr.bf16.mxu0 0
    %969 = vmatpush1.bf16.msra.mxu0 0
    %970 = vmatprep.subr.bf16.mxu0 0
    %971 = vmatpush1.bf16.msra.mxu0 0
    %972 = vmatprep.subr.bf16.mxu0 0
    %973 = vmatpush1.bf16.msra.mxu0 %v956
    %974 = vmatprep.subr.bf16.mxu0 0
    %975 = vmatpush2.bf16.msra.mxu0 0
    %976 = vmatprep.subr.bf16.mxu0 0
    %977 = vmatpush2.bf16.msra.mxu0 0
    %978 = vmatprep.subr.bf16.mxu0 0
    %979 = vmatpush2.bf16.msra.mxu0 0
    %980 = vmatprep.subr.bf16.mxu0 0
    %981 = vmatpush2.bf16.msra.mxu0 0
    %982 = vmatprep.subr.bf16.mxu0 0
    %983 = vmatpush2.bf16.msra.mxu0 0
    %984 = vmatprep.subr.bf16.mxu0 0
    %985 = vmatpush2.bf16.msra.mxu0 0
    %986 = vmatprep.subr.bf16.mxu0 0
    %987 = vmatpush2.bf16.msra.mxu0 0
    %988 = vmatprep.subr.bf16.mxu0 0
    %989 = vmatpush2.bf16.msra.mxu0 0
    %990 = vmatprep.mubr.bf16.mxu0 0
    %991 = vmatmul.mubr.bf16.gmra.mxu0 %v949
    %v992 = vpop.f32.mrf.mxu0
    %v993 = vadd.f32 0.0, %v992
    %v994 = vpop.f32.mrf.mxu0
    %v995 = vpop.f32.mrf.mxu0
    %v996 = vadd.f32 0.0, %v995
    %v997 = vpop.f32.mrf.mxu0
    %998 = vmatprep.mubr.bf16.mxu0 0
    %999 = vmatmul.mubr.bf16.gmra.mxu0 %v952
    %v1000 = vpop.f32.mrf.mxu0
    %v1001 = vadd.f32 0.0, %v1000
    %v1002 = vpop.f32.mrf.mxu0
    %v1003 = vpop.f32.mrf.mxu0
    %v1004 = vpop.f32.mrf.mxu0
    %1005 = vdwg.mxu0
    %v1006 = vpack.c.bf16 %v996, %v993
    %v1007 = vpack.c.bf16 %v1001, %v1001
    %v1008 = vld [vmem:[%s9] sm:$0xf]
    %v1009 = vld [vmem:[%s9 + $0x4] sm:$0xf]
    %v1010 = vld [vmem:[%s9 + $0x8] sm:$0xf]
    %v1011 = vld [vmem:[%s9 + $0xc] sm:$0xf]
    %v1012 = vld [vmem:[%s9 + $0x10] sm:$0xf]
    %v1013 = vld [vmem:[%s9 + $0x14] sm:$0xf]
    %v1014 = vld [vmem:[%s9 + $0x18] sm:$0xf]
    %v1015 = vld [vmem:[%s9 + $0x1c] sm:$0xf]
    %v1017 = vrot.slane %v1006, 4
    %v1022 = vunpack.c.l.b16 %v1012
    %v1023 = vunpack.c.l.b16 %v1013
    %v1024 = vunpack.c.l.b16 %v1014
    %v1025 = vunpack.c.l.b16 %v1015
    %v1026 = vpack.c.b16 %v1023, %v1022
    %v1027 = vpack.c.b16 %v1025, %v1024
    %v1031 = vsel %vm624, %v1017, 0
    %1033 = vmatprep.subr.bf16.mxu0 0
    %1034 = vmatpush1.bf16.msra.mxu0 0
    %1035 = vmatprep.subr.bf16.mxu0 0
    %1036 = vmatpush1.bf16.msra.mxu0 0
    %1037 = vmatprep.subr.bf16.mxu0 0
    %1038 = vmatpush1.bf16.msra.mxu0 0
    %1039 = vmatprep.subr.bf16.mxu0 0
    %1040 = vmatpush1.bf16.msra.mxu0 0
    %1041 = vmatprep.subr.bf16.mxu0 0
    %1042 = vmatpush1.bf16.msra.mxu0 0
    %1043 = vmatprep.subr.bf16.mxu0 0
    %1044 = vmatpush1.bf16.msra.mxu0 0
    %1045 = vmatprep.subr.bf16.mxu0 0
    %1046 = vmatpush1.bf16.msra.mxu0 %v1027
    %1047 = vmatprep.subr.bf16.mxu0 0
    %1048 = vmatpush1.bf16.msra.mxu0 %v1026
    %1049 = vmatprep.subr.bf16.mxu0 0
    %1050 = vmatpush2.bf16.msra.mxu0 0
    %1051 = vmatprep.subr.bf16.mxu0 0
    %1052 = vmatpush2.bf16.msra.mxu0 0
    %1053 = vmatprep.subr.bf16.mxu0 0
    %1054 = vmatpush2.bf16.msra.mxu0 0
    %1055 = vmatprep.subr.bf16.mxu0 0
    %1056 = vmatpush2.bf16.msra.mxu0 0
    %1057 = vmatprep.subr.bf16.mxu0 0
    %1058 = vmatpush2.bf16.msra.mxu0 0
    %1059 = vmatprep.subr.bf16.mxu0 0
    %1060 = vmatpush2.bf16.msra.mxu0 0
    %1061 = vmatprep.subr.bf16.mxu0 0
    %1062 = vmatpush2.bf16.msra.mxu0 0
    %1063 = vmatprep.subr.bf16.mxu0 0
    %1064 = vmatpush2.bf16.msra.mxu0 0
    %1065 = vmatprep.mubr.bf16.mxu0 0
    %1066 = vmatmul.mubr.bf16.gmra.mxu0 %v1031
    %v1067 = vpop.f32.mrf.mxu0
    %v1068 = vadd.f32 0.0, %v1067
    %v1069 = vpop.f32.mrf.mxu0
    %v1070 = vpop.f32.mrf.mxu0
    %v1071 = vpop.f32.mrf.mxu0
    %1072 = vdwg.mxu0
    %v1077 = vunpack.c.l.b16 %v1008
    %v1078 = vunpack.c.l.b16 %v1009
    %v1079 = vunpack.c.l.b16 %v1010
    %v1080 = vunpack.c.l.b16 %v1011
    %v1081 = vpack.c.b16 %v1078, %v1077
    %v1082 = vpack.c.b16 %v1080, %v1079
    %v1086 = vsel %vm624, %v1006, 0
    %1088 = vmatprep.subr.bf16.mxu0 0
    %1089 = vmatpush1.bf16.msra.mxu0 0
    %1090 = vmatprep.subr.bf16.mxu0 0
    %1091 = vmatpush1.bf16.msra.mxu0 0
    %1092 = vmatprep.subr.bf16.mxu0 0
    %1093 = vmatpush1.bf16.msra.mxu0 0
    %1094 = vmatprep.subr.bf16.mxu0 0
    %1095 = vmatpush1.bf16.msra.mxu0 0
    %1096 = vmatprep.subr.bf16.mxu0 0
    %1097 = vmatpush1.bf16.msra.mxu0 0
    %1098 = vmatprep.subr.bf16.mxu0 0
    %1099 = vmatpush1.bf16.msra.mxu0 0
    %1100 = vmatprep.subr.bf16.mxu0 0
    %1101 = vmatpush1.bf16.msra.mxu0 %v1082
    %1102 = vmatprep.subr.bf16.mxu0 0
    %1103 = vmatpush1.bf16.msra.mxu0 %v1081
    %1104 = vmatprep.subr.bf16.mxu0 0
    %1105 = vmatpush2.bf16.msra.mxu0 0
    %1106 = vmatprep.subr.bf16.mxu0 0
    %1107 = vmatpush2.bf16.msra.mxu0 0
    %1108 = vmatprep.subr.bf16.mxu0 0
    %1109 = vmatpush2.bf16.msra.mxu0 0
    %1110 = vmatprep.subr.bf16.mxu0 0
    %1111 = vmatpush2.bf16.msra.mxu0 0
    %1112 = vmatprep.subr.bf16.mxu0 0
    %1113 = vmatpush2.bf16.msra.mxu0 0
    %1114 = vmatprep.subr.bf16.mxu0 0
    %1115 = vmatpush2.bf16.msra.mxu0 0
    %1116 = vmatprep.subr.bf16.mxu0 0
    %1117 = vmatpush2.bf16.msra.mxu0 0
    %1118 = vmatprep.subr.bf16.mxu0 0
    %1119 = vmatpush2.bf16.msra.mxu0 0
    %1120 = vmatprep.mubr.bf16.mxu0 0
    %1121 = vmatmul.mubr.bf16.gmra.mxu0 %v1086
    %v1122 = vpop.f32.mrf.mxu0
    %v1123 = vadd.f32 %v1068, %v1122
    %v1124 = vpop.f32.mrf.mxu0
    %v1125 = vpop.f32.mrf.mxu0
    %v1126 = vpop.f32.mrf.mxu0
    %1127 = vdwg.mxu0
    %v1128 = vld [vmem:[%s9 + $0x20] sm:$0xf]
    %v1129 = vld [vmem:[%s9 + $0x24] sm:$0xf]
    %v1130 = vld [vmem:[%s9 + $0x28] sm:$0xf]
    %v1131 = vld [vmem:[%s9 + $0x2c] sm:$0xf]
    %v1136 = vunpack.c.l.b16 %v1128
    %v1137 = vunpack.c.l.b16 %v1129
    %v1138 = vunpack.c.l.b16 %v1130
    %v1139 = vunpack.c.l.b16 %v1131
    %v1140 = vpack.c.b16 %v1137, %v1136
    %v1141 = vpack.c.b16 %v1139, %v1138
    %v1145 = vsel %vm624, %v1007, 0
    %1147 = vmatprep.subr.bf16.mxu0 0
    %1148 = vmatpush1.bf16.msra.mxu0 0
    %1149 = vmatprep.subr.bf16.mxu0 0
    %1150 = vmatpush1.bf16.msra.mxu0 0
    %1151 = vmatprep.subr.bf16.mxu0 0
    %1152 = vmatpush1.bf16.msra.mxu0 0
    %1153 = vmatprep.subr.bf16.mxu0 0
    %1154 = vmatpush1.bf16.msra.mxu0 0
    %1155 = vmatprep.subr.bf16.mxu0 0
    %1156 = vmatpush1.bf16.msra.mxu0 0
    %1157 = vmatprep.subr.bf16.mxu0 0
    %1158 = vmatpush1.bf16.msra.mxu0 0
    %1159 = vmatprep.subr.bf16.mxu0 0
    %1160 = vmatpush1.bf16.msra.mxu0 %v1141
    %1161 = vmatprep.subr.bf16.mxu0 0
    %1162 = vmatpush1.bf16.msra.mxu0 %v1140
    %1163 = vmatprep.subr.bf16.mxu0 0
    %1164 = vmatpush2.bf16.msra.mxu0 0
    %1165 = vmatprep.subr.bf16.mxu0 0
    %1166 = vmatpush2.bf16.msra.mxu0 0
    %1167 = vmatprep.subr.bf16.mxu0 0
    %1168 = vmatpush2.bf16.msra.mxu0 0
    %1169 = vmatprep.subr.bf16.mxu0 0
    %1170 = vmatpush2.bf16.msra.mxu0 0
    %1171 = vmatprep.subr.bf16.mxu0 0
    %1172 = vmatpush2.bf16.msra.mxu0 0
    %1173 = vmatprep.subr.bf16.mxu0 0
    %1174 = vmatpush2.bf16.msra.mxu0 0
    %1175 = vmatprep.subr.bf16.mxu0 0
    %1176 = vmatpush2.bf16.msra.mxu0 0
    %1177 = vmatprep.subr.bf16.mxu0 0
    %1178 = vmatpush2.bf16.msra.mxu0 0
    %1179 = vmatprep.mubr.bf16.mxu0 0
    %1180 = vmatmul.mubr.bf16.gmra.mxu0 %v1145
    %v1181 = vpop.f32.mrf.mxu0
    %v1182 = vadd.f32 0.0, %v1181
    %v1183 = vpop.f32.mrf.mxu0
    %v1184 = vpop.f32.mrf.mxu0
    %v1185 = vpop.f32.mrf.mxu0
    %1186 = vdwg.mxu0
    %v1187 = vadd.f32 %v1123, %v1182
    %v1188 = vld [vmem:[#allocation5] sm:$0x1]
    %v1190 = vlaneseq
    %v1191 = vshrl.u32 %v1190, 7
    %v1192 = vsub.s32 0, %v1191
    %v1193 = vrot.slane %v1188, %v1192
    %v1195 = vmul.f32 %v1187, %v1193
    %v1196 = vld [vmem:[#allocation2] sm:$0x1]
    %v1198 = vlaneseq
    %v1199 = vshrl.u32 %v1198, 7
    %v1200 = vsub.s32 0, %v1199
    %v1201 = vrot.slane %v1196, %v1200
    %v1203 = vadd.f32 %v1195, %v1201
    %v1204 = vmax.f32 %v1203, 0.0
    %v1205 = vpack.c.bf16 %v1204, %v1204
    %v1206 = vld [vmem:[%s13] sm:$0xf]
    %v1207 = vld [vmem:[%s13 + $0x4] sm:$0xf]
    %v1208 = vld [vmem:[%s13 + $0x8] sm:$0xf]
    %v1212 = vunpack.c.l.b16 %v1206
    %v1213 = vunpack.c.l.b16 %v1207
    %v1214 = vunpack.c.l.b16 %v1208
    %v1215 = vpack.c.b16 %v1213, %v1212
    %v1216 = vpack.c.b16 %v1214, %v1214
    %v1218 = vsel %vm947, %v1215, 0
    %v1221 = vsel %vm947, %v1216, 0
    %v1224 = vsel %vm954, %v1205, 0
    %1226 = vmatprep.subr.bf16.mxu0 0
    %1227 = vmatpush1.bf16.msra.mxu0 0
    %1228 = vmatprep.subr.bf16.mxu0 0
    %1229 = vmatpush1.bf16.msra.mxu0 0
    %1230 = vmatprep.subr.bf16.mxu0 0
    %1231 = vmatpush1.bf16.msra.mxu0 0
    %1232 = vmatprep.subr.bf16.mxu0 0
    %1233 = vmatpush1.bf16.msra.mxu0 0
    %1234 = vmatprep.subr.bf16.mxu0 0
    %1235 = vmatpush1.bf16.msra.mxu0 0
    %1236 = vmatprep.subr.bf16.mxu0 0
    %1237 = vmatpush1.bf16.msra.mxu0 0
    %1238 = vmatprep.subr.bf16.mxu0 0
    %1239 = vmatpush1.bf16.msra.mxu0 0
    %1240 = vmatprep.subr.bf16.mxu0 0
    %1241 = vmatpush1.bf16.msra.mxu0 %v1224
    %1242 = vmatprep.subr.bf16.mxu0 0
    %1243 = vmatpush2.bf16.msra.mxu0 0
    %1244 = vmatprep.subr.bf16.mxu0 0
    %1245 = vmatpush2.bf16.msra.mxu0 0
    %1246 = vmatprep.subr.bf16.mxu0 0
    %1247 = vmatpush2.bf16.msra.mxu0 0
    %1248 = vmatprep.subr.bf16.mxu0 0
    %1249 = vmatpush2.bf16.msra.mxu0 0
    %1250 = vmatprep.subr.bf16.mxu0 0
    %1251 = vmatpush2.bf16.msra.mxu0 0
    %1252 = vmatprep.subr.bf16.mxu0 0
    %1253 = vmatpush2.bf16.msra.mxu0 0
    %1254 = vmatprep.subr.bf16.mxu0 0
    %1255 = vmatpush2.bf16.msra.mxu0 0
    %1256 = vmatprep.subr.bf16.mxu0 0
    %1257 = vmatpush2.bf16.msra.mxu0 0
    %1258 = vmatprep.mubr.bf16.mxu0 0
    %1259 = vmatmul.mubr.bf16.gmra.mxu0 %v1218
    %v1260 = vpop.f32.mrf.mxu0
    %v1261 = vadd.f32 0.0, %v1260
    %v1262 = vpop.f32.mrf.mxu0
    %v1263 = vpop.f32.mrf.mxu0
    %v1264 = vadd.f32 0.0, %v1263
    %v1265 = vpop.f32.mrf.mxu0
    %1266 = vmatprep.mubr.bf16.mxu0 0
    %1267 = vmatmul.mubr.bf16.gmra.mxu0 %v1221
    %v1268 = vpop.f32.mrf.mxu0
    %v1269 = vadd.f32 0.0, %v1268
    %v1270 = vpop.f32.mrf.mxu0
    %v1271 = vpop.f32.mrf.mxu0
    %v1272 = vpop.f32.mrf.mxu0
    %1273 = vdwg.mxu0
    %v1274 = vpack.c.bf16 %v1264, %v1261
    %v1275 = vpack.c.bf16 %v1269, %v1269
    %v1276 = vld [vmem:[%s17] sm:$0xf]
    %v1277 = vld [vmem:[%s17 + $0x4] sm:$0xf]
    %v1278 = vld [vmem:[%s17 + $0x8] sm:$0xf]
    %v1279 = vld [vmem:[%s17 + $0xc] sm:$0xf]
    %v1280 = vld [vmem:[%s17 + $0x10] sm:$0xf]
    %v1281 = vld [vmem:[%s17 + $0x14] sm:$0xf]
    %v1282 = vld [vmem:[%s17 + $0x18] sm:$0xf]
    %v1283 = vld [vmem:[%s17 + $0x1c] sm:$0xf]
    %v1285 = vrot.slane %v1274, 4
    %v1290 = vunpack.c.l.b16 %v1280
    %v1291 = vunpack.c.l.b16 %v1281
    %v1292 = vunpack.c.l.b16 %v1282
    %v1293 = vunpack.c.l.b16 %v1283
    %v1294 = vpack.c.b16 %v1291, %v1290
    %v1295 = vpack.c.b16 %v1293, %v1292
    %v1299 = vsel %vm624, %v1285, 0
    %1301 = vmatprep.subr.bf16.mxu0 0
    %1302 = vmatpush1.bf16.msra.mxu0 0
    %1303 = vmatprep.subr.bf16.mxu0 0
    %1304 = vmatpush1.bf16.msra.mxu0 0
    %1305 = vmatprep.subr.bf16.mxu0 0
    %1306 = vmatpush1.bf16.msra.mxu0 0
    %1307 = vmatprep.subr.bf16.mxu0 0
    %1308 = vmatpush1.bf16.msra.mxu0 0
    %1309 = vmatprep.subr.bf16.mxu0 0
    %1310 = vmatpush1.bf16.msra.mxu0 0
    %1311 = vmatprep.subr.bf16.mxu0 0
    %1312 = vmatpush1.bf16.msra.mxu0 0
    %1313 = vmatprep.subr.bf16.mxu0 0
    %1314 = vmatpush1.bf16.msra.mxu0 %v1295
    %1315 = vmatprep.subr.bf16.mxu0 0
    %1316 = vmatpush1.bf16.msra.mxu0 %v1294
    %1317 = vmatprep.subr.bf16.mxu0 0
    %1318 = vmatpush2.bf16.msra.mxu0 0
    %1319 = vmatprep.subr.bf16.mxu0 0
    %1320 = vmatpush2.bf16.msra.mxu0 0
    %1321 = vmatprep.subr.bf16.mxu0 0
    %1322 = vmatpush2.bf16.msra.mxu0 0
    %1323 = vmatprep.subr.bf16.mxu0 0
    %1324 = vmatpush2.bf16.msra.mxu0 0
    %1325 = vmatprep.subr.bf16.mxu0 0
    %1326 = vmatpush2.bf16.msra.mxu0 0
    %1327 = vmatprep.subr.bf16.mxu0 0
    %1328 = vmatpush2.bf16.msra.mxu0 0
    %1329 = vmatprep.subr.bf16.mxu0 0
    %1330 = vmatpush2.bf16.msra.mxu0 0
    %1331 = vmatprep.subr.bf16.mxu0 0
    %1332 = vmatpush2.bf16.msra.mxu0 0
    %1333 = vmatprep.mubr.bf16.mxu0 0
    %1334 = vmatmul.mubr.bf16.gmra.mxu0 %v1299
    %v1335 = vpop.f32.mrf.mxu0
    %v1336 = vadd.f32 0.0, %v1335
    %v1337 = vpop.f32.mrf.mxu0
    %v1338 = vpop.f32.mrf.mxu0
    %v1339 = vpop.f32.mrf.mxu0
    %1340 = vdwg.mxu0
    %v1345 = vunpack.c.l.b16 %v1276
    %v1346 = vunpack.c.l.b16 %v1277
    %v1347 = vunpack.c.l.b16 %v1278
    %v1348 = vunpack.c.l.b16 %v1279
    %v1349 = vpack.c.b16 %v1346, %v1345
    %v1350 = vpack.c.b16 %v1348, %v1347
    %v1354 = vsel %vm624, %v1274, 0
    %1356 = vmatprep.subr.bf16.mxu0 0
    %1357 = vmatpush1.bf16.msra.mxu0 0
    %1358 = vmatprep.subr.bf16.mxu0 0
    %1359 = vmatpush1.bf16.msra.mxu0 0
    %1360 = vmatprep.subr.bf16.mxu0 0
    %1361 = vmatpush1.bf16.msra.mxu0 0
    %1362 = vmatprep.subr.bf16.mxu0 0
    %1363 = vmatpush1.bf16.msra.mxu0 0
    %1364 = vmatprep.subr.bf16.mxu0 0
    %1365 = vmatpush1.bf16.msra.mxu0 0
    %1366 = vmatprep.subr.bf16.mxu0 0
    %1367 = vmatpush1.bf16.msra.mxu0 0
    %1368 = vmatprep.subr.bf16.mxu0 0
    %1369 = vmatpush1.bf16.msra.mxu0 %v1350
    %1370 = vmatprep.subr.bf16.mxu0 0
    %1371 = vmatpush1.bf16.msra.mxu0 %v1349
    %1372 = vmatprep.subr.bf16.mxu0 0
    %1373 = vmatpush2.bf16.msra.mxu0 0
    %1374 = vmatprep.subr.bf16.mxu0 0
    %1375 = vmatpush2.bf16.msra.mxu0 0
    %1376 = vmatprep.subr.bf16.mxu0 0
    %1377 = vmatpush2.bf16.msra.mxu0 0
    %1378 = vmatprep.subr.bf16.mxu0 0
    %1379 = vmatpush2.bf16.msra.mxu0 0
    %1380 = vmatprep.subr.bf16.mxu0 0
    %1381 = vmatpush2.bf16.msra.mxu0 0
    %1382 = vmatprep.subr.bf16.mxu0 0
    %1383 = vmatpush2.bf16.msra.mxu0 0
    %1384 = vmatprep.subr.bf16.mxu0 0
    %1385 = vmatpush2.bf16.msra.mxu0 0
    %1386 = vmatprep.subr.bf16.mxu0 0
    %1387 = vmatpush2.bf16.msra.mxu0 0
    %1388 = vmatprep.mubr.bf16.mxu0 0
    %1389 = vmatmul.mubr.bf16.gmra.mxu0 %v1354
    %v1390 = vpop.f32.mrf.mxu0
    %v1391 = vadd.f32 %v1336, %v1390
    %v1392 = vpop.f32.mrf.mxu0
    %v1393 = vpop.f32.mrf.mxu0
    %v1394 = vpop.f32.mrf.mxu0
    %1395 = vdwg.mxu0
    %v1396 = vld [vmem:[%s17 + $0x20] sm:$0xf]
    %v1397 = vld [vmem:[%s17 + $0x24] sm:$0xf]
    %v1398 = vld [vmem:[%s17 + $0x28] sm:$0xf]
    %v1399 = vld [vmem:[%s17 + $0x2c] sm:$0xf]
    %v1404 = vunpack.c.l.b16 %v1396
    %v1405 = vunpack.c.l.b16 %v1397
    %v1406 = vunpack.c.l.b16 %v1398
    %v1407 = vunpack.c.l.b16 %v1399
    %v1408 = vpack.c.b16 %v1405, %v1404
    %v1409 = vpack.c.b16 %v1407, %v1406
    %v1413 = vsel %vm624, %v1275, 0
    %1415 = vmatprep.subr.bf16.mxu0 0
    %1416 = vmatpush1.bf16.msra.mxu0 0
    %1417 = vmatprep.subr.bf16.mxu0 0
    %1418 = vmatpush1.bf16.msra.mxu0 0
    %1419 = vmatprep.subr.bf16.mxu0 0
    %1420 = vmatpush1.bf16.msra.mxu0 0
    %1421 = vmatprep.subr.bf16.mxu0 0
    %1422 = vmatpush1.bf16.msra.mxu0 0
    %1423 = vmatprep.subr.bf16.mxu0 0
    %1424 = vmatpush1.bf16.msra.mxu0 0
    %1425 = vmatprep.subr.bf16.mxu0 0
    %1426 = vmatpush1.bf16.msra.mxu0 0
    %1427 = vmatprep.subr.bf16.mxu0 0
    %1428 = vmatpush1.bf16.msra.mxu0 %v1409
    %1429 = vmatprep.subr.bf16.mxu0 0
    %1430 = vmatpush1.bf16.msra.mxu0 %v1408
    %1431 = vmatprep.subr.bf16.mxu0 0
    %1432 = vmatpush2.bf16.msra.mxu0 0
    %1433 = vmatprep.subr.bf16.mxu0 0
    %1434 = vmatpush2.bf16.msra.mxu0 0
    %1435 = vmatprep.subr.bf16.mxu0 0
    %1436 = vmatpush2.bf16.msra.mxu0 0
    %1437 = vmatprep.subr.bf16.mxu0 0
    %1438 = vmatpush2.bf16.msra.mxu0 0
    %1439 = vmatprep.subr.bf16.mxu0 0
    %1440 = vmatpush2.bf16.msra.mxu0 0
    %1441 = vmatprep.subr.bf16.mxu0 0
    %1442 = vmatpush2.bf16.msra.mxu0 0
    %1443 = vmatprep.subr.bf16.mxu0 0
    %1444 = vmatpush2.bf16.msra.mxu0 0
    %1445 = vmatprep.subr.bf16.mxu0 0
    %1446 = vmatpush2.bf16.msra.mxu0 0
    %1447 = vmatprep.mubr.bf16.mxu0 0
    %1448 = vmatmul.mubr.bf16.gmra.mxu0 %v1413
    %v1449 = vpop.f32.mrf.mxu0
    %v1450 = vadd.f32 0.0, %v1449
    %v1451 = vpop.f32.mrf.mxu0
    %v1452 = vpop.f32.mrf.mxu0
    %v1453 = vpop.f32.mrf.mxu0
    %1454 = vdwg.mxu0
    %v1455 = vadd.f32 %v1391, %v1450
    %v1456 = vld [vmem:[#allocation8] sm:$0x1]
    %v1458 = vlaneseq
    %v1459 = vshrl.u32 %v1458, 7
    %v1460 = vsub.s32 0, %v1459
    %v1461 = vrot.slane %v1456, %v1460
    %v1463 = vmul.f32 %v1455, %v1461
    %v1464 = vld [vmem:[#allocation7] sm:$0x1]
    %v1466 = vlaneseq
    %v1467 = vshrl.u32 %v1466, 7
    %v1468 = vsub.s32 0, %v1467
    %v1469 = vrot.slane %v1464, %v1468
    %v1471 = vadd.f32 %v1463, %v1469
    %v1472 = vadd.f32 %v1471, %v934
    %v1473 = vmax.f32 %v1472, 0.0
    %v1474 = vpack.c.bf16 %v1473, %v1473
    %v1475 = vld [vmem:[%s21] sm:$0xf]
    %v1476 = vld [vmem:[%s21 + $0x4] sm:$0x3]
    %v1479 = vunpack.c.l.b16 %v1475
    %v1480 = vunpack.c.l.b16 %v1476
    %v1481 = vpack.c.b16 %v1480, %v1479
    %v1483 = vsel %vm947, %v1481, 0
    %v1486 = vsel %vm954, %v1474, 0
    %1488 = vmatprep.subr.bf16.mxu0 0
    %1489 = vmatpush1.bf16.msra.mxu0 0
    %1490 = vmatprep.subr.bf16.mxu0 0
    %1491 = vmatpush1.bf16.msra.mxu0 0
    %1492 = vmatprep.subr.bf16.mxu0 0
    %1493 = vmatpush1.bf16.msra.mxu0 0
    %1494 = vmatprep.subr.bf16.mxu0 0
    %1495 = vmatpush1.bf16.msra.mxu0 0
    %1496 = vmatprep.subr.bf16.mxu0 0
    %1497 = vmatpush1.bf16.msra.mxu0 0
    %1498 = vmatprep.subr.bf16.mxu0 0
    %1499 = vmatpush1.bf16.msra.mxu0 0
    %1500 = vmatprep.subr.bf16.mxu0 0
    %1501 = vmatpush1.bf16.msra.mxu0 0
    %1502 = vmatprep.subr.bf16.mxu0 0
    %1503 = vmatpush1.bf16.msra.mxu0 %v1486
    %1504 = vmatprep.subr.bf16.mxu0 0
    %1505 = vmatpush2.bf16.msra.mxu0 0
    %1506 = vmatprep.subr.bf16.mxu0 0
    %1507 = vmatpush2.bf16.msra.mxu0 0
    %1508 = vmatprep.subr.bf16.mxu0 0
    %1509 = vmatpush2.bf16.msra.mxu0 0
    %1510 = vmatprep.subr.bf16.mxu0 0
    %1511 = vmatpush2.bf16.msra.mxu0 0
    %1512 = vmatprep.subr.bf16.mxu0 0
    %1513 = vmatpush2.bf16.msra.mxu0 0
    %1514 = vmatprep.subr.bf16.mxu0 0
    %1515 = vmatpush2.bf16.msra.mxu0 0
    %1516 = vmatprep.subr.bf16.mxu0 0
    %1517 = vmatpush2.bf16.msra.mxu0 0
    %1518 = vmatprep.subr.bf16.mxu0 0
    %1519 = vmatpush2.bf16.msra.mxu0 0
    %1520 = vmatprep.mubr.bf16.mxu0 0
    %1521 = vmatmul.mubr.bf16.gmra.mxu0 %v1483
    %v1522 = vpop.f32.mrf.mxu0
    %v1523 = vadd.f32 0.0, %v1522
    %v1524 = vpop.f32.mrf.mxu0
    %v1525 = vpop.f32.mrf.mxu0
    %v1526 = vadd.f32 0.0, %v1525
    %v1527 = vpop.f32.mrf.mxu0
    %1528 = vdwg.mxu0
    %v1529 = vpack.c.bf16 %v1526, %v1523
    %v1530 = vld [vmem:[%s25] sm:$0xf]
    %v1531 = vld [vmem:[%s25 + $0x4] sm:$0xf]
    %v1532 = vld [vmem:[%s25 + $0x8] sm:$0xf]
    %v1533 = vld [vmem:[%s25 + $0xc] sm:$0xf]
    %v1534 = vld [vmem:[%s25 + $0x10] sm:$0xf]
    %v1535 = vld [vmem:[%s25 + $0x14] sm:$0xf]
    %v1536 = vld [vmem:[%s25 + $0x18] sm:$0xf]
    %v1537 = vld [vmem:[%s25 + $0x1c] sm:$0xf]
    %v1539 = vrot.slane %v1529, 2
    %v1544 = vunpack.c.l.b16 %v1534
    %v1545 = vunpack.c.l.b16 %v1535
    %v1546 = vunpack.c.l.b16 %v1536
    %v1547 = vunpack.c.l.b16 %v1537
    %v1548 = vpack.c.b16 %v1545, %v1544
    %v1549 = vpack.c.b16 %v1547, %v1546
    %v1553 = vsel %vm624, %v1539, 0
    %1555 = vmatprep.subr.bf16.mxu0 0
    %1556 = vmatpush1.bf16.msra.mxu0 0
    %1557 = vmatprep.subr.bf16.mxu0 0
    %1558 = vmatpush1.bf16.msra.mxu0 0
    %1559 = vmatprep.subr.bf16.mxu0 0
    %1560 = vmatpush1.bf16.msra.mxu0 0
    %1561 = vmatprep.subr.bf16.mxu0 0
    %1562 = vmatpush1.bf16.msra.mxu0 0
    %1563 = vmatprep.subr.bf16.mxu0 0
    %1564 = vmatpush1.bf16.msra.mxu0 0
    %1565 = vmatprep.subr.bf16.mxu0 0
    %1566 = vmatpush1.bf16.msra.mxu0 0
    %1567 = vmatprep.subr.bf16.mxu0 0
    %1568 = vmatpush1.bf16.msra.mxu0 %v1549
    %1569 = vmatprep.subr.bf16.mxu0 0
    %1570 = vmatpush1.bf16.msra.mxu0 %v1548
    %1571 = vmatprep.subr.bf16.mxu0 0
    %1572 = vmatpush2.bf16.msra.mxu0 0
    %1573 = vmatprep.subr.bf16.mxu0 0
    %1574 = vmatpush2.bf16.msra.mxu0 0
    %1575 = vmatprep.subr.bf16.mxu0 0
    %1576 = vmatpush2.bf16.msra.mxu0 0
    %1577 = vmatprep.subr.bf16.mxu0 0
    %1578 = vmatpush2.bf16.msra.mxu0 0
    %1579 = vmatprep.subr.bf16.mxu0 0
    %1580 = vmatpush2.bf16.msra.mxu0 0
    %1581 = vmatprep.subr.bf16.mxu0 0
    %1582 = vmatpush2.bf16.msra.mxu0 0
    %1583 = vmatprep.subr.bf16.mxu0 0
    %1584 = vmatpush2.bf16.msra.mxu0 0
    %1585 = vmatprep.subr.bf16.mxu0 0
    %1586 = vmatpush2.bf16.msra.mxu0 0
    %1587 = vmatprep.mubr.bf16.mxu0 0
    %1588 = vmatmul.mubr.bf16.gmra.mxu0 %v1553
    %v1589 = vpop.f32.mrf.mxu0
    %v1590 = vadd.f32 0.0, %v1589
    %v1591 = vpop.f32.mrf.mxu0
    %v1592 = vpop.f32.mrf.mxu0
    %v1593 = vpop.f32.mrf.mxu0
    %1594 = vdwg.mxu0
    %v1599 = vunpack.c.l.b16 %v1530
    %v1600 = vunpack.c.l.b16 %v1531
    %v1601 = vunpack.c.l.b16 %v1532
    %v1602 = vunpack.c.l.b16 %v1533
    %v1603 = vpack.c.b16 %v1600, %v1599
    %v1604 = vpack.c.b16 %v1602, %v1601
    %v1608 = vsel %vm624, %v1529, 0
    %1610 = vmatprep.subr.bf16.mxu0 0
    %1611 = vmatpush1.bf16.msra.mxu0 0
    %1612 = vmatprep.subr.bf16.mxu0 0
    %1613 = vmatpush1.bf16.msra.mxu0 0
    %1614 = vmatprep.subr.bf16.mxu0 0
    %1615 = vmatpush1.bf16.msra.mxu0 0
    %1616 = vmatprep.subr.bf16.mxu0 0
    %1617 = vmatpush1.bf16.msra.mxu0 0
    %1618 = vmatprep.subr.bf16.mxu0 0
    %1619 = vmatpush1.bf16.msra.mxu0 0
    %1620 = vmatprep.subr.bf16.mxu0 0
    %1621 = vmatpush1.bf16.msra.mxu0 0
    %1622 = vmatprep.subr.bf16.mxu0 0
    %1623 = vmatpush1.bf16.msra.mxu0 %v1604
    %1624 = vmatprep.subr.bf16.mxu0 0
    %1625 = vmatpush1.bf16.msra.mxu0 %v1603
    %1626 = vmatprep.subr.bf16.mxu0 0
    %1627 = vmatpush2.bf16.msra.mxu0 0
    %1628 = vmatprep.subr.bf16.mxu0 0
    %1629 = vmatpush2.bf16.msra.mxu0 0
    %1630 = vmatprep.subr.bf16.mxu0 0
    %1631 = vmatpush2.bf16.msra.mxu0 0
    %1632 = vmatprep.subr.bf16.mxu0 0
    %1633 = vmatpush2.bf16.msra.mxu0 0
    %1634 = vmatprep.subr.bf16.mxu0 0
    %1635 = vmatpush2.bf16.msra.mxu0 0
    %1636 = vmatprep.subr.bf16.mxu0 0
    %1637 = vmatpush2.bf16.msra.mxu0 0
    %1638 = vmatprep.subr.bf16.mxu0 0
    %1639 = vmatpush2.bf16.msra.mxu0 0
    %1640 = vmatprep.subr.bf16.mxu0 0
    %1641 = vmatpush2.bf16.msra.mxu0 0
    %1642 = vmatprep.mubr.bf16.mxu0 0
    %1643 = vmatmul.mubr.bf16.gmra.mxu0 %v1608
    %v1644 = vpop.f32.mrf.mxu0
    %v1645 = vadd.f32 %v1590, %v1644
    %v1646 = vpop.f32.mrf.mxu0
    %v1647 = vpop.f32.mrf.mxu0
    %v1648 = vpop.f32.mrf.mxu0
    %1649 = vdwg.mxu0
    %v1650 = vld [vmem:[%s25 + $0x20] sm:$0xf]
    %v1651 = vld [vmem:[%s25 + $0x24] sm:$0xf]
    %v1652 = vld [vmem:[%s25 + $0x28] sm:$0xf]
    %v1653 = vld [vmem:[%s25 + $0x2c] sm:$0xf]
    %v1654 = vrot.slane %v1529, 4
    %v1659 = vunpack.c.l.b16 %v1650
    %v1660 = vunpack.c.l.b16 %v1651
    %v1661 = vunpack.c.l.b16 %v1652
    %v1662 = vunpack.c.l.b16 %v1653
    %v1663 = vpack.c.b16 %v1660, %v1659
    %v1664 = vpack.c.b16 %v1662, %v1661
    %v1668 = vsel %vm624, %v1654, 0
    %1670 = vmatprep.subr.bf16.mxu0 0
    %1671 = vmatpush1.bf16.msra.mxu0 0
    %1672 = vmatprep.subr.bf16.mxu0 0
    %1673 = vmatpush1.bf16.msra.mxu0 0
    %1674 = vmatprep.subr.bf16.mxu0 0
    %1675 = vmatpush1.bf16.msra.mxu0 0
    %1676 = vmatprep.subr.bf16.mxu0 0
    %1677 = vmatpush1.bf16.msra.mxu0 0
    %1678 = vmatprep.subr.bf16.mxu0 0
    %1679 = vmatpush1.bf16.msra.mxu0 0
    %1680 = vmatprep.subr.bf16.mxu0 0
    %1681 = vmatpush1.bf16.msra.mxu0 0
    %1682 = vmatprep.subr.bf16.mxu0 0
    %1683 = vmatpush1.bf16.msra.mxu0 %v1664
    %1684 = vmatprep.subr.bf16.mxu0 0
    %1685 = vmatpush1.bf16.msra.mxu0 %v1663
    %1686 = vmatprep.subr.bf16.mxu0 0
    %1687 = vmatpush2.bf16.msra.mxu0 0
    %1688 = vmatprep.subr.bf16.mxu0 0
    %1689 = vmatpush2.bf16.msra.mxu0 0
    %1690 = vmatprep.subr.bf16.mxu0 0
    %1691 = vmatpush2.bf16.msra.mxu0 0
    %1692 = vmatprep.subr.bf16.mxu0 0
    %1693 = vmatpush2.bf16.msra.mxu0 0
    %1694 = vmatprep.subr.bf16.mxu0 0
    %1695 = vmatpush2.bf16.msra.mxu0 0
    %1696 = vmatprep.subr.bf16.mxu0 0
    %1697 = vmatpush2.bf16.msra.mxu0 0
    %1698 = vmatprep.subr.bf16.mxu0 0
    %1699 = vmatpush2.bf16.msra.mxu0 0
    %1700 = vmatprep.subr.bf16.mxu0 0
    %1701 = vmatpush2.bf16.msra.mxu0 0
    %1702 = vmatprep.mubr.bf16.mxu0 0
    %1703 = vmatmul.mubr.bf16.gmra.mxu0 %v1668
    %v1704 = vpop.f32.mrf.mxu0
    %v1705 = vadd.f32 0.0, %v1704
    %v1706 = vpop.f32.mrf.mxu0
    %v1707 = vpop.f32.mrf.mxu0
    %v1708 = vpop.f32.mrf.mxu0
    %1709 = vdwg.mxu0
    %v1710 = vadd.f32 %v1645, %v1705
    %v1711 = vld [vmem:[#allocation11] sm:$0x1]
    %v1713 = vlaneseq
    %v1714 = vshrl.u32 %v1713, 7
    %v1715 = vsub.s32 0, %v1714
    %v1716 = vrot.slane %v1711, %v1715
    %v1718 = vmul.f32 %v1710, %v1716
    %v1719 = vld [vmem:[#allocation10] sm:$0x1]
    %v1721 = vlaneseq
    %v1722 = vshrl.u32 %v1721, 7
    %v1723 = vsub.s32 0, %v1722
    %v1724 = vrot.slane %v1719, %v1723
    %v1726 = vadd.f32 %v1718, %v1724
    %v1727 = vmax.f32 %v1726, 0.0
    %v1728 = vld [vmem:[#allocation17] sm:$0x3]
    %v1730 = vsel %vm947, %v1728, 0
    %1732 = vmatprep.subr.bf16.mxu0 0
    %1733 = vmatpush1.bf16.msra.mxu0 0
    %1734 = vmatprep.subr.bf16.mxu0 0
    %1735 = vmatpush1.bf16.msra.mxu0 0
    %1736 = vmatprep.subr.bf16.mxu0 0
    %1737 = vmatpush1.bf16.msra.mxu0 0
    %1738 = vmatprep.subr.bf16.mxu0 0
    %1739 = vmatpush1.bf16.msra.mxu0 0
    %1740 = vmatprep.subr.bf16.mxu0 0
    %1741 = vmatpush1.bf16.msra.mxu0 0
    %1742 = vmatprep.subr.bf16.mxu0 0
    %1743 = vmatpush1.bf16.msra.mxu0 0
    %1744 = vmatprep.subr.bf16.mxu0 0
    %1745 = vmatpush1.bf16.msra.mxu0 0
    %1746 = vmatprep.subr.bf16.mxu0 0
    %1747 = vmatpush1.bf16.msra.mxu0 %v1486
    %1748 = vmatprep.subr.bf16.mxu0 0
    %1749 = vmatpush2.bf16.msra.mxu0 0
    %1750 = vmatprep.subr.bf16.mxu0 0
    %1751 = vmatpush2.bf16.msra.mxu0 0
    %1752 = vmatprep.subr.bf16.mxu0 0
    %1753 = vmatpush2.bf16.msra.mxu0 0
    %1754 = vmatprep.subr.bf16.mxu0 0
    %1755 = vmatpush2.bf16.msra.mxu0 0
    %1756 = vmatprep.subr.bf16.mxu0 0
    %1757 = vmatpush2.bf16.msra.mxu0 0
    %1758 = vmatprep.subr.bf16.mxu0 0
    %1759 = vmatpush2.bf16.msra.mxu0 0
    %1760 = vmatprep.subr.bf16.mxu0 0
    %1761 = vmatpush2.bf16.msra.mxu0 0
    %1762 = vmatprep.subr.bf16.mxu0 0
    %1763 = vmatpush2.bf16.msra.mxu0 0
    %1764 = vmatprep.mubr.bf16.mxu0 0
    %1765 = vmatmul.mubr.bf16.gmra.mxu0 %v1730
    %v1766 = vpop.f32.mrf.mxu0
    %v1767 = vadd.f32 0.0, %v1766
    %v1768 = vpop.f32.mrf.mxu0
    %v1769 = vpop.f32.mrf.mxu0
    %v1770 = vpop.f32.mrf.mxu0
    %1771 = vdwg.mxu0
    %v1772 = vpack.c.bf16 %v1767, %v1767
    %v1773 = vld [vmem:[#allocation20] sm:$0xf]
    %v1774 = vld [vmem:[#allocation20 + $0x4] sm:$0xf]
    %v1775 = vld [vmem:[#allocation20 + $0x8] sm:$0xf]
    %v1776 = vld [vmem:[#allocation20 + $0xc] sm:$0xf]
    %v1781 = vunpack.c.l.b16 %v1773
    %v1782 = vunpack.c.l.b16 %v1774
    %v1783 = vunpack.c.l.b16 %v1775
    %v1784 = vunpack.c.l.b16 %v1776
    %v1785 = vpack.c.b16 %v1782, %v1781
    %v1786 = vpack.c.b16 %v1784, %v1783
    %v1790 = vsel %vm624, %v1772, 0
    %1792 = vmatprep.subr.bf16.mxu0 0
    %1793 = vmatpush1.bf16.msra.mxu0 0
    %1794 = vmatprep.subr.bf16.mxu0 0
    %1795 = vmatpush1.bf16.msra.mxu0 0
    %1796 = vmatprep.subr.bf16.mxu0 0
    %1797 = vmatpush1.bf16.msra.mxu0 0
    %1798 = vmatprep.subr.bf16.mxu0 0
    %1799 = vmatpush1.bf16.msra.mxu0 0
    %1800 = vmatprep.subr.bf16.mxu0 0
    %1801 = vmatpush1.bf16.msra.mxu0 0
    %1802 = vmatprep.subr.bf16.mxu0 0
    %1803 = vmatpush1.bf16.msra.mxu0 0
    %1804 = vmatprep.subr.bf16.mxu0 0
    %1805 = vmatpush1.bf16.msra.mxu0 %v1786
    %1806 = vmatprep.subr.bf16.mxu0 0
    %1807 = vmatpush1.bf16.msra.mxu0 %v1785
    %1808 = vmatprep.subr.bf16.mxu0 0
    %1809 = vmatpush2.bf16.msra.mxu0 0
    %1810 = vmatprep.subr.bf16.mxu0 0
    %1811 = vmatpush2.bf16.msra.mxu0 0
    %1812 = vmatprep.subr.bf16.mxu0 0
    %1813 = vmatpush2.bf16.msra.mxu0 0
    %1814 = vmatprep.subr.bf16.mxu0 0
    %1815 = vmatpush2.bf16.msra.mxu0 0
    %1816 = vmatprep.subr.bf16.mxu0 0
    %1817 = vmatpush2.bf16.msra.mxu0 0
    %1818 = vmatprep.subr.bf16.mxu0 0
    %1819 = vmatpush2.bf16.msra.mxu0 0
    %1820 = vmatprep.subr.bf16.mxu0 0
    %1821 = vmatpush2.bf16.msra.mxu0 0
    %1822 = vmatprep.subr.bf16.mxu0 0
    %1823 = vmatpush2.bf16.msra.mxu0 0
    %1824 = vmatprep.mubr.bf16.mxu0 0
    %1825 = vmatmul.mubr.bf16.gmra.mxu0 %v1790
    %v1826 = vpop.f32.mrf.mxu0
    %v1827 = vadd.f32 0.0, %v1826
    %v1828 = vpop.f32.mrf.mxu0
    %v1829 = vpop.f32.mrf.mxu0
    %v1830 = vpop.f32.mrf.mxu0
    %1831 = vdwg.mxu0
    %v1832 = vld [vmem:[#allocation19] sm:$0x1]
    %v1834 = vlaneseq
    %v1835 = vshrl.u32 %v1834, 7
    %v1836 = vsub.s32 0, %v1835
    %v1837 = vrot.slane %v1832, %v1836
    %v1839 = vmul.f32 %v1827, %v1837
    %v1840 = vld [vmem:[#allocation16] sm:$0x1]
    %v1842 = vlaneseq
    %v1843 = vshrl.u32 %v1842, 7
    %v1844 = vsub.s32 0, %v1843
    %v1845 = vrot.slane %v1840, %v1844
    %v1847 = vadd.f32 %v1839, %v1845
    %v1848 = vpack.c.bf16 %v1727, %v1727
    %v1849 = vld [vmem:[%s29] sm:$0xf]
    %v1850 = vld [vmem:[%s29 + $0x4] sm:$0x3]
    %v1853 = vunpack.c.l.b16 %v1849
    %v1854 = vunpack.c.l.b16 %v1850
    %v1855 = vpack.c.b16 %v1854, %v1853
    %v1857 = vsel %vm700, %v1855, 0
    %v1860 = vsel %vm704, %v1848, 0
    %1862 = vmatprep.subr.bf16.mxu0 0
    %1863 = vmatpush1.bf16.msra.mxu0 0
    %1864 = vmatprep.subr.bf16.mxu0 0
    %1865 = vmatpush1.bf16.msra.mxu0 0
    %1866 = vmatprep.subr.bf16.mxu0 0
    %1867 = vmatpush1.bf16.msra.mxu0 0
    %1868 = vmatprep.subr.bf16.mxu0 0
    %1869 = vmatpush1.bf16.msra.mxu0 0
    %1870 = vmatprep.subr.bf16.mxu0 0
    %1871 = vmatpush1.bf16.msra.mxu0 0
    %1872 = vmatprep.subr.bf16.mxu0 0
    %1873 = vmatpush1.bf16.msra.mxu0 0
    %1874 = vmatprep.subr.bf16.mxu0 0
    %1875 = vmatpush1.bf16.msra.mxu0 0
    %1876 = vmatprep.subr.bf16.mxu0 0
    %1877 = vmatpush1.bf16.msra.mxu0 %v1860
    %1878 = vmatprep.subr.bf16.mxu0 0
    %1879 = vmatpush2.bf16.msra.mxu0 0
    %1880 = vmatprep.subr.bf16.mxu0 0
    %1881 = vmatpush2.bf16.msra.mxu0 0
    %1882 = vmatprep.subr.bf16.mxu0 0
    %1883 = vmatpush2.bf16.msra.mxu0 0
    %1884 = vmatprep.subr.bf16.mxu0 0
    %1885 = vmatpush2.bf16.msra.mxu0 0
    %1886 = vmatprep.subr.bf16.mxu0 0
    %1887 = vmatpush2.bf16.msra.mxu0 0
    %1888 = vmatprep.subr.bf16.mxu0 0
    %1889 = vmatpush2.bf16.msra.mxu0 0
    %1890 = vmatprep.subr.bf16.mxu0 0
    %1891 = vmatpush2.bf16.msra.mxu0 0
    %1892 = vmatprep.subr.bf16.mxu0 0
    %1893 = vmatpush2.bf16.msra.mxu0 0
    %1894 = vmatprep.mubr.bf16.mxu0 0
    %1895 = vmatmul.mubr.bf16.gmra.mxu0 %v1857
    %v1896 = vpop.f32.mrf.mxu0
    %v1897 = vadd.f32 0.0, %v1896
    %v1898 = vpop.f32.mrf.mxu0
    %v1899 = vpop.f32.mrf.mxu0
    %v1900 = vadd.f32 0.0, %v1899
    %v1901 = vpop.f32.mrf.mxu0
    %1902 = vdwg.mxu0
    %v1903 = vpack.c.bf16 %v1900, %v1897
    %v1904 = vld [vmem:[%s33] sm:$0xf]
    %v1905 = vld [vmem:[%s33 + $0x4] sm:$0xf]
    %v1906 = vld [vmem:[%s33 + $0x8] sm:$0xf]
    %v1907 = vld [vmem:[%s33 + $0xc] sm:$0xf]
    %v1908 = vld [vmem:[%s33 + $0x10] sm:$0xf]
    %v1909 = vld [vmem:[%s33 + $0x14] sm:$0xf]
    %v1910 = vld [vmem:[%s33 + $0x18] sm:$0xf]
    %v1911 = vld [vmem:[%s33 + $0x1c] sm:$0xf]
    %v1912 = vld [vmem:[%s33 + $0x20] sm:$0xf]
    %v1913 = vld [vmem:[%s33 + $0x24] sm:$0xf]
    %v1914 = vld [vmem:[%s33 + $0x28] sm:$0xf]
    %v1915 = vld [vmem:[%s33 + $0x2c] sm:$0xf]
    %v1916 = vld [vmem:[%s33 + $0x30] sm:$0xf]
    %v1917 = vld [vmem:[%s33 + $0x34] sm:$0xf]
    %v1918 = vld [vmem:[%s33 + $0x38] sm:$0xf]
    %v1919 = vld [vmem:[%s33 + $0x3c] sm:$0xf]
    %v1921 = vrot.slane %v1903, 2
    %v1930 = vunpack.c.l.b16 %v1912
    %v1931 = vunpack.c.l.b16 %v1913
    %v1932 = vunpack.c.l.b16 %v1914
    %v1933 = vunpack.c.l.b16 %v1915
    %v1934 = vunpack.c.l.b16 %v1916
    %v1935 = vunpack.c.l.b16 %v1917
    %v1936 = vunpack.c.l.b16 %v1918
    %v1937 = vunpack.c.l.b16 %v1919
    %v1938 = vpack.c.b16 %v1931, %v1930
    %v1939 = vpack.c.b16 %v1933, %v1932
    %v1940 = vpack.c.b16 %v1935, %v1934
    %v1941 = vpack.c.b16 %v1937, %v1936
    %vm1946 = vcmask 523264
    %v1948 = vsel %vm1946, %v1921, 0
    %1950 = vmatprep.subr.bf16.mxu0 0
    %1951 = vmatpush1.bf16.msra.mxu0 0
    %1952 = vmatprep.subr.bf16.mxu0 0
    %1953 = vmatpush1.bf16.msra.mxu0 0
    %1954 = vmatprep.subr.bf16.mxu0 0
    %1955 = vmatpush1.bf16.msra.mxu0 0
    %1956 = vmatprep.subr.bf16.mxu0 0
    %1957 = vmatpush1.bf16.msra.mxu0 0
    %1958 = vmatprep.subr.bf16.mxu0 0
    %1959 = vmatpush1.bf16.msra.mxu0 %v1941
    %1960 = vmatprep.subr.bf16.mxu0 0
    %1961 = vmatpush1.bf16.msra.mxu0 %v1940
    %1962 = vmatprep.subr.bf16.mxu0 0
    %1963 = vmatpush1.bf16.msra.mxu0 %v1939
    %1964 = vmatprep.subr.bf16.mxu0 0
    %1965 = vmatpush1.bf16.msra.mxu0 %v1938
    %1966 = vmatprep.subr.bf16.mxu0 0
    %1967 = vmatpush2.bf16.msra.mxu0 0
    %1968 = vmatprep.subr.bf16.mxu0 0
    %1969 = vmatpush2.bf16.msra.mxu0 0
    %1970 = vmatprep.subr.bf16.mxu0 0
    %1971 = vmatpush2.bf16.msra.mxu0 0
    %1972 = vmatprep.subr.bf16.mxu0 0
    %1973 = vmatpush2.bf16.msra.mxu0 0
    %1974 = vmatprep.subr.bf16.mxu0 0
    %1975 = vmatpush2.bf16.msra.mxu0 0
    %1976 = vmatprep.subr.bf16.mxu0 0
    %1977 = vmatpush2.bf16.msra.mxu0 0
    %1978 = vmatprep.subr.bf16.mxu0 0
    %1979 = vmatpush2.bf16.msra.mxu0 0
    %1980 = vmatprep.subr.bf16.mxu0 0
    %1981 = vmatpush2.bf16.msra.mxu0 0
    %1982 = vmatprep.mubr.bf16.mxu0 0
    %1983 = vmatmul.mubr.bf16.gmra.mxu0 %v1948
    %v1984 = vpop.f32.mrf.mxu0
    %v1985 = vadd.f32 0.0, %v1984
    %v1986 = vpop.f32.mrf.mxu0
    %v1987 = vpop.f32.mrf.mxu0
    %v1988 = vpop.f32.mrf.mxu0
    %1989 = vdwg.mxu0
    %v1998 = vunpack.c.l.b16 %v1904
    %v1999 = vunpack.c.l.b16 %v1905
    %v2000 = vunpack.c.l.b16 %v1906
    %v2001 = vunpack.c.l.b16 %v1907
    %v2002 = vunpack.c.l.b16 %v1908
    %v2003 = vunpack.c.l.b16 %v1909
    %v2004 = vunpack.c.l.b16 %v1910
    %v2005 = vunpack.c.l.b16 %v1911
    %v2006 = vpack.c.b16 %v1999, %v1998
    %v2007 = vpack.c.b16 %v2001, %v2000
    %v2008 = vpack.c.b16 %v2003, %v2002
    %v2009 = vpack.c.b16 %v2005, %v2004
    %v2015 = vsel %vm1946, %v1903, 0
    %2017 = vmatprep.subr.bf16.mxu0 0
    %2018 = vmatpush1.bf16.msra.mxu0 0
    %2019 = vmatprep.subr.bf16.mxu0 0
    %2020 = vmatpush1.bf16.msra.mxu0 0
    %2021 = vmatprep.subr.bf16.mxu0 0
    %2022 = vmatpush1.bf16.msra.mxu0 0
    %2023 = vmatprep.subr.bf16.mxu0 0
    %2024 = vmatpush1.bf16.msra.mxu0 0
    %2025 = vmatprep.subr.bf16.mxu0 0
    %2026 = vmatpush1.bf16.msra.mxu0 %v2009
    %2027 = vmatprep.subr.bf16.mxu0 0
    %2028 = vmatpush1.bf16.msra.mxu0 %v2008
    %2029 = vmatprep.subr.bf16.mxu0 0
    %2030 = vmatpush1.bf16.msra.mxu0 %v2007
    %2031 = vmatprep.subr.bf16.mxu0 0
    %2032 = vmatpush1.bf16.msra.mxu0 %v2006
    %2033 = vmatprep.subr.bf16.mxu0 0
    %2034 = vmatpush2.bf16.msra.mxu0 0
    %2035 = vmatprep.subr.bf16.mxu0 0
    %2036 = vmatpush2.bf16.msra.mxu0 0
    %2037 = vmatprep.subr.bf16.mxu0 0
    %2038 = vmatpush2.bf16.msra.mxu0 0
    %2039 = vmatprep.subr.bf16.mxu0 0
    %2040 = vmatpush2.bf16.msra.mxu0 0
    %2041 = vmatprep.subr.bf16.mxu0 0
    %2042 = vmatpush2.bf16.msra.mxu0 0
    %2043 = vmatprep.subr.bf16.mxu0 0
    %2044 = vmatpush2.bf16.msra.mxu0 0
    %2045 = vmatprep.subr.bf16.mxu0 0
    %2046 = vmatpush2.bf16.msra.mxu0 0
    %2047 = vmatprep.subr.bf16.mxu0 0
    %2048 = vmatpush2.bf16.msra.mxu0 0
    %2049 = vmatprep.mubr.bf16.mxu0 0
    %2050 = vmatmul.mubr.bf16.gmra.mxu0 %v2015
    %v2051 = vpop.f32.mrf.mxu0
    %v2052 = vadd.f32 %v1985, %v2051
    %v2053 = vpop.f32.mrf.mxu0
    %v2054 = vpop.f32.mrf.mxu0
    %v2055 = vpop.f32.mrf.mxu0
    %2056 = vdwg.mxu0
    %v2057 = vld [vmem:[%s33 + $0x40] sm:$0xf]
    %v2058 = vld [vmem:[%s33 + $0x44] sm:$0xf]
    %v2059 = vld [vmem:[%s33 + $0x48] sm:$0xf]
    %v2060 = vld [vmem:[%s33 + $0x4c] sm:$0xf]
    %v2061 = vld [vmem:[%s33 + $0x50] sm:$0xf]
    %v2062 = vld [vmem:[%s33 + $0x54] sm:$0xf]
    %v2063 = vld [vmem:[%s33 + $0x58] sm:$0xf]
    %v2064 = vld [vmem:[%s33 + $0x5c] sm:$0xf]
    %v2065 = vrot.slane %v1903, 4
    %v2074 = vunpack.c.l.b16 %v2057
    %v2075 = vunpack.c.l.b16 %v2058
    %v2076 = vunpack.c.l.b16 %v2059
    %v2077 = vunpack.c.l.b16 %v2060
    %v2078 = vunpack.c.l.b16 %v2061
    %v2079 = vunpack.c.l.b16 %v2062
    %v2080 = vunpack.c.l.b16 %v2063
    %v2081 = vunpack.c.l.b16 %v2064
    %v2082 = vpack.c.b16 %v2075, %v2074
    %v2083 = vpack.c.b16 %v2077, %v2076
    %v2084 = vpack.c.b16 %v2079, %v2078
    %v2085 = vpack.c.b16 %v2081, %v2080
    %v2091 = vsel %vm1946, %v2065, 0
    %2093 = vmatprep.subr.bf16.mxu0 0
    %2094 = vmatpush1.bf16.msra.mxu0 0
    %2095 = vmatprep.subr.bf16.mxu0 0
    %2096 = vmatpush1.bf16.msra.mxu0 0
    %2097 = vmatprep.subr.bf16.mxu0 0
    %2098 = vmatpush1.bf16.msra.mxu0 0
    %2099 = vmatprep.subr.bf16.mxu0 0
    %2100 = vmatpush1.bf16.msra.mxu0 0
    %2101 = vmatprep.subr.bf16.mxu0 0
    %2102 = vmatpush1.bf16.msra.mxu0 %v2085
    %2103 = vmatprep.subr.bf16.mxu0 0
    %2104 = vmatpush1.bf16.msra.mxu0 %v2084
    %2105 = vmatprep.subr.bf16.mxu0 0
    %2106 = vmatpush1.bf16.msra.mxu0 %v2083
    %2107 = vmatprep.subr.bf16.mxu0 0
    %2108 = vmatpush1.bf16.msra.mxu0 %v2082
    %2109 = vmatprep.subr.bf16.mxu0 0
    %2110 = vmatpush2.bf16.msra.mxu0 0
    %2111 = vmatprep.subr.bf16.mxu0 0
    %2112 = vmatpush2.bf16.msra.mxu0 0
    %2113 = vmatprep.subr.bf16.mxu0 0
    %2114 = vmatpush2.bf16.msra.mxu0 0
    %2115 = vmatprep.subr.bf16.mxu0 0
    %2116 = vmatpush2.bf16.msra.mxu0 0
    %2117 = vmatprep.subr.bf16.mxu0 0
    %2118 = vmatpush2.bf16.msra.mxu0 0
    %2119 = vmatprep.subr.bf16.mxu0 0
    %2120 = vmatpush2.bf16.msra.mxu0 0
    %2121 = vmatprep.subr.bf16.mxu0 0
    %2122 = vmatpush2.bf16.msra.mxu0 0
    %2123 = vmatprep.subr.bf16.mxu0 0
    %2124 = vmatpush2.bf16.msra.mxu0 0
    %2125 = vmatprep.mubr.bf16.mxu0 0
    %2126 = vmatmul.mubr.bf16.gmra.mxu0 %v2091
    %v2127 = vpop.f32.mrf.mxu0
    %v2128 = vadd.f32 0.0, %v2127
    %v2129 = vpop.f32.mrf.mxu0
    %v2130 = vpop.f32.mrf.mxu0
    %v2131 = vpop.f32.mrf.mxu0
    %2132 = vdwg.mxu0
    %v2133 = vadd.f32 %v2052, %v2128
    %v2134 = vld [vmem:[#allocation14] sm:$0x1]
    %v2136 = vlaneseq
    %v2137 = vshrl.u32 %v2136, 7
    %v2138 = vsub.s32 0, %v2137
    %v2139 = vrot.slane %v2134, %v2138
    %v2141 = vmul.f32 %v2133, %v2139
    %v2142 = vld [vmem:[#allocation13] sm:$0x1]
    %v2144 = vlaneseq
    %v2145 = vshrl.u32 %v2144, 7
    %v2146 = vsub.s32 0, %v2145
    %v2147 = vrot.slane %v2142, %v2146
    %v2149 = vadd.f32 %v2141, %v2147
    %v2150 = vadd.f32 %v2149, %v1847
    %v2151 = vmax.f32 %v2150, 0.0
    %v2152 = vpack.c.bf16 %v2151, %v2151
    %v2153 = vld [vmem:[%s45] sm:$0x7]
    %v2155 = vsel %vm700, %v2153, 0
    %v2158 = vsel %vm704, %v2152, 0
    %2160 = vmatprep.subr.bf16.mxu0 0
    %2161 = vmatpush1.bf16.msra.mxu0 0
    %2162 = vmatprep.subr.bf16.mxu0 0
    %2163 = vmatpush1.bf16.msra.mxu0 0
    %2164 = vmatprep.subr.bf16.mxu0 0
    %2165 = vmatpush1.bf16.msra.mxu0 0
    %2166 = vmatprep.subr.bf16.mxu0 0
    %2167 = vmatpush1.bf16.msra.mxu0 0
    %2168 = vmatprep.subr.bf16.mxu0 0
    %2169 = vmatpush1.bf16.msra.mxu0 0
    %2170 = vmatprep.subr.bf16.mxu0 0
    %2171 = vmatpush1.bf16.msra.mxu0 0
    %2172 = vmatprep.subr.bf16.mxu0 0
    %2173 = vmatpush1.bf16.msra.mxu0 0
    %2174 = vmatprep.subr.bf16.mxu0 0
    %2175 = vmatpush1.bf16.msra.mxu0 %v2158
    %2176 = vmatprep.subr.bf16.mxu0 0
    %2177 = vmatpush2.bf16.msra.mxu0 0
    %2178 = vmatprep.subr.bf16.mxu0 0
    %2179 = vmatpush2.bf16.msra.mxu0 0
    %2180 = vmatprep.subr.bf16.mxu0 0
    %2181 = vmatpush2.bf16.msra.mxu0 0
    %2182 = vmatprep.subr.bf16.mxu0 0
    %2183 = vmatpush2.bf16.msra.mxu0 0
    %2184 = vmatprep.subr.bf16.mxu0 0
    %2185 = vmatpush2.bf16.msra.mxu0 0
    %2186 = vmatprep.subr.bf16.mxu0 0
    %2187 = vmatpush2.bf16.msra.mxu0 0
    %2188 = vmatprep.subr.bf16.mxu0 0
    %2189 = vmatpush2.bf16.msra.mxu0 0
    %2190 = vmatprep.subr.bf16.mxu0 0
    %2191 = vmatpush2.bf16.msra.mxu0 0
    %2192 = vmatprep.mubr.bf16.mxu0 0
    %2193 = vmatmul.mubr.bf16.gmra.mxu0 %v2155
    %v2194 = vpop.f32.mrf.mxu0
    %v2195 = vadd.f32 0.0, %v2194
    %v2196 = vpop.f32.mrf.mxu0
    %v2197 = vpop.f32.mrf.mxu0
    %v2198 = vpop.f32.mrf.mxu0
    %2199 = vdwg.mxu0
    %v2200 = vpack.c.bf16 %v2195, %v2195
    %v2201 = vld [vmem:[#allocation25] sm:$0xf]
    %v2202 = vld [vmem:[#allocation25 + $0x4] sm:$0xf]
    %v2203 = vld [vmem:[#allocation25 + $0x8] sm:$0xf]
    %v2204 = vld [vmem:[#allocation25 + $0xc] sm:$0xf]
    %v2205 = vld [vmem:[#allocation25 + $0x10] sm:$0xf]
    %v2206 = vld [vmem:[#allocation25 + $0x14] sm:$0xf]
    %v2207 = vld [vmem:[#allocation25 + $0x18] sm:$0xf]
    %v2208 = vld [vmem:[#allocation25 + $0x1c] sm:$0xf]
    %v2209 = vld [vmem:[#allocation25 + $0x20] sm:$0xf]
    %v2210 = vld [vmem:[#allocation25 + $0x24] sm:$0xf]
    %v2211 = vld [vmem:[#allocation25 + $0x28] sm:$0xf]
    %v2212 = vld [vmem:[#allocation25 + $0x2c] sm:$0xf]
    %v2213 = vld [vmem:[#allocation25 + $0x30] sm:$0xf]
    %v2214 = vld [vmem:[#allocation25 + $0x34] sm:$0xf]
    %v2215 = vld [vmem:[#allocation25 + $0x38] sm:$0xf]
    %v2216 = vld [vmem:[#allocation25 + $0x3c] sm:$0xf]
    %v2218 = vrot.slane %v2200, 1
    %v2227 = vunpack.c.l.b16 %v2209
    %v2228 = vunpack.c.l.b16 %v2210
    %v2229 = vunpack.c.l.b16 %v2211
    %v2230 = vunpack.c.l.b16 %v2212
    %v2231 = vunpack.c.l.b16 %v2213
    %v2232 = vunpack.c.l.b16 %v2214
    %v2233 = vunpack.c.l.b16 %v2215
    %v2234 = vunpack.c.l.b16 %v2216
    %v2235 = vpack.c.b16 %v2228, %v2227
    %v2236 = vpack.c.b16 %v2230, %v2229
    %v2237 = vpack.c.b16 %v2232, %v2231
    %v2238 = vpack.c.b16 %v2234, %v2233
    %v2244 = vsel %vm1946, %v2218, 0
    %2246 = vmatprep.subr.bf16.mxu0 0
    %2247 = vmatpush1.bf16.msra.mxu0 0
    %2248 = vmatprep.subr.bf16.mxu0 0
    %2249 = vmatpush1.bf16.msra.mxu0 0
    %2250 = vmatprep.subr.bf16.mxu0 0
    %2251 = vmatpush1.bf16.msra.mxu0 0
    %2252 = vmatprep.subr.bf16.mxu0 0
    %2253 = vmatpush1.bf16.msra.mxu0 0
    %2254 = vmatprep.subr.bf16.mxu0 0
    %2255 = vmatpush1.bf16.msra.mxu0 %v2238
    %2256 = vmatprep.subr.bf16.mxu0 0
    %2257 = vmatpush1.bf16.msra.mxu0 %v2237
    %2258 = vmatprep.subr.bf16.mxu0 0
    %2259 = vmatpush1.bf16.msra.mxu0 %v2236
    %2260 = vmatprep.subr.bf16.mxu0 0
    %2261 = vmatpush1.bf16.msra.mxu0 %v2235
    %2262 = vmatprep.subr.bf16.mxu0 0
    %2263 = vmatpush2.bf16.msra.mxu0 0
    %2264 = vmatprep.subr.bf16.mxu0 0
    %2265 = vmatpush2.bf16.msra.mxu0 0
    %2266 = vmatprep.subr.bf16.mxu0 0
    %2267 = vmatpush2.bf16.msra.mxu0 0
    %2268 = vmatprep.subr.bf16.mxu0 0
    %2269 = vmatpush2.bf16.msra.mxu0 0
    %2270 = vmatprep.subr.bf16.mxu0 0
    %2271 = vmatpush2.bf16.msra.mxu0 0
    %2272 = vmatprep.subr.bf16.mxu0 0
    %2273 = vmatpush2.bf16.msra.mxu0 0
    %2274 = vmatprep.subr.bf16.mxu0 0
    %2275 = vmatpush2.bf16.msra.mxu0 0
    %2276 = vmatprep.subr.bf16.mxu0 0
    %2277 = vmatpush2.bf16.msra.mxu0 0
    %2278 = vmatprep.mubr.bf16.mxu0 0
    %2279 = vmatmul.mubr.bf16.gmra.mxu0 %v2244
    %v2280 = vpop.f32.mrf.mxu0
    %v2281 = vadd.f32 0.0, %v2280
    %v2282 = vpop.f32.mrf.mxu0
    %v2283 = vpop.f32.mrf.mxu0
    %v2284 = vpop.f32.mrf.mxu0
    %2285 = vdwg.mxu0
    %v2294 = vunpack.c.l.b16 %v2201
    %v2295 = vunpack.c.l.b16 %v2202
    %v2296 = vunpack.c.l.b16 %v2203
    %v2297 = vunpack.c.l.b16 %v2204
    %v2298 = vunpack.c.l.b16 %v2205
    %v2299 = vunpack.c.l.b16 %v2206
    %v2300 = vunpack.c.l.b16 %v2207
    %v2301 = vunpack.c.l.b16 %v2208
    %v2302 = vpack.c.b16 %v2295, %v2294
    %v2303 = vpack.c.b16 %v2297, %v2296
    %v2304 = vpack.c.b16 %v2299, %v2298
    %v2305 = vpack.c.b16 %v2301, %v2300
    %v2311 = vsel %vm1946, %v2200, 0
    %2313 = vmatprep.subr.bf16.mxu0 0
    %2314 = vmatpush1.bf16.msra.mxu0 0
    %2315 = vmatprep.subr.bf16.mxu0 0
    %2316 = vmatpush1.bf16.msra.mxu0 0
    %2317 = vmatprep.subr.bf16.mxu0 0
    %2318 = vmatpush1.bf16.msra.mxu0 0
    %2319 = vmatprep.subr.bf16.mxu0 0
    %2320 = vmatpush1.bf16.msra.mxu0 0
    %2321 = vmatprep.subr.bf16.mxu0 0
    %2322 = vmatpush1.bf16.msra.mxu0 %v2305
    %2323 = vmatprep.subr.bf16.mxu0 0
    %2324 = vmatpush1.bf16.msra.mxu0 %v2304
    %2325 = vmatprep.subr.bf16.mxu0 0
    %2326 = vmatpush1.bf16.msra.mxu0 %v2303
    %2327 = vmatprep.subr.bf16.mxu0 0
    %2328 = vmatpush1.bf16.msra.mxu0 %v2302
    %2329 = vmatprep.subr.bf16.mxu0 0
    %2330 = vmatpush2.bf16.msra.mxu0 0
    %2331 = vmatprep.subr.bf16.mxu0 0
    %2332 = vmatpush2.bf16.msra.mxu0 0
    %2333 = vmatprep.subr.bf16.mxu0 0
    %2334 = vmatpush2.bf16.msra.mxu0 0
    %2335 = vmatprep.subr.bf16.mxu0 0
    %2336 = vmatpush2.bf16.msra.mxu0 0
    %2337 = vmatprep.subr.bf16.mxu0 0
    %2338 = vmatpush2.bf16.msra.mxu0 0
    %2339 = vmatprep.subr.bf16.mxu0 0
    %2340 = vmatpush2.bf16.msra.mxu0 0
    %2341 = vmatprep.subr.bf16.mxu0 0
    %2342 = vmatpush2.bf16.msra.mxu0 0
    %2343 = vmatprep.subr.bf16.mxu0 0
    %2344 = vmatpush2.bf16.msra.mxu0 0
    %2345 = vmatprep.mubr.bf16.mxu0 0
    %2346 = vmatmul.mubr.bf16.gmra.mxu0 %v2311
    %v2347 = vpop.f32.mrf.mxu0
    %v2348 = vadd.f32 %v2281, %v2347
    %v2349 = vpop.f32.mrf.mxu0
    %v2350 = vpop.f32.mrf.mxu0
    %v2351 = vpop.f32.mrf.mxu0
    %2352 = vdwg.mxu0
    %v2353 = vld [vmem:[#allocation25 + $0x40] sm:$0xf]
    %v2354 = vld [vmem:[#allocation25 + $0x44] sm:$0xf]
    %v2355 = vld [vmem:[#allocation25 + $0x48] sm:$0xf]
    %v2356 = vld [vmem:[#allocation25 + $0x4c] sm:$0xf]
    %v2357 = vld [vmem:[#allocation25 + $0x50] sm:$0xf]
    %v2358 = vld [vmem:[#allocation25 + $0x54] sm:$0xf]
    %v2359 = vld [vmem:[#allocation25 + $0x58] sm:$0xf]
    %v2360 = vld [vmem:[#allocation25 + $0x5c] sm:$0xf]
    %v2361 = vrot.slane %v2200, 2
    %v2370 = vunpack.c.l.b16 %v2353
    %v2371 = vunpack.c.l.b16 %v2354
    %v2372 = vunpack.c.l.b16 %v2355
    %v2373 = vunpack.c.l.b16 %v2356
    %v2374 = vunpack.c.l.b16 %v2357
    %v2375 = vunpack.c.l.b16 %v2358
    %v2376 = vunpack.c.l.b16 %v2359
    %v2377 = vunpack.c.l.b16 %v2360
    %v2378 = vpack.c.b16 %v2371, %v2370
    %v2379 = vpack.c.b16 %v2373, %v2372
    %v2380 = vpack.c.b16 %v2375, %v2374
    %v2381 = vpack.c.b16 %v2377, %v2376
    %v2387 = vsel %vm1946, %v2361, 0
    %2389 = vmatprep.subr.bf16.mxu0 0
    %2390 = vmatpush1.bf16.msra.mxu0 0
    %2391 = vmatprep.subr.bf16.mxu0 0
    %2392 = vmatpush1.bf16.msra.mxu0 0
    %2393 = vmatprep.subr.bf16.mxu0 0
    %2394 = vmatpush1.bf16.msra.mxu0 0
    %2395 = vmatprep.subr.bf16.mxu0 0
    %2396 = vmatpush1.bf16.msra.mxu0 0
    %2397 = vmatprep.subr.bf16.mxu0 0
    %2398 = vmatpush1.bf16.msra.mxu0 %v2381
    %2399 = vmatprep.subr.bf16.mxu0 0
    %2400 = vmatpush1.bf16.msra.mxu0 %v2380
    %2401 = vmatprep.subr.bf16.mxu0 0
    %2402 = vmatpush1.bf16.msra.mxu0 %v2379
    %2403 = vmatprep.subr.bf16.mxu0 0
    %2404 = vmatpush1.bf16.msra.mxu0 %v2378
    %2405 = vmatprep.subr.bf16.mxu0 0
    %2406 = vmatpush2.bf16.msra.mxu0 0
    %2407 = vmatprep.subr.bf16.mxu0 0
    %2408 = vmatpush2.bf16.msra.mxu0 0
    %2409 = vmatprep.subr.bf16.mxu0 0
    %2410 = vmatpush2.bf16.msra.mxu0 0
    %2411 = vmatprep.subr.bf16.mxu0 0
    %2412 = vmatpush2.bf16.msra.mxu0 0
    %2413 = vmatprep.subr.bf16.mxu0 0
    %2414 = vmatpush2.bf16.msra.mxu0 0
    %2415 = vmatprep.subr.bf16.mxu0 0
    %2416 = vmatpush2.bf16.msra.mxu0 0
    %2417 = vmatprep.subr.bf16.mxu0 0
    %2418 = vmatpush2.bf16.msra.mxu0 0
    %2419 = vmatprep.subr.bf16.mxu0 0
    %2420 = vmatpush2.bf16.msra.mxu0 0
    %2421 = vmatprep.mubr.bf16.mxu0 0
    %2422 = vmatmul.mubr.bf16.gmra.mxu0 %v2387
    %v2423 = vpop.f32.mrf.mxu0
    %v2424 = vadd.f32 0.0, %v2423
    %v2425 = vpop.f32.mrf.mxu0
    %v2426 = vpop.f32.mrf.mxu0
    %v2427 = vpop.f32.mrf.mxu0
    %2428 = vdwg.mxu0
    %v2429 = vadd.f32 %v2348, %v2424
    %v2430 = vld [vmem:[#allocation23] sm:$0x1]
    %v2432 = vlaneseq
    %v2433 = vshrl.u32 %v2432, 7
    %v2434 = vsub.s32 0, %v2433
    %v2435 = vrot.slane %v2430, %v2434
    %v2437 = vmul.f32 %v2429, %v2435
    %v2438 = vld [vmem:[#allocation22] sm:$0x1]
    %v2440 = vlaneseq
    %v2441 = vshrl.u32 %v2440, 7
    %v2442 = vsub.s32 0, %v2441
    %v2443 = vrot.slane %v2438, %v2442
    %v2445 = vadd.f32 %v2437, %v2443
    %v2446 = vmax.f32 %v2445, 0.0
    %v2447 = vld [vmem:[#allocation31] sm:$0x1]
    %v2449 = vsel %vm700, %v2447, 0
    %2451 = vmatprep.subr.bf16.mxu0 0
    %2452 = vmatpush1.bf16.msra.mxu0 0
    %2453 = vmatprep.subr.bf16.mxu0 0
    %2454 = vmatpush1.bf16.msra.mxu0 0
    %2455 = vmatprep.subr.bf16.mxu0 0
    %2456 = vmatpush1.bf16.msra.mxu0 0
    %2457 = vmatprep.subr.bf16.mxu0 0
    %2458 = vmatpush1.bf16.msra.mxu0 0
    %2459 = vmatprep.subr.bf16.mxu0 0
    %2460 = vmatpush1.bf16.msra.mxu0 0
    %2461 = vmatprep.subr.bf16.mxu0 0
    %2462 = vmatpush1.bf16.msra.mxu0 0
    %2463 = vmatprep.subr.bf16.mxu0 0
    %2464 = vmatpush1.bf16.msra.mxu0 0
    %2465 = vmatprep.subr.bf16.mxu0 0
    %2466 = vmatpush1.bf16.msra.mxu0 %v2158
    %2467 = vmatprep.subr.bf16.mxu0 0
    %2468 = vmatpush2.bf16.msra.mxu0 0
    %2469 = vmatprep.subr.bf16.mxu0 0
    %2470 = vmatpush2.bf16.msra.mxu0 0
    %2471 = vmatprep.subr.bf16.mxu0 0
    %2472 = vmatpush2.bf16.msra.mxu0 0
    %2473 = vmatprep.subr.bf16.mxu0 0
    %2474 = vmatpush2.bf16.msra.mxu0 0
    %2475 = vmatprep.subr.bf16.mxu0 0
    %2476 = vmatpush2.bf16.msra.mxu0 0
    %2477 = vmatprep.subr.bf16.mxu0 0
    %2478 = vmatpush2.bf16.msra.mxu0 0
    %2479 = vmatprep.subr.bf16.mxu0 0
    %2480 = vmatpush2.bf16.msra.mxu0 0
    %2481 = vmatprep.subr.bf16.mxu0 0
    %2482 = vmatpush2.bf16.msra.mxu0 0
    %2483 = vmatprep.mubr.bf16.mxu0 0
    %2484 = vmatmul.mubr.bf16.gmra.mxu0 %v2449
    %v2485 = vpop.f32.mrf.mxu0
    %v2486 = vadd.f32 0.0, %v2485
    %v2487 = vpop.f32.mrf.mxu0
    %v2488 = vpop.f32.mrf.mxu0
    %v2489 = vpop.f32.mrf.mxu0
    %2490 = vdwg.mxu0
    %v2491 = vpack.c.bf16 %v2486, %v2486
    %v2492 = vld [vmem:[#allocation34] sm:$0xf]
    %v2493 = vld [vmem:[#allocation34 + $0x4] sm:$0xf]
    %v2494 = vld [vmem:[#allocation34 + $0x8] sm:$0xf]
    %v2495 = vld [vmem:[#allocation34 + $0xc] sm:$0xf]
    %v2496 = vld [vmem:[#allocation34 + $0x10] sm:$0xf]
    %v2497 = vld [vmem:[#allocation34 + $0x14] sm:$0xf]
    %v2498 = vld [vmem:[#allocation34 + $0x18] sm:$0xf]
    %v2499 = vld [vmem:[#allocation34 + $0x1c] sm:$0xf]
    %v2508 = vunpack.c.l.b16 %v2492
    %v2509 = vunpack.c.l.b16 %v2493
    %v2510 = vunpack.c.l.b16 %v2494
    %v2511 = vunpack.c.l.b16 %v2495
    %v2512 = vunpack.c.l.b16 %v2496
    %v2513 = vunpack.c.l.b16 %v2497
    %v2514 = vunpack.c.l.b16 %v2498
    %v2515 = vunpack.c.l.b16 %v2499
    %v2516 = vpack.c.b16 %v2509, %v2508
    %v2517 = vpack.c.b16 %v2511, %v2510
    %v2518 = vpack.c.b16 %v2513, %v2512
    %v2519 = vpack.c.b16 %v2515, %v2514
    %v2525 = vsel %vm1946, %v2491, 0
    %2527 = vmatprep.subr.bf16.mxu0 0
    %2528 = vmatpush1.bf16.msra.mxu0 0
    %2529 = vmatprep.subr.bf16.mxu0 0
    %2530 = vmatpush1.bf16.msra.mxu0 0
    %2531 = vmatprep.subr.bf16.mxu0 0
    %2532 = vmatpush1.bf16.msra.mxu0 0
    %2533 = vmatprep.subr.bf16.mxu0 0
    %2534 = vmatpush1.bf16.msra.mxu0 0
    %2535 = vmatprep.subr.bf16.mxu0 0
    %2536 = vmatpush1.bf16.msra.mxu0 %v2519
    %2537 = vmatprep.subr.bf16.mxu0 0
    %2538 = vmatpush1.bf16.msra.mxu0 %v2518
    %2539 = vmatprep.subr.bf16.mxu0 0
    %2540 = vmatpush1.bf16.msra.mxu0 %v2517
    %2541 = vmatprep.subr.bf16.mxu0 0
    %2542 = vmatpush1.bf16.msra.mxu0 %v2516
    %2543 = vmatprep.subr.bf16.mxu0 0
    %2544 = vmatpush2.bf16.msra.mxu0 0
    %2545 = vmatprep.subr.bf16.mxu0 0
    %2546 = vmatpush2.bf16.msra.mxu0 0
    %2547 = vmatprep.subr.bf16.mxu0 0
    %2548 = vmatpush2.bf16.msra.mxu0 0
    %2549 = vmatprep.subr.bf16.mxu0 0
    %2550 = vmatpush2.bf16.msra.mxu0 0
    %2551 = vmatprep.subr.bf16.mxu0 0
    %2552 = vmatpush2.bf16.msra.mxu0 0
    %2553 = vmatprep.subr.bf16.mxu0 0
    %2554 = vmatpush2.bf16.msra.mxu0 0
    %2555 = vmatprep.subr.bf16.mxu0 0
    %2556 = vmatpush2.bf16.msra.mxu0 0
    %2557 = vmatprep.subr.bf16.mxu0 0
    %2558 = vmatpush2.bf16.msra.mxu0 0
    %2559 = vmatprep.mubr.bf16.mxu0 0
    %2560 = vmatmul.mubr.bf16.gmra.mxu0 %v2525
    %v2561 = vpop.f32.mrf.mxu0
    %v2562 = vadd.f32 0.0, %v2561
    %v2563 = vpop.f32.mrf.mxu0
    %v2564 = vpop.f32.mrf.mxu0
    %v2565 = vpop.f32.mrf.mxu0
    %2566 = vdwg.mxu0
    %v2567 = vld [vmem:[#allocation32] sm:$0x1]
    %v2569 = vlaneseq
    %v2570 = vshrl.u32 %v2569, 7
    %v2571 = vsub.s32 0, %v2570
    %v2572 = vrot.slane %v2567, %v2571
    %v2574 = vmul.f32 %v2562, %v2572
    %v2575 = vld [vmem:[#allocation29] sm:$0x1]
    %v2577 = vlaneseq
    %v2578 = vshrl.u32 %v2577, 7
    %v2579 = vsub.s32 0, %v2578
    %v2580 = vrot.slane %v2575, %v2579
    %v2582 = vadd.f32 %v2574, %v2580
    %v2583 = vpack.c.bf16 %v2446, %v2446
    %v2584 = vld [vmem:[%s53] sm:$0x7]
    %vm2585 = vcmask 15360
    %v2587 = vsel %vm2585, %v2584, 0
    %vm2589 = vcmask 1040384
    %v2591 = vsel %vm2589, %v2583, 0
    %2593 = vmatprep.subr.bf16.mxu0 0
    %2594 = vmatpush1.bf16.msra.mxu0 0
    %2595 = vmatprep.subr.bf16.mxu0 0
    %2596 = vmatpush1.bf16.msra.mxu0 0
    %2597 = vmatprep.subr.bf16.mxu0 0
    %2598 = vmatpush1.bf16.msra.mxu0 0
    %2599 = vmatprep.subr.bf16.mxu0 0
    %2600 = vmatpush1.bf16.msra.mxu0 0
    %2601 = vmatprep.subr.bf16.mxu0 0
    %2602 = vmatpush1.bf16.msra.mxu0 0
    %2603 = vmatprep.subr.bf16.mxu0 0
    %2604 = vmatpush1.bf16.msra.mxu0 0
    %2605 = vmatprep.subr.bf16.mxu0 0
    %2606 = vmatpush1.bf16.msra.mxu0 0
    %2607 = vmatprep.subr.bf16.mxu0 0
    %2608 = vmatpush1.bf16.msra.mxu0 %v2591
    %2609 = vmatprep.subr.bf16.mxu0 0
    %2610 = vmatpush2.bf16.msra.mxu0 0
    %2611 = vmatprep.subr.bf16.mxu0 0
    %2612 = vmatpush2.bf16.msra.mxu0 0
    %2613 = vmatprep.subr.bf16.mxu0 0
    %2614 = vmatpush2.bf16.msra.mxu0 0
    %2615 = vmatprep.subr.bf16.mxu0 0
    %2616 = vmatpush2.bf16.msra.mxu0 0
    %2617 = vmatprep.subr.bf16.mxu0 0
    %2618 = vmatpush2.bf16.msra.mxu0 0
    %2619 = vmatprep.subr.bf16.mxu0 0
    %2620 = vmatpush2.bf16.msra.mxu0 0
    %2621 = vmatprep.subr.bf16.mxu0 0
    %2622 = vmatpush2.bf16.msra.mxu0 0
    %2623 = vmatprep.subr.bf16.mxu0 0
    %2624 = vmatpush2.bf16.msra.mxu0 0
    %2625 = vmatprep.mubr.bf16.mxu0 0
    %2626 = vmatmul.mubr.bf16.gmra.mxu0 %v2587
    %v2627 = vpop.f32.mrf.mxu0
    %v2628 = vadd.f32 0.0, %v2627
    %v2629 = vpop.f32.mrf.mxu0
    %v2630 = vpop.f32.mrf.mxu0
    %v2631 = vpop.f32.mrf.mxu0
    %2632 = vdwg.mxu0
    %v2633 = vpack.c.bf16 %v2628, %v2628
    %v2634 = vld [vmem:[%s57] sm:$0xf]
    %v2635 = vld [vmem:[%s57 + $0x4] sm:$0xf]
    %v2636 = vld [vmem:[%s57 + $0x8] sm:$0xf]
    %v2637 = vld [vmem:[%s57 + $0xc] sm:$0xf]
    %v2638 = vld [vmem:[%s57 + $0x10] sm:$0xf]
    %v2639 = vld [vmem:[%s57 + $0x14] sm:$0xf]
    %v2640 = vld [vmem:[%s57 + $0x18] sm:$0xf]
    %v2641 = vld [vmem:[%s57 + $0x1c] sm:$0xf]
    %v2642 = vld [vmem:[%s57 + $0x20] sm:$0xf]
    %v2643 = vld [vmem:[%s57 + $0x24] sm:$0xf]
    %v2644 = vld [vmem:[%s57 + $0x28] sm:$0xf]
    %v2645 = vld [vmem:[%s57 + $0x2c] sm:$0xf]
    %v2646 = vld [vmem:[%s57 + $0x30] sm:$0xf]
    %v2647 = vld [vmem:[%s57 + $0x34] sm:$0xf]
    %v2648 = vld [vmem:[%s57 + $0x38] sm:$0xf]
    %v2649 = vld [vmem:[%s57 + $0x3c] sm:$0xf]
    %v2650 = vld [vmem:[%s57 + $0x40] sm:$0xf]
    %v2651 = vld [vmem:[%s57 + $0x44] sm:$0xf]
    %v2652 = vld [vmem:[%s57 + $0x48] sm:$0xf]
    %v2653 = vld [vmem:[%s57 + $0x4c] sm:$0xf]
    %v2654 = vld [vmem:[%s57 + $0x50] sm:$0xf]
    %v2655 = vld [vmem:[%s57 + $0x54] sm:$0xf]
    %v2656 = vld [vmem:[%s57 + $0x58] sm:$0xf]
    %v2657 = vld [vmem:[%s57 + $0x5c] sm:$0xf]
    %v2658 = vld [vmem:[%s57 + $0x60] sm:$0xf]
    %v2659 = vld [vmem:[%s57 + $0x64] sm:$0xf]
    %v2660 = vld [vmem:[%s57 + $0x68] sm:$0xf]
    %v2661 = vld [vmem:[%s57 + $0x6c] sm:$0xf]
    %v2662 = vld [vmem:[%s57 + $0x70] sm:$0xf]
    %v2663 = vld [vmem:[%s57 + $0x74] sm:$0xf]
    %v2664 = vld [vmem:[%s57 + $0x78] sm:$0xf]
    %v2665 = vld [vmem:[%s57 + $0x7c] sm:$0xf]
    %v2667 = vrot.slane %v2633, 1
    %v2685 = vunpack.c.l.b16 %v2650
    %v2686 = vunpack.c.l.b16 %v2651
    %v2687 = vunpack.c.l.b16 %v2652
    %v2688 = vunpack.c.l.b16 %v2653
    %v2689 = vunpack.c.l.b16 %v2654
    %v2690 = vunpack.c.l.b16 %v2655
    %v2691 = vunpack.c.l.b16 %v2656
    %v2692 = vunpack.c.l.b16 %v2657
    %v2693 = vunpack.c.l.b16 %v2658
    %v2694 = vunpack.c.l.b16 %v2659
    %v2695 = vunpack.c.l.b16 %v2660
    %v2696 = vunpack.c.l.b16 %v2661
    %v2697 = vunpack.c.l.b16 %v2662
    %v2698 = vunpack.c.l.b16 %v2663
    %v2699 = vunpack.c.l.b16 %v2664
    %v2700 = vunpack.c.l.b16 %v2665
    %v2701 = vpack.c.b16 %v2686, %v2685
    %v2702 = vpack.c.b16 %v2688, %v2687
    %v2703 = vpack.c.b16 %v2690, %v2689
    %v2704 = vpack.c.b16 %v2692, %v2691
    %v2705 = vpack.c.b16 %v2694, %v2693
    %v2706 = vpack.c.b16 %v2696, %v2695
    %v2707 = vpack.c.b16 %v2698, %v2697
    %v2708 = vpack.c.b16 %v2700, %v2699
    %2717 = vmatprep.subr.bf16.mxu0 0
    %2718 = vmatpush1.bf16.msra.mxu0 %v2708
    %2719 = vmatprep.subr.bf16.mxu0 0
    %2720 = vmatpush1.bf16.msra.mxu0 %v2707
    %2721 = vmatprep.subr.bf16.mxu0 0
    %2722 = vmatpush1.bf16.msra.mxu0 %v2706
    %2723 = vmatprep.subr.bf16.mxu0 0
    %2724 = vmatpush1.bf16.msra.mxu0 %v2705
    %2725 = vmatprep.subr.bf16.mxu0 0
    %2726 = vmatpush1.bf16.msra.mxu0 %v2704
    %2727 = vmatprep.subr.bf16.mxu0 0
    %2728 = vmatpush1.bf16.msra.mxu0 %v2703
    %2729 = vmatprep.subr.bf16.mxu0 0
    %2730 = vmatpush1.bf16.msra.mxu0 %v2702
    %2731 = vmatprep.subr.bf16.mxu0 0
    %2732 = vmatpush1.bf16.msra.mxu0 %v2701
    %2733 = vmatprep.subr.bf16.mxu0 0
    %2734 = vmatpush2.bf16.msra.mxu0 0
    %2735 = vmatprep.subr.bf16.mxu0 0
    %2736 = vmatpush2.bf16.msra.mxu0 0
    %2737 = vmatprep.subr.bf16.mxu0 0
    %2738 = vmatpush2.bf16.msra.mxu0 0
    %2739 = vmatprep.subr.bf16.mxu0 0
    %2740 = vmatpush2.bf16.msra.mxu0 0
    %2741 = vmatprep.subr.bf16.mxu0 0
    %2742 = vmatpush2.bf16.msra.mxu0 0
    %2743 = vmatprep.subr.bf16.mxu0 0
    %2744 = vmatpush2.bf16.msra.mxu0 0
    %2745 = vmatprep.subr.bf16.mxu0 0
    %2746 = vmatpush2.bf16.msra.mxu0 0
    %2747 = vmatprep.subr.bf16.mxu0 0
    %2748 = vmatpush2.bf16.msra.mxu0 0
    %2749 = vmatprep.mubr.bf16.mxu0 0
    %2750 = vmatmul.mubr.bf16.gmra.mxu0 %v2667
    %v2751 = vpop.f32.mrf.mxu0
    %v2752 = vadd.f32 0.0, %v2751
    %v2753 = vpop.f32.mrf.mxu0
    %v2754 = vpop.f32.mrf.mxu0
    %v2755 = vpop.f32.mrf.mxu0
    %2756 = vdwg.mxu0
    %v2773 = vunpack.c.l.b16 %v2634
    %v2774 = vunpack.c.l.b16 %v2635
    %v2775 = vunpack.c.l.b16 %v2636
    %v2776 = vunpack.c.l.b16 %v2637
    %v2777 = vunpack.c.l.b16 %v2638
    %v2778 = vunpack.c.l.b16 %v2639
    %v2779 = vunpack.c.l.b16 %v2640
    %v2780 = vunpack.c.l.b16 %v2641
    %v2781 = vunpack.c.l.b16 %v2642
    %v2782 = vunpack.c.l.b16 %v2643
    %v2783 = vunpack.c.l.b16 %v2644
    %v2784 = vunpack.c.l.b16 %v2645
    %v2785 = vunpack.c.l.b16 %v2646
    %v2786 = vunpack.c.l.b16 %v2647
    %v2787 = vunpack.c.l.b16 %v2648
    %v2788 = vunpack.c.l.b16 %v2649
    %v2789 = vpack.c.b16 %v2774, %v2773
    %v2790 = vpack.c.b16 %v2776, %v2775
    %v2791 = vpack.c.b16 %v2778, %v2777
    %v2792 = vpack.c.b16 %v2780, %v2779
    %v2793 = vpack.c.b16 %v2782, %v2781
    %v2794 = vpack.c.b16 %v2784, %v2783
    %v2795 = vpack.c.b16 %v2786, %v2785
    %v2796 = vpack.c.b16 %v2788, %v2787
    %2805 = vmatprep.subr.bf16.mxu0 0
    %2806 = vmatpush1.bf16.msra.mxu0 %v2796
    %2807 = vmatprep.subr.bf16.mxu0 0
    %2808 = vmatpush1.bf16.msra.mxu0 %v2795
    %2809 = vmatprep.subr.bf16.mxu0 0
    %2810 = vmatpush1.bf16.msra.mxu0 %v2794
    %2811 = vmatprep.subr.bf16.mxu0 0
    %2812 = vmatpush1.bf16.msra.mxu0 %v2793
    %2813 = vmatprep.subr.bf16.mxu0 0
    %2814 = vmatpush1.bf16.msra.mxu0 %v2792
    %2815 = vmatprep.subr.bf16.mxu0 0
    %2816 = vmatpush1.bf16.msra.mxu0 %v2791
    %2817 = vmatprep.subr.bf16.mxu0 0
    %2818 = vmatpush1.bf16.msra.mxu0 %v2790
    %2819 = vmatprep.subr.bf16.mxu0 0
    %2820 = vmatpush1.bf16.msra.mxu0 %v2789
    %2821 = vmatprep.subr.bf16.mxu0 0
    %2822 = vmatpush2.bf16.msra.mxu0 0
    %2823 = vmatprep.subr.bf16.mxu0 0
    %2824 = vmatpush2.bf16.msra.mxu0 0
    %2825 = vmatprep.subr.bf16.mxu0 0
    %2826 = vmatpush2.bf16.msra.mxu0 0
    %2827 = vmatprep.subr.bf16.mxu0 0
    %2828 = vmatpush2.bf16.msra.mxu0 0
    %2829 = vmatprep.subr.bf16.mxu0 0
    %2830 = vmatpush2.bf16.msra.mxu0 0
    %2831 = vmatprep.subr.bf16.mxu0 0
    %2832 = vmatpush2.bf16.msra.mxu0 0
    %2833 = vmatprep.subr.bf16.mxu0 0
    %2834 = vmatpush2.bf16.msra.mxu0 0
    %2835 = vmatprep.subr.bf16.mxu0 0
    %2836 = vmatpush2.bf16.msra.mxu0 0
    %2837 = vmatprep.mubr.bf16.mxu0 0
    %2838 = vmatmul.mubr.bf16.gmra.mxu0 %v2633
    %v2839 = vpop.f32.mrf.mxu0
    %v2840 = vadd.f32 %v2752, %v2839
    %v2841 = vpop.f32.mrf.mxu0
    %v2842 = vpop.f32.mrf.mxu0
    %v2843 = vpop.f32.mrf.mxu0
    %2844 = vdwg.mxu0
    %v2845 = vld [vmem:[%s57 + $0x80] sm:$0xf]
    %v2846 = vld [vmem:[%s57 + $0x84] sm:$0xf]
    %v2847 = vld [vmem:[%s57 + $0x88] sm:$0xf]
    %v2848 = vld [vmem:[%s57 + $0x8c] sm:$0xf]
    %v2849 = vld [vmem:[%s57 + $0x90] sm:$0xf]
    %v2850 = vld [vmem:[%s57 + $0x94] sm:$0xf]
    %v2851 = vld [vmem:[%s57 + $0x98] sm:$0xf]
    %v2852 = vld [vmem:[%s57 + $0x9c] sm:$0xf]
    %v2853 = vld [vmem:[%s57 + $0xa0] sm:$0xf]
    %v2854 = vld [vmem:[%s57 + $0xa4] sm:$0xf]
    %v2855 = vld [vmem:[%s57 + $0xa8] sm:$0xf]
    %v2856 = vld [vmem:[%s57 + $0xac] sm:$0xf]
    %v2857 = vld [vmem:[%s57 + $0xb0] sm:$0xf]
    %v2858 = vld [vmem:[%s57 + $0xb4] sm:$0xf]
    %v2859 = vld [vmem:[%s57 + $0xb8] sm:$0xf]
    %v2860 = vld [vmem:[%s57 + $0xbc] sm:$0xf]
    %v2861 = vrot.slane %v2633, 2
    %v2879 = vunpack.c.l.b16 %v2845
    %v2880 = vunpack.c.l.b16 %v2846
    %v2881 = vunpack.c.l.b16 %v2847
    %v2882 = vunpack.c.l.b16 %v2848
    %v2883 = vunpack.c.l.b16 %v2849
    %v2884 = vunpack.c.l.b16 %v2850
    %v2885 = vunpack.c.l.b16 %v2851
    %v2886 = vunpack.c.l.b16 %v2852
    %v2887 = vunpack.c.l.b16 %v2853
    %v2888 = vunpack.c.l.b16 %v2854
    %v2889 = vunpack.c.l.b16 %v2855
    %v2890 = vunpack.c.l.b16 %v2856
    %v2891 = vunpack.c.l.b16 %v2857
    %v2892 = vunpack.c.l.b16 %v2858
    %v2893 = vunpack.c.l.b16 %v2859
    %v2894 = vunpack.c.l.b16 %v2860
    %v2895 = vpack.c.b16 %v2880, %v2879
    %v2896 = vpack.c.b16 %v2882, %v2881
    %v2897 = vpack.c.b16 %v2884, %v2883
    %v2898 = vpack.c.b16 %v2886, %v2885
    %v2899 = vpack.c.b16 %v2888, %v2887
    %v2900 = vpack.c.b16 %v2890, %v2889
    %v2901 = vpack.c.b16 %v2892, %v2891
    %v2902 = vpack.c.b16 %v2894, %v2893
    %2911 = vmatprep.subr.bf16.mxu0 0
    %2912 = vmatpush1.bf16.msra.mxu0 %v2902
    %2913 = vmatprep.subr.bf16.mxu0 0
    %2914 = vmatpush1.bf16.msra.mxu0 %v2901
    %2915 = vmatprep.subr.bf16.mxu0 0
    %2916 = vmatpush1.bf16.msra.mxu0 %v2900
    %2917 = vmatprep.subr.bf16.mxu0 0
    %2918 = vmatpush1.bf16.msra.mxu0 %v2899
    %2919 = vmatprep.subr.bf16.mxu0 0
    %2920 = vmatpush1.bf16.msra.mxu0 %v2898
    %2921 = vmatprep.subr.bf16.mxu0 0
    %2922 = vmatpush1.bf16.msra.mxu0 %v2897
    %2923 = vmatprep.subr.bf16.mxu0 0
    %2924 = vmatpush1.bf16.msra.mxu0 %v2896
    %2925 = vmatprep.subr.bf16.mxu0 0
    %2926 = vmatpush1.bf16.msra.mxu0 %v2895
    %2927 = vmatprep.subr.bf16.mxu0 0
    %2928 = vmatpush2.bf16.msra.mxu0 0
    %2929 = vmatprep.subr.bf16.mxu0 0
    %2930 = vmatpush2.bf16.msra.mxu0 0
    %2931 = vmatprep.subr.bf16.mxu0 0
    %2932 = vmatpush2.bf16.msra.mxu0 0
    %2933 = vmatprep.subr.bf16.mxu0 0
    %2934 = vmatpush2.bf16.msra.mxu0 0
    %2935 = vmatprep.subr.bf16.mxu0 0
    %2936 = vmatpush2.bf16.msra.mxu0 0
    %2937 = vmatprep.subr.bf16.mxu0 0
    %2938 = vmatpush2.bf16.msra.mxu0 0
    %2939 = vmatprep.subr.bf16.mxu0 0
    %2940 = vmatpush2.bf16.msra.mxu0 0
    %2941 = vmatprep.subr.bf16.mxu0 0
    %2942 = vmatpush2.bf16.msra.mxu0 0
    %2943 = vmatprep.mubr.bf16.mxu0 0
    %2944 = vmatmul.mubr.bf16.gmra.mxu0 %v2861
    %v2945 = vpop.f32.mrf.mxu0
    %v2946 = vadd.f32 0.0, %v2945
    %v2947 = vpop.f32.mrf.mxu0
    %v2948 = vpop.f32.mrf.mxu0
    %v2949 = vpop.f32.mrf.mxu0
    %2950 = vdwg.mxu0
    %v2951 = vadd.f32 %v2840, %v2946
    %v2952 = vld [vmem:[#allocation28] sm:$0x1]
    %v2954 = vlaneseq
    %v2955 = vshrl.u32 %v2954, 7
    %v2956 = vsub.s32 0, %v2955
    %v2957 = vrot.slane %v2952, %v2956
    %v2959 = vmul.f32 %v2951, %v2957
    %v2960 = vld [vmem:[#allocation26] sm:$0x1]
    %v2962 = vlaneseq
    %v2963 = vshrl.u32 %v2962, 7
    %v2964 = vsub.s32 0, %v2963
    %v2965 = vrot.slane %v2960, %v2964
    %v2967 = vadd.f32 %v2959, %v2965
    %v2968 = vadd.f32 %v2967, %v2582
    %v2969 = vmax.f32 %v2968, 0.0
    %v2970 = vpack.c.bf16 %v2969, %v2969
    %v2971 = vld [vmem:[%s69] sm:$0x7]
    %v2973 = vsel %vm2585, %v2971, 0
    %v2976 = vsel %vm2589, %v2970, 0
    %2978 = vmatprep.subr.bf16.mxu0 0
    %2979 = vmatpush1.bf16.msra.mxu0 0
    %2980 = vmatprep.subr.bf16.mxu0 0
    %2981 = vmatpush1.bf16.msra.mxu0 0
    %2982 = vmatprep.subr.bf16.mxu0 0
    %2983 = vmatpush1.bf16.msra.mxu0 0
    %2984 = vmatprep.subr.bf16.mxu0 0
    %2985 = vmatpush1.bf16.msra.mxu0 0
    %2986 = vmatprep.subr.bf16.mxu0 0
    %2987 = vmatpush1.bf16.msra.mxu0 0
    %2988 = vmatprep.subr.bf16.mxu0 0
    %2989 = vmatpush1.bf16.msra.mxu0 0
    %2990 = vmatprep.subr.bf16.mxu0 0
    %2991 = vmatpush1.bf16.msra.mxu0 0
    %2992 = vmatprep.subr.bf16.mxu0 0
    %2993 = vmatpush1.bf16.msra.mxu0 %v2976
    %2994 = vmatprep.subr.bf16.mxu0 0
    %2995 = vmatpush2.bf16.msra.mxu0 0
    %2996 = vmatprep.subr.bf16.mxu0 0
    %2997 = vmatpush2.bf16.msra.mxu0 0
    %2998 = vmatprep.subr.bf16.mxu0 0
    %2999 = vmatpush2.bf16.msra.mxu0 0
    %3000 = vmatprep.subr.bf16.mxu0 0
    %3001 = vmatpush2.bf16.msra.mxu0 0
    %3002 = vmatprep.subr.bf16.mxu0 0
    %3003 = vmatpush2.bf16.msra.mxu0 0
    %3004 = vmatprep.subr.bf16.mxu0 0
    %3005 = vmatpush2.bf16.msra.mxu0 0
    %3006 = vmatprep.subr.bf16.mxu0 0
    %3007 = vmatpush2.bf16.msra.mxu0 0
    %3008 = vmatprep.subr.bf16.mxu0 0
    %3009 = vmatpush2.bf16.msra.mxu0 0
    %3010 = vmatprep.mubr.bf16.mxu0 0
    %3011 = vmatmul.mubr.bf16.gmra.mxu0 %v2973
    %v3012 = vpop.f32.mrf.mxu0
    %v3013 = vadd.f32 0.0, %v3012
    %v3014 = vpop.f32.mrf.mxu0
    %v3015 = vpop.f32.mrf.mxu0
    %v3016 = vpop.f32.mrf.mxu0
    %3017 = vdwg.mxu0
    %v3018 = vpack.c.bf16 %v3013, %v3013
    %v3019 = vld [vmem:[%s73] sm:$0xff]
    %v3020 = vld [vmem:[%s73 + $0x8] sm:$0xff]
    %v3021 = vld [vmem:[%s73 + $0x10] sm:$0xff]
    %v3022 = vld [vmem:[%s73 + $0x18] sm:$0xff]
    %v3023 = vld [vmem:[%s73 + $0x20] sm:$0xff]
    %v3024 = vld [vmem:[%s73 + $0x28] sm:$0xff]
    %v3025 = vld [vmem:[%s73 + $0x30] sm:$0xff]
    %v3026 = vld [vmem:[%s73 + $0x38] sm:$0xff]
    %v3027 = vld [vmem:[%s73 + $0x40] sm:$0xff]
    %v3028 = vld [vmem:[%s73 + $0x48] sm:$0xff]
    %v3029 = vld [vmem:[%s73 + $0x50] sm:$0xff]
    %v3030 = vld [vmem:[%s73 + $0x58] sm:$0xff]
    %v3031 = vld [vmem:[%s73 + $0x60] sm:$0xff]
    %v3032 = vld [vmem:[%s73 + $0x68] sm:$0xff]
    %v3033 = vld [vmem:[%s73 + $0x70] sm:$0xff]
    %v3034 = vld [vmem:[%s73 + $0x78] sm:$0xff]
    %v3035 = vld [vmem:[%s73 + $0x80] sm:$0xff]
    %v3036 = vld [vmem:[%s73 + $0x88] sm:$0xff]
    %v3037 = vld [vmem:[%s73 + $0x90] sm:$0xff]
    %v3038 = vld [vmem:[%s73 + $0x98] sm:$0xff]
    %v3039 = vld [vmem:[%s73 + $0xa0] sm:$0xff]
    %v3040 = vld [vmem:[%s73 + $0xa8] sm:$0xff]
    %v3041 = vld [vmem:[%s73 + $0xb0] sm:$0xff]
    %v3042 = vld [vmem:[%s73 + $0xb8] sm:$0xff]
    %v3043 = vld [vmem:[%s73 + $0xc0] sm:$0xff]
    %v3044 = vld [vmem:[%s73 + $0xc8] sm:$0xff]
    %v3045 = vld [vmem:[%s73 + $0xd0] sm:$0xff]
    %v3046 = vld [vmem:[%s73 + $0xd8] sm:$0xff]
    %v3047 = vld [vmem:[%s73 + $0xe0] sm:$0xff]
    %v3048 = vld [vmem:[%s73 + $0xe8] sm:$0xff]
    %v3049 = vld [vmem:[%s73 + $0xf0] sm:$0xff]
    %v3050 = vld [vmem:[%s73 + $0xf8] sm:$0xff]
    %v3052 = vrot.slane %v3018, 1
    %v3070 = vunpack.c.l.b16 %v3035
    %v3071 = vunpack.c.h.b16 %v3035
    %v3072 = vunpack.c.l.b16 %v3036
    %v3073 = vunpack.c.h.b16 %v3036
    %v3074 = vunpack.c.l.b16 %v3037
    %v3075 = vunpack.c.h.b16 %v3037
    %v3076 = vunpack.c.l.b16 %v3038
    %v3077 = vunpack.c.h.b16 %v3038
    %v3078 = vunpack.c.l.b16 %v3039
    %v3079 = vunpack.c.h.b16 %v3039
    %v3080 = vunpack.c.l.b16 %v3040
    %v3081 = vunpack.c.h.b16 %v3040
    %v3082 = vunpack.c.l.b16 %v3041
    %v3083 = vunpack.c.h.b16 %v3041
    %v3084 = vunpack.c.l.b16 %v3042
    %v3085 = vunpack.c.h.b16 %v3042
    %v3086 = vunpack.c.l.b16 %v3043
    %v3087 = vunpack.c.h.b16 %v3043
    %v3088 = vunpack.c.l.b16 %v3044
    %v3089 = vunpack.c.h.b16 %v3044
    %v3090 = vunpack.c.l.b16 %v3045
    %v3091 = vunpack.c.h.b16 %v3045
    %v3092 = vunpack.c.l.b16 %v3046
    %v3093 = vunpack.c.h.b16 %v3046
    %v3094 = vunpack.c.l.b16 %v3047
    %v3095 = vunpack.c.h.b16 %v3047
    %v3096 = vunpack.c.l.b16 %v3048
    %v3097 = vunpack.c.h.b16 %v3048
    %v3098 = vunpack.c.l.b16 %v3049
    %v3099 = vunpack.c.h.b16 %v3049
    %v3100 = vunpack.c.l.b16 %v3050
    %v3101 = vunpack.c.h.b16 %v3050
    %v3102 = vpack.c.b16 %v3072, %v3070
    %v3103 = vpack.c.b16 %v3073, %v3071
    %v3104 = vpack.c.b16 %v3076, %v3074
    %v3105 = vpack.c.b16 %v3077, %v3075
    %v3106 = vpack.c.b16 %v3080, %v3078
    %v3107 = vpack.c.b16 %v3081, %v3079
    %v3108 = vpack.c.b16 %v3084, %v3082
    %v3109 = vpack.c.b16 %v3085, %v3083
    %v3110 = vpack.c.b16 %v3088, %v3086
    %v3111 = vpack.c.b16 %v3089, %v3087
    %v3112 = vpack.c.b16 %v3092, %v3090
    %v3113 = vpack.c.b16 %v3093, %v3091
    %v3114 = vpack.c.b16 %v3096, %v3094
    %v3115 = vpack.c.b16 %v3097, %v3095
    %v3116 = vpack.c.b16 %v3100, %v3098
    %v3117 = vpack.c.b16 %v3101, %v3099
    %3134 = vmatprep.subr.bf16.mxu0 %v3117
    %3135 = vmatpush1.bf16.msra.mxu0 %v3116
    %3136 = vmatprep.subr.bf16.mxu0 %v3115
    %3137 = vmatpush1.bf16.msra.mxu0 %v3114
    %3138 = vmatprep.subr.bf16.mxu0 %v3113
    %3139 = vmatpush1.bf16.msra.mxu0 %v3112
    %3140 = vmatprep.subr.bf16.mxu0 %v3111
    %3141 = vmatpush1.bf16.msra.mxu0 %v3110
    %3142 = vmatprep.subr.bf16.mxu0 %v3109
    %3143 = vmatpush1.bf16.msra.mxu0 %v3108
    %3144 = vmatprep.subr.bf16.mxu0 %v3107
    %3145 = vmatpush1.bf16.msra.mxu0 %v3106
    %3146 = vmatprep.subr.bf16.mxu0 %v3105
    %3147 = vmatpush1.bf16.msra.mxu0 %v3104
    %3148 = vmatprep.subr.bf16.mxu0 %v3103
    %3149 = vmatpush1.bf16.msra.mxu0 %v3102
    %3150 = vmatprep.subr.bf16.mxu0 0
    %3151 = vmatpush2.bf16.msra.mxu0 0
    %3152 = vmatprep.subr.bf16.mxu0 0
    %3153 = vmatpush2.bf16.msra.mxu0 0
    %3154 = vmatprep.subr.bf16.mxu0 0
    %3155 = vmatpush2.bf16.msra.mxu0 0
    %3156 = vmatprep.subr.bf16.mxu0 0
    %3157 = vmatpush2.bf16.msra.mxu0 0
    %3158 = vmatprep.subr.bf16.mxu0 0
    %3159 = vmatpush2.bf16.msra.mxu0 0
    %3160 = vmatprep.subr.bf16.mxu0 0
    %3161 = vmatpush2.bf16.msra.mxu0 0
    %3162 = vmatprep.subr.bf16.mxu0 0
    %3163 = vmatpush2.bf16.msra.mxu0 0
    %3164 = vmatprep.subr.bf16.mxu0 0
    %3165 = vmatpush2.bf16.msra.mxu0 0
    %3166 = vmatprep.mubr.bf16.mxu0 0
    %3167 = vmatmul.mubr.bf16.gmra.mxu0 %v3052
    %v3168 = vpop.f32.mrf.mxu0
    %v3169 = vadd.f32 0.0, %v3168
    %v3170 = vpop.f32.mrf.mxu0
    %v3171 = vadd.f32 0.0, %v3170
    %v3172 = vpop.f32.mrf.mxu0
    %v3173 = vpop.f32.mrf.mxu0
    %3174 = vdwg.mxu0
    %v3191 = vunpack.c.l.b16 %v3019
    %v3192 = vunpack.c.h.b16 %v3019
    %v3193 = vunpack.c.l.b16 %v3020
    %v3194 = vunpack.c.h.b16 %v3020
    %v3195 = vunpack.c.l.b16 %v3021
    %v3196 = vunpack.c.h.b16 %v3021
    %v3197 = vunpack.c.l.b16 %v3022
    %v3198 = vunpack.c.h.b16 %v3022
    %v3199 = vunpack.c.l.b16 %v3023
    %v3200 = vunpack.c.h.b16 %v3023
    %v3201 = vunpack.c.l.b16 %v3024
    %v3202 = vunpack.c.h.b16 %v3024
    %v3203 = vunpack.c.l.b16 %v3025
    %v3204 = vunpack.c.h.b16 %v3025
    %v3205 = vunpack.c.l.b16 %v3026
    %v3206 = vunpack.c.h.b16 %v3026
    %v3207 = vunpack.c.l.b16 %v3027
    %v3208 = vunpack.c.h.b16 %v3027
    %v3209 = vunpack.c.l.b16 %v3028
    %v3210 = vunpack.c.h.b16 %v3028
    %v3211 = vunpack.c.l.b16 %v3029
    %v3212 = vunpack.c.h.b16 %v3029
    %v3213 = vunpack.c.l.b16 %v3030
    %v3214 = vunpack.c.h.b16 %v3030
    %v3215 = vunpack.c.l.b16 %v3031
    %v3216 = vunpack.c.h.b16 %v3031
    %v3217 = vunpack.c.l.b16 %v3032
    %v3218 = vunpack.c.h.b16 %v3032
    %v3219 = vunpack.c.l.b16 %v3033
    %v3220 = vunpack.c.h.b16 %v3033
    %v3221 = vunpack.c.l.b16 %v3034
    %v3222 = vunpack.c.h.b16 %v3034
    %v3223 = vpack.c.b16 %v3193, %v3191
    %v3224 = vpack.c.b16 %v3194, %v3192
    %v3225 = vpack.c.b16 %v3197, %v3195
    %v3226 = vpack.c.b16 %v3198, %v3196
    %v3227 = vpack.c.b16 %v3201, %v3199
    %v3228 = vpack.c.b16 %v3202, %v3200
    %v3229 = vpack.c.b16 %v3205, %v3203
    %v3230 = vpack.c.b16 %v3206, %v3204
    %v3231 = vpack.c.b16 %v3209, %v3207
    %v3232 = vpack.c.b16 %v3210, %v3208
    %v3233 = vpack.c.b16 %v3213, %v3211
    %v3234 = vpack.c.b16 %v3214, %v3212
    %v3235 = vpack.c.b16 %v3217, %v3215
    %v3236 = vpack.c.b16 %v3218, %v3216
    %v3237 = vpack.c.b16 %v3221, %v3219
    %v3238 = vpack.c.b16 %v3222, %v3220
    %3255 = vmatprep.subr.bf16.mxu0 %v3238
    %3256 = vmatpush1.bf16.msra.mxu0 %v3237
    %3257 = vmatprep.subr.bf16.mxu0 %v3236
    %3258 = vmatpush1.bf16.msra.mxu0 %v3235
    %3259 = vmatprep.subr.bf16.mxu0 %v3234
    %3260 = vmatpush1.bf16.msra.mxu0 %v3233
    %3261 = vmatprep.subr.bf16.mxu0 %v3232
    %3262 = vmatpush1.bf16.msra.mxu0 %v3231
    %3263 = vmatprep.subr.bf16.mxu0 %v3230
    %3264 = vmatpush1.bf16.msra.mxu0 %v3229
    %3265 = vmatprep.subr.bf16.mxu0 %v3228
    %3266 = vmatpush1.bf16.msra.mxu0 %v3227
    %3267 = vmatprep.subr.bf16.mxu0 %v3226
    %3268 = vmatpush1.bf16.msra.mxu0 %v3225
    %3269 = vmatprep.subr.bf16.mxu0 %v3224
    %3270 = vmatpush1.bf16.msra.mxu0 %v3223
    %3271 = vmatprep.subr.bf16.mxu0 0
    %3272 = vmatpush2.bf16.msra.mxu0 0
    %3273 = vmatprep.subr.bf16.mxu0 0
    %3274 = vmatpush2.bf16.msra.mxu0 0
    %3275 = vmatprep.subr.bf16.mxu0 0
    %3276 = vmatpush2.bf16.msra.mxu0 0
    %3277 = vmatprep.subr.bf16.mxu0 0
    %3278 = vmatpush2.bf16.msra.mxu0 0
    %3279 = vmatprep.subr.bf16.mxu0 0
    %3280 = vmatpush2.bf16.msra.mxu0 0
    %3281 = vmatprep.subr.bf16.mxu0 0
    %3282 = vmatpush2.bf16.msra.mxu0 0
    %3283 = vmatprep.subr.bf16.mxu0 0
    %3284 = vmatpush2.bf16.msra.mxu0 0
    %3285 = vmatprep.subr.bf16.mxu0 0
    %3286 = vmatpush2.bf16.msra.mxu0 0
    %3287 = vmatprep.mubr.bf16.mxu0 0
    %3288 = vmatmul.mubr.bf16.gmra.mxu0 %v3018
    %v3289 = vpop.f32.mrf.mxu0
    %v3290 = vadd.f32 %v3169, %v3289
    %v3291 = vpop.f32.mrf.mxu0
    %v3292 = vadd.f32 %v3171, %v3291
    %v3293 = vpop.f32.mrf.mxu0
    %v3294 = vpop.f32.mrf.mxu0
    %3295 = vdwg.mxu0
    %v3296 = vld [vmem:[%s73 + $0x100] sm:$0xff]
    %v3297 = vld [vmem:[%s73 + $0x108] sm:$0xff]
    %v3298 = vld [vmem:[%s73 + $0x110] sm:$0xff]
    %v3299 = vld [vmem:[%s73 + $0x118] sm:$0xff]
    %v3300 = vld [vmem:[%s73 + $0x120] sm:$0xff]
    %v3301 = vld [vmem:[%s73 + $0x128] sm:$0xff]
    %v3302 = vld [vmem:[%s73 + $0x130] sm:$0xff]
    %v3303 = vld [vmem:[%s73 + $0x138] sm:$0xff]
    %v3304 = vld [vmem:[%s73 + $0x140] sm:$0xff]
    %v3305 = vld [vmem:[%s73 + $0x148] sm:$0xff]
    %v3306 = vld [vmem:[%s73 + $0x150] sm:$0xff]
    %v3307 = vld [vmem:[%s73 + $0x158] sm:$0xff]
    %v3308 = vld [vmem:[%s73 + $0x160] sm:$0xff]
    %v3309 = vld [vmem:[%s73 + $0x168] sm:$0xff]
    %v3310 = vld [vmem:[%s73 + $0x170] sm:$0xff]
    %v3311 = vld [vmem:[%s73 + $0x178] sm:$0xff]
    %v3312 = vrot.slane %v3018, 2
    %v3330 = vunpack.c.l.b16 %v3296
    %v3331 = vunpack.c.h.b16 %v3296
    %v3332 = vunpack.c.l.b16 %v3297
    %v3333 = vunpack.c.h.b16 %v3297
    %v3334 = vunpack.c.l.b16 %v3298
    %v3335 = vunpack.c.h.b16 %v3298
    %v3336 = vunpack.c.l.b16 %v3299
    %v3337 = vunpack.c.h.b16 %v3299
    %v3338 = vunpack.c.l.b16 %v3300
    %v3339 = vunpack.c.h.b16 %v3300
    %v3340 = vunpack.c.l.b16 %v3301
    %v3341 = vunpack.c.h.b16 %v3301
    %v3342 = vunpack.c.l.b16 %v3302
    %v3343 = vunpack.c.h.b16 %v3302
    %v3344 = vunpack.c.l.b16 %v3303
    %v3345 = vunpack.c.h.b16 %v3303
    %v3346 = vunpack.c.l.b16 %v3304
    %v3347 = vunpack.c.h.b16 %v3304
    %v3348 = vunpack.c.l.b16 %v3305
    %v3349 = vunpack.c.h.b16 %v3305
    %v3350 = vunpack.c.l.b16 %v3306
    %v3351 = vunpack.c.h.b16 %v3306
    %v3352 = vunpack.c.l.b16 %v3307
    %v3353 = vunpack.c.h.b16 %v3307
    %v3354 = vunpack.c.l.b16 %v3308
    %v3355 = vunpack.c.h.b16 %v3308
    %v3356 = vunpack.c.l.b16 %v3309
    %v3357 = vunpack.c.h.b16 %v3309
    %v3358 = vunpack.c.l.b16 %v3310
    %v3359 = vunpack.c.h.b16 %v3310
    %v3360 = vunpack.c.l.b16 %v3311
    %v3361 = vunpack.c.h.b16 %v3311
    %v3362 = vpack.c.b16 %v3332, %v3330
    %v3363 = vpack.c.b16 %v3333, %v3331
    %v3364 = vpack.c.b16 %v3336, %v3334
    %v3365 = vpack.c.b16 %v3337, %v3335
    %v3366 = vpack.c.b16 %v3340, %v3338
    %v3367 = vpack.c.b16 %v3341, %v3339
    %v3368 = vpack.c.b16 %v3344, %v3342
    %v3369 = vpack.c.b16 %v3345, %v3343
    %v3370 = vpack.c.b16 %v3348, %v3346
    %v3371 = vpack.c.b16 %v3349, %v3347
    %v3372 = vpack.c.b16 %v3352, %v3350
    %v3373 = vpack.c.b16 %v3353, %v3351
    %v3374 = vpack.c.b16 %v3356, %v3354
    %v3375 = vpack.c.b16 %v3357, %v3355
    %v3376 = vpack.c.b16 %v3360, %v3358
    %v3377 = vpack.c.b16 %v3361, %v3359
    %3394 = vmatprep.subr.bf16.mxu0 %v3377
    %3395 = vmatpush1.bf16.msra.mxu0 %v3376
    %3396 = vmatprep.subr.bf16.mxu0 %v3375
    %3397 = vmatpush1.bf16.msra.mxu0 %v3374
    %3398 = vmatprep.subr.bf16.mxu0 %v3373
    %3399 = vmatpush1.bf16.msra.mxu0 %v3372
    %3400 = vmatprep.subr.bf16.mxu0 %v3371
    %3401 = vmatpush1.bf16.msra.mxu0 %v3370
    %3402 = vmatprep.subr.bf16.mxu0 %v3369
    %3403 = vmatpush1.bf16.msra.mxu0 %v3368
    %3404 = vmatprep.subr.bf16.mxu0 %v3367
    %3405 = vmatpush1.bf16.msra.mxu0 %v3366
    %3406 = vmatprep.subr.bf16.mxu0 %v3365
    %3407 = vmatpush1.bf16.msra.mxu0 %v3364
    %3408 = vmatprep.subr.bf16.mxu0 %v3363
    %3409 = vmatpush1.bf16.msra.mxu0 %v3362
    %3410 = vmatprep.subr.bf16.mxu0 0
    %3411 = vmatpush2.bf16.msra.mxu0 0
    %3412 = vmatprep.subr.bf16.mxu0 0
    %3413 = vmatpush2.bf16.msra.mxu0 0
    %3414 = vmatprep.subr.bf16.mxu0 0
    %3415 = vmatpush2.bf16.msra.mxu0 0
    %3416 = vmatprep.subr.bf16.mxu0 0
    %3417 = vmatpush2.bf16.msra.mxu0 0
    %3418 = vmatprep.subr.bf16.mxu0 0
    %3419 = vmatpush2.bf16.msra.mxu0 0
    %3420 = vmatprep.subr.bf16.mxu0 0
    %3421 = vmatpush2.bf16.msra.mxu0 0
    %3422 = vmatprep.subr.bf16.mxu0 0
    %3423 = vmatpush2.bf16.msra.mxu0 0
    %3424 = vmatprep.subr.bf16.mxu0 0
    %3425 = vmatpush2.bf16.msra.mxu0 0
    %3426 = vmatprep.mubr.bf16.mxu0 0
    %3427 = vmatmul.mubr.bf16.gmra.mxu0 %v3312
    %v3428 = vpop.f32.mrf.mxu0
    %v3429 = vadd.f32 0.0, %v3428
    %v3430 = vpop.f32.mrf.mxu0
    %v3431 = vadd.f32 0.0, %v3430
    %v3432 = vpop.f32.mrf.mxu0
    %v3433 = vpop.f32.mrf.mxu0
    %3434 = vdwg.mxu0
    %v3435 = vadd.f32 %v3290, %v3429
    %v3436 = vadd.f32 %v3292, %v3431
    %v3437 = vld [vmem:[#allocation37] sm:$0x3]
    %v3439 = vlaneseq
    %v3440 = vshrl.u32 %v3439, 7
    %v3441 = vsub.s32 0, %v3440
    %v3442 = vrot.slane %v3437, %v3441
    %v3443 = vlaneseq
    %v3444 = vshrl.u32 %v3443, 7
    %v3445 = vsub.s32 1, %v3444
    %v3446 = vrot.slane %v3437, %v3445
    %v3449 = vmul.f32 %v3435, %v3442
    %v3450 = vmul.f32 %v3436, %v3446
    %v3451 = vld [vmem:[#allocation35] sm:$0x3]
    %v3453 = vlaneseq
    %v3454 = vshrl.u32 %v3453, 7
    %v3455 = vsub.s32 0, %v3454
    %v3456 = vrot.slane %v3451, %v3455
    %v3457 = vlaneseq
    %v3458 = vshrl.u32 %v3457, 7
    %v3459 = vsub.s32 1, %v3458
    %v3460 = vrot.slane %v3451, %v3459
    %v3463 = vadd.f32 %v3449, %v3456
    %v3464 = vadd.f32 %v3450, %v3460
    %v3465 = vmax.f32 %v3463, 0.0
    %v3466 = vmax.f32 %v3464, 0.0
    %v3467 = vld [vmem:[#allocation44] sm:$0x1]
    %v3469 = vsel %vm2585, %v3467, 0
    %3471 = vmatprep.subr.bf16.mxu0 0
    %3472 = vmatpush1.bf16.msra.mxu0 0
    %3473 = vmatprep.subr.bf16.mxu0 0
    %3474 = vmatpush1.bf16.msra.mxu0 0
    %3475 = vmatprep.subr.bf16.mxu0 0
    %3476 = vmatpush1.bf16.msra.mxu0 0
    %3477 = vmatprep.subr.bf16.mxu0 0
    %3478 = vmatpush1.bf16.msra.mxu0 0
    %3479 = vmatprep.subr.bf16.mxu0 0
    %3480 = vmatpush1.bf16.msra.mxu0 0
    %3481 = vmatprep.subr.bf16.mxu0 0
    %3482 = vmatpush1.bf16.msra.mxu0 0
    %3483 = vmatprep.subr.bf16.mxu0 0
    %3484 = vmatpush1.bf16.msra.mxu0 0
    %3485 = vmatprep.subr.bf16.mxu0 0
    %3486 = vmatpush1.bf16.msra.mxu0 %v2976
    %3487 = vmatprep.subr.bf16.mxu0 0
    %3488 = vmatpush2.bf16.msra.mxu0 0
    %3489 = vmatprep.subr.bf16.mxu0 0
    %3490 = vmatpush2.bf16.msra.mxu0 0
    %3491 = vmatprep.subr.bf16.mxu0 0
    %3492 = vmatpush2.bf16.msra.mxu0 0
    %3493 = vmatprep.subr.bf16.mxu0 0
    %3494 = vmatpush2.bf16.msra.mxu0 0
    %3495 = vmatprep.subr.bf16.mxu0 0
    %3496 = vmatpush2.bf16.msra.mxu0 0
    %3497 = vmatprep.subr.bf16.mxu0 0
    %3498 = vmatpush2.bf16.msra.mxu0 0
    %3499 = vmatprep.subr.bf16.mxu0 0
    %3500 = vmatpush2.bf16.msra.mxu0 0
    %3501 = vmatprep.subr.bf16.mxu0 0
    %3502 = vmatpush2.bf16.msra.mxu0 0
    %3503 = vmatprep.mubr.bf16.mxu0 0
    %3504 = vmatmul.mubr.bf16.gmra.mxu0 %v3469
    %v3505 = vpop.f32.mrf.mxu0
    %v3506 = vadd.f32 0.0, %v3505
    %v3507 = vpop.f32.mrf.mxu0
    %v3508 = vpop.f32.mrf.mxu0
    %v3509 = vpop.f32.mrf.mxu0
    %3510 = vdwg.mxu0
    %v3511 = vpack.c.bf16 %v3506, %v3506
    %v3512 = vld [vmem:[#allocation47] sm:$0xff]
    %v3513 = vld [vmem:[#allocation47 + $0x8] sm:$0xff]
    %v3514 = vld [vmem:[#allocation47 + $0x10] sm:$0xff]
    %v3515 = vld [vmem:[#allocation47 + $0x18] sm:$0xff]
    %v3516 = vld [vmem:[#allocation47 + $0x20] sm:$0xff]
    %v3517 = vld [vmem:[#allocation47 + $0x28] sm:$0xff]
    %v3518 = vld [vmem:[#allocation47 + $0x30] sm:$0xff]
    %v3519 = vld [vmem:[#allocation47 + $0x38] sm:$0xff]
    %v3520 = vld [vmem:[#allocation47 + $0x40] sm:$0xff]
    %v3521 = vld [vmem:[#allocation47 + $0x48] sm:$0xff]
    %v3522 = vld [vmem:[#allocation47 + $0x50] sm:$0xff]
    %v3523 = vld [vmem:[#allocation47 + $0x58] sm:$0xff]
    %v3524 = vld [vmem:[#allocation47 + $0x60] sm:$0xff]
    %v3525 = vld [vmem:[#allocation47 + $0x68] sm:$0xff]
    %v3526 = vld [vmem:[#allocation47 + $0x70] sm:$0xff]
    %v3527 = vld [vmem:[#allocation47 + $0x78] sm:$0xff]
    %v3544 = vunpack.c.l.b16 %v3512
    %v3545 = vunpack.c.h.b16 %v3512
    %v3546 = vunpack.c.l.b16 %v3513
    %v3547 = vunpack.c.h.b16 %v3513
    %v3548 = vunpack.c.l.b16 %v3514
    %v3549 = vunpack.c.h.b16 %v3514
    %v3550 = vunpack.c.l.b16 %v3515
    %v3551 = vunpack.c.h.b16 %v3515
    %v3552 = vunpack.c.l.b16 %v3516
    %v3553 = vunpack.c.h.b16 %v3516
    %v3554 = vunpack.c.l.b16 %v3517
    %v3555 = vunpack.c.h.b16 %v3517
    %v3556 = vunpack.c.l.b16 %v3518
    %v3557 = vunpack.c.h.b16 %v3518
    %v3558 = vunpack.c.l.b16 %v3519
    %v3559 = vunpack.c.h.b16 %v3519
    %v3560 = vunpack.c.l.b16 %v3520
    %v3561 = vunpack.c.h.b16 %v3520
    %v3562 = vunpack.c.l.b16 %v3521
    %v3563 = vunpack.c.h.b16 %v3521
    %v3564 = vunpack.c.l.b16 %v3522
    %v3565 = vunpack.c.h.b16 %v3522
    %v3566 = vunpack.c.l.b16 %v3523
    %v3567 = vunpack.c.h.b16 %v3523
    %v3568 = vunpack.c.l.b16 %v3524
    %v3569 = vunpack.c.h.b16 %v3524
    %v3570 = vunpack.c.l.b16 %v3525
    %v3571 = vunpack.c.h.b16 %v3525
    %v3572 = vunpack.c.l.b16 %v3526
    %v3573 = vunpack.c.h.b16 %v3526
    %v3574 = vunpack.c.l.b16 %v3527
    %v3575 = vunpack.c.h.b16 %v3527
    %v3576 = vpack.c.b16 %v3546, %v3544
    %v3577 = vpack.c.b16 %v3547, %v3545
    %v3578 = vpack.c.b16 %v3550, %v3548
    %v3579 = vpack.c.b16 %v3551, %v3549
    %v3580 = vpack.c.b16 %v3554, %v3552
    %v3581 = vpack.c.b16 %v3555, %v3553
    %v3582 = vpack.c.b16 %v3558, %v3556
    %v3583 = vpack.c.b16 %v3559, %v3557
    %v3584 = vpack.c.b16 %v3562, %v3560
    %v3585 = vpack.c.b16 %v3563, %v3561
    %v3586 = vpack.c.b16 %v3566, %v3564
    %v3587 = vpack.c.b16 %v3567, %v3565
    %v3588 = vpack.c.b16 %v3570, %v3568
    %v3589 = vpack.c.b16 %v3571, %v3569
    %v3590 = vpack.c.b16 %v3574, %v3572
    %v3591 = vpack.c.b16 %v3575, %v3573
    %3608 = vmatprep.subr.bf16.mxu0 %v3591
    %3609 = vmatpush1.bf16.msra.mxu0 %v3590
    %3610 = vmatprep.subr.bf16.mxu0 %v3589
    %3611 = vmatpush1.bf16.msra.mxu0 %v3588
    %3612 = vmatprep.subr.bf16.mxu0 %v3587
    %3613 = vmatpush1.bf16.msra.mxu0 %v3586
    %3614 = vmatprep.subr.bf16.mxu0 %v3585
    %3615 = vmatpush1.bf16.msra.mxu0 %v3584
    %3616 = vmatprep.subr.bf16.mxu0 %v3583
    %3617 = vmatpush1.bf16.msra.mxu0 %v3582
    %3618 = vmatprep.subr.bf16.mxu0 %v3581
    %3619 = vmatpush1.bf16.msra.mxu0 %v3580
    %3620 = vmatprep.subr.bf16.mxu0 %v3579
    %3621 = vmatpush1.bf16.msra.mxu0 %v3578
    %3622 = vmatprep.subr.bf16.mxu0 %v3577
    %3623 = vmatpush1.bf16.msra.mxu0 %v3576
    %3624 = vmatprep.subr.bf16.mxu0 0
    %3625 = vmatpush2.bf16.msra.mxu0 0
    %3626 = vmatprep.subr.bf16.mxu0 0
    %3627 = vmatpush2.bf16.msra.mxu0 0
    %3628 = vmatprep.subr.bf16.mxu0 0
    %3629 = vmatpush2.bf16.msra.mxu0 0
    %3630 = vmatprep.subr.bf16.mxu0 0
    %3631 = vmatpush2.bf16.msra.mxu0 0
    %3632 = vmatprep.subr.bf16.mxu0 0
    %3633 = vmatpush2.bf16.msra.mxu0 0
    %3634 = vmatprep.subr.bf16.mxu0 0
    %3635 = vmatpush2.bf16.msra.mxu0 0
    %3636 = vmatprep.subr.bf16.mxu0 0
    %3637 = vmatpush2.bf16.msra.mxu0 0
    %3638 = vmatprep.subr.bf16.mxu0 0
    %3639 = vmatpush2.bf16.msra.mxu0 0
    %3640 = vmatprep.mubr.bf16.mxu0 0
    %3641 = vmatmul.mubr.bf16.gmra.mxu0 %v3511
    %v3642 = vpop.f32.mrf.mxu0
    %v3643 = vadd.f32 0.0, %v3642
    %v3644 = vpop.f32.mrf.mxu0
    %v3645 = vadd.f32 0.0, %v3644
    %v3646 = vpop.f32.mrf.mxu0
    %v3647 = vpop.f32.mrf.mxu0
    %3648 = vdwg.mxu0
    %v3649 = vld [vmem:[#allocation46] sm:$0x3]
    %v3651 = vlaneseq
    %v3652 = vshrl.u32 %v3651, 7
    %v3653 = vsub.s32 0, %v3652
    %v3654 = vrot.slane %v3649, %v3653
    %v3655 = vlaneseq
    %v3656 = vshrl.u32 %v3655, 7
    %v3657 = vsub.s32 1, %v3656
    %v3658 = vrot.slane %v3649, %v3657
    %v3661 = vmul.f32 %v3643, %v3654
    %v3662 = vmul.f32 %v3645, %v3658
    %v3663 = vld [vmem:[#allocation43] sm:$0x3]
    %v3665 = vlaneseq
    %v3666 = vshrl.u32 %v3665, 7
    %v3667 = vsub.s32 0, %v3666
    %v3668 = vrot.slane %v3663, %v3667
    %v3669 = vlaneseq
    %v3670 = vshrl.u32 %v3669, 7
    %v3671 = vsub.s32 1, %v3670
    %v3672 = vrot.slane %v3663, %v3671
    %v3675 = vadd.f32 %v3661, %v3668
    %v3676 = vadd.f32 %v3662, %v3672
    %v3677 = vpack.c.bf16 %v3465, %v3465
    %v3678 = vpack.c.bf16 %v3466, %v3466
    %v3679 = vld [vmem:[%s77] sm:$0x7]
    %v3681 = vsel %vm2585, %v3679, 0
    %v3684 = vsel %vm2589, %v3677, 0
    %v3687 = vsel %vm2589, %v3678, 0
    %3689 = vmatprep.subr.bf16.mxu0 0
    %3690 = vmatpush1.bf16.msra.mxu0 0
    %3691 = vmatprep.subr.bf16.mxu0 0
    %3692 = vmatpush1.bf16.msra.mxu0 0
    %3693 = vmatprep.subr.bf16.mxu0 0
    %3694 = vmatpush1.bf16.msra.mxu0 0
    %3695 = vmatprep.subr.bf16.mxu0 0
    %3696 = vmatpush1.bf16.msra.mxu0 0
    %3697 = vmatprep.subr.bf16.mxu0 0
    %3698 = vmatpush1.bf16.msra.mxu0 0
    %3699 = vmatprep.subr.bf16.mxu0 0
    %3700 = vmatpush1.bf16.msra.mxu0 0
    %3701 = vmatprep.subr.bf16.mxu0 0
    %3702 = vmatpush1.bf16.msra.mxu0 0
    %3703 = vmatprep.subr.bf16.mxu0 %v3687
    %3704 = vmatpush1.bf16.msra.mxu0 %v3684
    %3705 = vmatprep.subr.bf16.mxu0 0
    %3706 = vmatpush2.bf16.msra.mxu0 0
    %3707 = vmatprep.subr.bf16.mxu0 0
    %3708 = vmatpush2.bf16.msra.mxu0 0
    %3709 = vmatprep.subr.bf16.mxu0 0
    %3710 = vmatpush2.bf16.msra.mxu0 0
    %3711 = vmatprep.subr.bf16.mxu0 0
    %3712 = vmatpush2.bf16.msra.mxu0 0
    %3713 = vmatprep.subr.bf16.mxu0 0
    %3714 = vmatpush2.bf16.msra.mxu0 0
    %3715 = vmatprep.subr.bf16.mxu0 0
    %3716 = vmatpush2.bf16.msra.mxu0 0
    %3717 = vmatprep.subr.bf16.mxu0 0
    %3718 = vmatpush2.bf16.msra.mxu0 0
    %3719 = vmatprep.subr.bf16.mxu0 0
    %3720 = vmatpush2.bf16.msra.mxu0 0
    %3721 = vmatprep.mubr.bf16.mxu0 0
    %3722 = vmatmul.mubr.bf16.gmra.mxu0 %v3681
    %v3723 = vpop.f32.mrf.mxu0
    %v3724 = vadd.f32 0.0, %v3723
    %v3725 = vpop.f32.mrf.mxu0
    %v3726 = vadd.f32 0.0, %v3725
    %v3727 = vpop.f32.mrf.mxu0
    %v3728 = vpop.f32.mrf.mxu0
    %3729 = vdwg.mxu0
    %v3730 = vpack.c.bf16 %v3724, %v3724
    %v3731 = vpack.c.bf16 %v3726, %v3726
    %v3732 = vld [vmem:[#allocation41] sm:$0xff]
    %v3733 = vld [vmem:[#allocation41 + $0x8] sm:$0xff]
    %v3734 = vld [vmem:[#allocation41 + $0x10] sm:$0xff]
    %v3735 = vld [vmem:[#allocation41 + $0x18] sm:$0xff]
    %v3736 = vld [vmem:[#allocation41 + $0x20] sm:$0xff]
    %v3737 = vld [vmem:[#allocation41 + $0x28] sm:$0xff]
    %v3738 = vld [vmem:[#allocation41 + $0x30] sm:$0xff]
    %v3739 = vld [vmem:[#allocation41 + $0x38] sm:$0xff]
    %v3740 = vld [vmem:[#allocation41 + $0x40] sm:$0xff]
    %v3741 = vld [vmem:[#allocation41 + $0x48] sm:$0xff]
    %v3742 = vld [vmem:[#allocation41 + $0x50] sm:$0xff]
    %v3743 = vld [vmem:[#allocation41 + $0x58] sm:$0xff]
    %v3744 = vld [vmem:[#allocation41 + $0x60] sm:$0xff]
    %v3745 = vld [vmem:[#allocation41 + $0x68] sm:$0xff]
    %v3746 = vld [vmem:[#allocation41 + $0x70] sm:$0xff]
    %v3747 = vld [vmem:[#allocation41 + $0x78] sm:$0xff]
    %v3748 = vld [vmem:[#allocation41 + $0x80] sm:$0xff]
    %v3749 = vld [vmem:[#allocation41 + $0x88] sm:$0xff]
    %v3750 = vld [vmem:[#allocation41 + $0x90] sm:$0xff]
    %v3751 = vld [vmem:[#allocation41 + $0x98] sm:$0xff]
    %v3752 = vld [vmem:[#allocation41 + $0xa0] sm:$0xff]
    %v3753 = vld [vmem:[#allocation41 + $0xa8] sm:$0xff]
    %v3754 = vld [vmem:[#allocation41 + $0xb0] sm:$0xff]
    %v3755 = vld [vmem:[#allocation41 + $0xb8] sm:$0xff]
    %v3756 = vld [vmem:[#allocation41 + $0xc0] sm:$0xff]
    %v3757 = vld [vmem:[#allocation41 + $0xc8] sm:$0xff]
    %v3758 = vld [vmem:[#allocation41 + $0xd0] sm:$0xff]
    %v3759 = vld [vmem:[#allocation41 + $0xd8] sm:$0xff]
    %v3760 = vld [vmem:[#allocation41 + $0xe0] sm:$0xff]
    %v3761 = vld [vmem:[#allocation41 + $0xe8] sm:$0xff]
    %v3762 = vld [vmem:[#allocation41 + $0xf0] sm:$0xff]
    %v3763 = vld [vmem:[#allocation41 + $0xf8] sm:$0xff]
    %v3764 = vld [vmem:[#allocation41 + $0x100] sm:$0xff]
    %v3765 = vld [vmem:[#allocation41 + $0x108] sm:$0xff]
    %v3766 = vld [vmem:[#allocation41 + $0x110] sm:$0xff]
    %v3767 = vld [vmem:[#allocation41 + $0x118] sm:$0xff]
    %v3768 = vld [vmem:[#allocation41 + $0x120] sm:$0xff]
    %v3769 = vld [vmem:[#allocation41 + $0x128] sm:$0xff]
    %v3770 = vld [vmem:[#allocation41 + $0x130] sm:$0xff]
    %v3771 = vld [vmem:[#allocation41 + $0x138] sm:$0xff]
    %v3772 = vld [vmem:[#allocation41 + $0x140] sm:$0xff]
    %v3773 = vld [vmem:[#allocation41 + $0x148] sm:$0xff]
    %v3774 = vld [vmem:[#allocation41 + $0x150] sm:$0xff]
    %v3775 = vld [vmem:[#allocation41 + $0x158] sm:$0xff]
    %v3776 = vld [vmem:[#allocation41 + $0x160] sm:$0xff]
    %v3777 = vld [vmem:[#allocation41 + $0x168] sm:$0xff]
    %v3778 = vld [vmem:[#allocation41 + $0x170] sm:$0xff]
    %v3779 = vld [vmem:[#allocation41 + $0x178] sm:$0xff]
    %v3780 = vld [vmem:[#allocation41 + $0x180] sm:$0xff]
    %v3781 = vld [vmem:[#allocation41 + $0x188] sm:$0xff]
    %v3782 = vld [vmem:[#allocation41 + $0x190] sm:$0xff]
    %v3783 = vld [vmem:[#allocation41 + $0x198] sm:$0xff]
    %v3784 = vld [vmem:[#allocation41 + $0x1a0] sm:$0xff]
    %v3785 = vld [vmem:[#allocation41 + $0x1a8] sm:$0xff]
    %v3786 = vld [vmem:[#allocation41 + $0x1b0] sm:$0xff]
    %v3787 = vld [vmem:[#allocation41 + $0x1b8] sm:$0xff]
    %v3788 = vld [vmem:[#allocation41 + $0x1c0] sm:$0xff]
    %v3789 = vld [vmem:[#allocation41 + $0x1c8] sm:$0xff]
    %v3790 = vld [vmem:[#allocation41 + $0x1d0] sm:$0xff]
    %v3791 = vld [vmem:[#allocation41 + $0x1d8] sm:$0xff]
    %v3792 = vld [vmem:[#allocation41 + $0x1e0] sm:$0xff]
    %v3793 = vld [vmem:[#allocation41 + $0x1e8] sm:$0xff]
    %v3794 = vld [vmem:[#allocation41 + $0x1f0] sm:$0xff]
    %v3795 = vld [vmem:[#allocation41 + $0x1f8] sm:$0xff]
    %v3798 = vrot.slane %v3730, 1
    %v3799 = vrot.slane %v3731, 1
    %v3834 = vunpack.c.l.b16 %v3764
    %v3835 = vunpack.c.h.b16 %v3764
    %v3836 = vunpack.c.l.b16 %v3765
    %v3837 = vunpack.c.h.b16 %v3765
    %v3838 = vunpack.c.l.b16 %v3766
    %v3839 = vunpack.c.h.b16 %v3766
    %v3840 = vunpack.c.l.b16 %v3767
    %v3841 = vunpack.c.h.b16 %v3767
    %v3842 = vunpack.c.l.b16 %v3768
    %v3843 = vunpack.c.h.b16 %v3768
    %v3844 = vunpack.c.l.b16 %v3769
    %v3845 = vunpack.c.h.b16 %v3769
    %v3846 = vunpack.c.l.b16 %v3770
    %v3847 = vunpack.c.h.b16 %v3770
    %v3848 = vunpack.c.l.b16 %v3771
    %v3849 = vunpack.c.h.b16 %v3771
    %v3850 = vunpack.c.l.b16 %v3772
    %v3851 = vunpack.c.h.b16 %v3772
    %v3852 = vunpack.c.l.b16 %v3773
    %v3853 = vunpack.c.h.b16 %v3773
    %v3854 = vunpack.c.l.b16 %v3774
    %v3855 = vunpack.c.h.b16 %v3774
    %v3856 = vunpack.c.l.b16 %v3775
    %v3857 = vunpack.c.h.b16 %v3775
    %v3858 = vunpack.c.l.b16 %v3776
    %v3859 = vunpack.c.h.b16 %v3776
    %v3860 = vunpack.c.l.b16 %v3777
    %v3861 = vunpack.c.h.b16 %v3777
    %v3862 = vunpack.c.l.b16 %v3778
    %v3863 = vunpack.c.h.b16 %v3778
    %v3864 = vunpack.c.l.b16 %v3779
    %v3865 = vunpack.c.h.b16 %v3779
    %v3866 = vunpack.c.l.b16 %v3780
    %v3867 = vunpack.c.h.b16 %v3780
    %v3868 = vunpack.c.l.b16 %v3781
    %v3869 = vunpack.c.h.b16 %v3781
    %v3870 = vunpack.c.l.b16 %v3782
    %v3871 = vunpack.c.h.b16 %v3782
    %v3872 = vunpack.c.l.b16 %v3783
    %v3873 = vunpack.c.h.b16 %v3783
    %v3874 = vunpack.c.l.b16 %v3784
    %v3875 = vunpack.c.h.b16 %v3784
    %v3876 = vunpack.c.l.b16 %v3785
    %v3877 = vunpack.c.h.b16 %v3785
    %v3878 = vunpack.c.l.b16 %v3786
    %v3879 = vunpack.c.h.b16 %v3786
    %v3880 = vunpack.c.l.b16 %v3787
    %v3881 = vunpack.c.h.b16 %v3787
    %v3882 = vunpack.c.l.b16 %v3788
    %v3883 = vunpack.c.h.b16 %v3788
    %v3884 = vunpack.c.l.b16 %v3789
    %v3885 = vunpack.c.h.b16 %v3789
    %v3886 = vunpack.c.l.b16 %v3790
    %v3887 = vunpack.c.h.b16 %v3790
    %v3888 = vunpack.c.l.b16 %v3791
    %v3889 = vunpack.c.h.b16 %v3791
    %v3890 = vunpack.c.l.b16 %v3792
    %v3891 = vunpack.c.h.b16 %v3792
    %v3892 = vunpack.c.l.b16 %v3793
    %v3893 = vunpack.c.h.b16 %v3793
    %v3894 = vunpack.c.l.b16 %v3794
    %v3895 = vunpack.c.h.b16 %v3794
    %v3896 = vunpack.c.l.b16 %v3795
    %v3897 = vunpack.c.h.b16 %v3795
    %v3898 = vpack.c.b16 %v3836, %v3834
    %v3899 = vpack.c.b16 %v3837, %v3835
    %v3900 = vpack.c.b16 %v3840, %v3838
    %v3901 = vpack.c.b16 %v3841, %v3839
    %v3902 = vpack.c.b16 %v3844, %v3842
    %v3903 = vpack.c.b16 %v3845, %v3843
    %v3904 = vpack.c.b16 %v3848, %v3846
    %v3905 = vpack.c.b16 %v3849, %v3847
    %v3906 = vpack.c.b16 %v3852, %v3850
    %v3907 = vpack.c.b16 %v3853, %v3851
    %v3908 = vpack.c.b16 %v3856, %v3854
    %v3909 = vpack.c.b16 %v3857, %v3855
    %v3910 = vpack.c.b16 %v3860, %v3858
    %v3911 = vpack.c.b16 %v3861, %v3859
    %v3912 = vpack.c.b16 %v3864, %v3862
    %v3913 = vpack.c.b16 %v3865, %v3863
    %v3914 = vpack.c.b16 %v3868, %v3866
    %v3915 = vpack.c.b16 %v3869, %v3867
    %v3916 = vpack.c.b16 %v3872, %v3870
    %v3917 = vpack.c.b16 %v3873, %v3871
    %v3918 = vpack.c.b16 %v3876, %v3874
    %v3919 = vpack.c.b16 %v3877, %v3875
    %v3920 = vpack.c.b16 %v3880, %v3878
    %v3921 = vpack.c.b16 %v3881, %v3879
    %v3922 = vpack.c.b16 %v3884, %v3882
    %v3923 = vpack.c.b16 %v3885, %v3883
    %v3924 = vpack.c.b16 %v3888, %v3886
    %v3925 = vpack.c.b16 %v3889, %v3887
    %v3926 = vpack.c.b16 %v3892, %v3890
    %v3927 = vpack.c.b16 %v3893, %v3891
    %v3928 = vpack.c.b16 %v3896, %v3894
    %v3929 = vpack.c.b16 %v3897, %v3895
    %3962 = vmatprep.subr.bf16.mxu0 %v3913
    %3963 = vmatpush1.bf16.msra.mxu0 %v3912
    %3964 = vmatprep.subr.bf16.mxu0 %v3911
    %3965 = vmatpush1.bf16.msra.mxu0 %v3910
    %3966 = vmatprep.subr.bf16.mxu0 %v3909
    %3967 = vmatpush1.bf16.msra.mxu0 %v3908
    %3968 = vmatprep.subr.bf16.mxu0 %v3907
    %3969 = vmatpush1.bf16.msra.mxu0 %v3906
    %3970 = vmatprep.subr.bf16.mxu0 %v3905
    %3971 = vmatpush1.bf16.msra.mxu0 %v3904
    %3972 = vmatprep.subr.bf16.mxu0 %v3903
    %3973 = vmatpush1.bf16.msra.mxu0 %v3902
    %3974 = vmatprep.subr.bf16.mxu0 %v3901
    %3975 = vmatpush1.bf16.msra.mxu0 %v3900
    %3976 = vmatprep.subr.bf16.mxu0 %v3899
    %3977 = vmatpush1.bf16.msra.mxu0 %v3898
    %3978 = vmatprep.subr.bf16.mxu0 %v3929
    %3979 = vmatpush2.bf16.msra.mxu0 %v3928
    %3980 = vmatprep.subr.bf16.mxu0 %v3927
    %3981 = vmatpush2.bf16.msra.mxu0 %v3926
    %3982 = vmatprep.subr.bf16.mxu0 %v3925
    %3983 = vmatpush2.bf16.msra.mxu0 %v3924
    %3984 = vmatprep.subr.bf16.mxu0 %v3923
    %3985 = vmatpush2.bf16.msra.mxu0 %v3922
    %3986 = vmatprep.subr.bf16.mxu0 %v3921
    %3987 = vmatpush2.bf16.msra.mxu0 %v3920
    %3988 = vmatprep.subr.bf16.mxu0 %v3919
    %3989 = vmatpush2.bf16.msra.mxu0 %v3918
    %3990 = vmatprep.subr.bf16.mxu0 %v3917
    %3991 = vmatpush2.bf16.msra.mxu0 %v3916
    %3992 = vmatprep.subr.bf16.mxu0 %v3915
    %3993 = vmatpush2.bf16.msra.mxu0 %v3914
    %3994 = vmatprep.mubr.bf16.mxu0 %v3799
    %3995 = vmatmul.mubr.bf16.gmra.mxu0 %v3798
    %v3996 = vpop.f32.mrf.mxu0
    %v3997 = vadd.f32 0.0, %v3996
    %v3998 = vpop.f32.mrf.mxu0
    %v3999 = vadd.f32 0.0, %v3998
    %v4000 = vpop.f32.mrf.mxu0
    %v4001 = vpop.f32.mrf.mxu0
    %4002 = vdwg.mxu0
    %v4035 = vunpack.c.l.b16 %v3732
    %v4036 = vunpack.c.h.b16 %v3732
    %v4037 = vunpack.c.l.b16 %v3733
    %v4038 = vunpack.c.h.b16 %v3733
    %v4039 = vunpack.c.l.b16 %v3734
    %v4040 = vunpack.c.h.b16 %v3734
    %v4041 = vunpack.c.l.b16 %v3735
    %v4042 = vunpack.c.h.b16 %v3735
    %v4043 = vunpack.c.l.b16 %v3736
    %v4044 = vunpack.c.h.b16 %v3736
    %v4045 = vunpack.c.l.b16 %v3737
    %v4046 = vunpack.c.h.b16 %v3737
    %v4047 = vunpack.c.l.b16 %v3738
    %v4048 = vunpack.c.h.b16 %v3738
    %v4049 = vunpack.c.l.b16 %v3739
    %v4050 = vunpack.c.h.b16 %v3739
    %v4051 = vunpack.c.l.b16 %v3740
    %v4052 = vunpack.c.h.b16 %v3740
    %v4053 = vunpack.c.l.b16 %v3741
    %v4054 = vunpack.c.h.b16 %v3741
    %v4055 = vunpack.c.l.b16 %v3742
    %v4056 = vunpack.c.h.b16 %v3742
    %v4057 = vunpack.c.l.b16 %v3743
    %v4058 = vunpack.c.h.b16 %v3743
    %v4059 = vunpack.c.l.b16 %v3744
    %v4060 = vunpack.c.h.b16 %v3744
    %v4061 = vunpack.c.l.b16 %v3745
    %v4062 = vunpack.c.h.b16 %v3745
    %v4063 = vunpack.c.l.b16 %v3746
    %v4064 = vunpack.c.h.b16 %v3746
    %v4065 = vunpack.c.l.b16 %v3747
    %v4066 = vunpack.c.h.b16 %v3747
    %v4067 = vunpack.c.l.b16 %v3748
    %v4068 = vunpack.c.h.b16 %v3748
    %v4069 = vunpack.c.l.b16 %v3749
    %v4070 = vunpack.c.h.b16 %v3749
    %v4071 = vunpack.c.l.b16 %v3750
    %v4072 = vunpack.c.h.b16 %v3750
    %v4073 = vunpack.c.l.b16 %v3751
    %v4074 = vunpack.c.h.b16 %v3751
    %v4075 = vunpack.c.l.b16 %v3752
    %v4076 = vunpack.c.h.b16 %v3752
    %v4077 = vunpack.c.l.b16 %v3753
    %v4078 = vunpack.c.h.b16 %v3753
    %v4079 = vunpack.c.l.b16 %v3754
    %v4080 = vunpack.c.h.b16 %v3754
    %v4081 = vunpack.c.l.b16 %v3755
    %v4082 = vunpack.c.h.b16 %v3755
    %v4083 = vunpack.c.l.b16 %v3756
    %v4084 = vunpack.c.h.b16 %v3756
    %v4085 = vunpack.c.l.b16 %v3757
    %v4086 = vunpack.c.h.b16 %v3757
    %v4087 = vunpack.c.l.b16 %v3758
    %v4088 = vunpack.c.h.b16 %v3758
    %v4089 = vunpack.c.l.b16 %v3759
    %v4090 = vunpack.c.h.b16 %v3759
    %v4091 = vunpack.c.l.b16 %v3760
    %v4092 = vunpack.c.h.b16 %v3760
    %v4093 = vunpack.c.l.b16 %v3761
    %v4094 = vunpack.c.h.b16 %v3761
    %v4095 = vunpack.c.l.b16 %v3762
    %v4096 = vunpack.c.h.b16 %v3762
    %v4097 = vunpack.c.l.b16 %v3763
    %v4098 = vunpack.c.h.b16 %v3763
    %v4099 = vpack.c.b16 %v4037, %v4035
    %v4100 = vpack.c.b16 %v4038, %v4036
    %v4101 = vpack.c.b16 %v4041, %v4039
    %v4102 = vpack.c.b16 %v4042, %v4040
    %v4103 = vpack.c.b16 %v4045, %v4043
    %v4104 = vpack.c.b16 %v4046, %v4044
    %v4105 = vpack.c.b16 %v4049, %v4047
    %v4106 = vpack.c.b16 %v4050, %v4048
    %v4107 = vpack.c.b16 %v4053, %v4051
    %v4108 = vpack.c.b16 %v4054, %v4052
    %v4109 = vpack.c.b16 %v4057, %v4055
    %v4110 = vpack.c.b16 %v4058, %v4056
    %v4111 = vpack.c.b16 %v4061, %v4059
    %v4112 = vpack.c.b16 %v4062, %v4060
    %v4113 = vpack.c.b16 %v4065, %v4063
    %v4114 = vpack.c.b16 %v4066, %v4064
    %v4115 = vpack.c.b16 %v4069, %v4067
    %v4116 = vpack.c.b16 %v4070, %v4068
    %v4117 = vpack.c.b16 %v4073, %v4071
    %v4118 = vpack.c.b16 %v4074, %v4072
    %v4119 = vpack.c.b16 %v4077, %v4075
    %v4120 = vpack.c.b16 %v4078, %v4076
    %v4121 = vpack.c.b16 %v4081, %v4079
    %v4122 = vpack.c.b16 %v4082, %v4080
    %v4123 = vpack.c.b16 %v4085, %v4083
    %v4124 = vpack.c.b16 %v4086, %v4084
    %v4125 = vpack.c.b16 %v4089, %v4087
    %v4126 = vpack.c.b16 %v4090, %v4088
    %v4127 = vpack.c.b16 %v4093, %v4091
    %v4128 = vpack.c.b16 %v4094, %v4092
    %v4129 = vpack.c.b16 %v4097, %v4095
    %v4130 = vpack.c.b16 %v4098, %v4096
    %4163 = vmatprep.subr.bf16.mxu0 %v4114
    %4164 = vmatpush1.bf16.msra.mxu0 %v4113
    %4165 = vmatprep.subr.bf16.mxu0 %v4112
    %4166 = vmatpush1.bf16.msra.mxu0 %v4111
    %4167 = vmatprep.subr.bf16.mxu0 %v4110
    %4168 = vmatpush1.bf16.msra.mxu0 %v4109
    %4169 = vmatprep.subr.bf16.mxu0 %v4108
    %4170 = vmatpush1.bf16.msra.mxu0 %v4107
    %4171 = vmatprep.subr.bf16.mxu0 %v4106
    %4172 = vmatpush1.bf16.msra.mxu0 %v4105
    %4173 = vmatprep.subr.bf16.mxu0 %v4104
    %4174 = vmatpush1.bf16.msra.mxu0 %v4103
    %4175 = vmatprep.subr.bf16.mxu0 %v4102
    %4176 = vmatpush1.bf16.msra.mxu0 %v4101
    %4177 = vmatprep.subr.bf16.mxu0 %v4100
    %4178 = vmatpush1.bf16.msra.mxu0 %v4099
    %4179 = vmatprep.subr.bf16.mxu0 %v4130
    %4180 = vmatpush2.bf16.msra.mxu0 %v4129
    %4181 = vmatprep.subr.bf16.mxu0 %v4128
    %4182 = vmatpush2.bf16.msra.mxu0 %v4127
    %4183 = vmatprep.subr.bf16.mxu0 %v4126
    %4184 = vmatpush2.bf16.msra.mxu0 %v4125
    %4185 = vmatprep.subr.bf16.mxu0 %v4124
    %4186 = vmatpush2.bf16.msra.mxu0 %v4123
    %4187 = vmatprep.subr.bf16.mxu0 %v4122
    %4188 = vmatpush2.bf16.msra.mxu0 %v4121
    %4189 = vmatprep.subr.bf16.mxu0 %v4120
    %4190 = vmatpush2.bf16.msra.mxu0 %v4119
    %4191 = vmatprep.subr.bf16.mxu0 %v4118
    %4192 = vmatpush2.bf16.msra.mxu0 %v4117
    %4193 = vmatprep.subr.bf16.mxu0 %v4116
    %4194 = vmatpush2.bf16.msra.mxu0 %v4115
    %4195 = vmatprep.mubr.bf16.mxu0 %v3731
    %4196 = vmatmul.mubr.bf16.gmra.mxu0 %v3730
    %v4197 = vpop.f32.mrf.mxu0
    %v4198 = vadd.f32 %v3997, %v4197
    %v4199 = vpop.f32.mrf.mxu0
    %v4200 = vadd.f32 %v3999, %v4199
    %v4201 = vpop.f32.mrf.mxu0
    %v4202 = vpop.f32.mrf.mxu0
    %4203 = vdwg.mxu0
    %v4204 = vld [vmem:[#allocation41 + $0x200] sm:$0xff]
    %v4205 = vld [vmem:[#allocation41 + $0x208] sm:$0xff]
    %v4206 = vld [vmem:[#allocation41 + $0x210] sm:$0xff]
    %v4207 = vld [vmem:[#allocation41 + $0x218] sm:$0xff]
    %v4208 = vld [vmem:[#allocation41 + $0x220] sm:$0xff]
    %v4209 = vld [vmem:[#allocation41 + $0x228] sm:$0xff]
    %v4210 = vld [vmem:[#allocation41 + $0x230] sm:$0xff]
    %v4211 = vld [vmem:[#allocation41 + $0x238] sm:$0xff]
    %v4212 = vld [vmem:[#allocation41 + $0x240] sm:$0xff]
    %v4213 = vld [vmem:[#allocation41 + $0x248] sm:$0xff]
    %v4214 = vld [vmem:[#allocation41 + $0x250] sm:$0xff]
    %v4215 = vld [vmem:[#allocation41 + $0x258] sm:$0xff]
    %v4216 = vld [vmem:[#allocation41 + $0x260] sm:$0xff]
    %v4217 = vld [vmem:[#allocation41 + $0x268] sm:$0xff]
    %v4218 = vld [vmem:[#allocation41 + $0x270] sm:$0xff]
    %v4219 = vld [vmem:[#allocation41 + $0x278] sm:$0xff]
    %v4220 = vld [vmem:[#allocation41 + $0x280] sm:$0xff]
    %v4221 = vld [vmem:[#allocation41 + $0x288] sm:$0xff]
    %v4222 = vld [vmem:[#allocation41 + $0x290] sm:$0xff]
    %v4223 = vld [vmem:[#allocation41 + $0x298] sm:$0xff]
    %v4224 = vld [vmem:[#allocation41 + $0x2a0] sm:$0xff]
    %v4225 = vld [vmem:[#allocation41 + $0x2a8] sm:$0xff]
    %v4226 = vld [vmem:[#allocation41 + $0x2b0] sm:$0xff]
    %v4227 = vld [vmem:[#allocation41 + $0x2b8] sm:$0xff]
    %v4228 = vld [vmem:[#allocation41 + $0x2c0] sm:$0xff]
    %v4229 = vld [vmem:[#allocation41 + $0x2c8] sm:$0xff]
    %v4230 = vld [vmem:[#allocation41 + $0x2d0] sm:$0xff]
    %v4231 = vld [vmem:[#allocation41 + $0x2d8] sm:$0xff]
    %v4232 = vld [vmem:[#allocation41 + $0x2e0] sm:$0xff]
    %v4233 = vld [vmem:[#allocation41 + $0x2e8] sm:$0xff]
    %v4234 = vld [vmem:[#allocation41 + $0x2f0] sm:$0xff]
    %v4235 = vld [vmem:[#allocation41 + $0x2f8] sm:$0xff]
    %v4236 = vrot.slane %v3730, 2
    %v4237 = vrot.slane %v3731, 2
    %v4272 = vunpack.c.l.b16 %v4204
    %v4273 = vunpack.c.h.b16 %v4204
    %v4274 = vunpack.c.l.b16 %v4205
    %v4275 = vunpack.c.h.b16 %v4205
    %v4276 = vunpack.c.l.b16 %v4206
    %v4277 = vunpack.c.h.b16 %v4206
    %v4278 = vunpack.c.l.b16 %v4207
    %v4279 = vunpack.c.h.b16 %v4207
    %v4280 = vunpack.c.l.b16 %v4208
    %v4281 = vunpack.c.h.b16 %v4208
    %v4282 = vunpack.c.l.b16 %v4209
    %v4283 = vunpack.c.h.b16 %v4209
    %v4284 = vunpack.c.l.b16 %v4210
    %v4285 = vunpack.c.h.b16 %v4210
    %v4286 = vunpack.c.l.b16 %v4211
    %v4287 = vunpack.c.h.b16 %v4211
    %v4288 = vunpack.c.l.b16 %v4212
    %v4289 = vunpack.c.h.b16 %v4212
    %v4290 = vunpack.c.l.b16 %v4213
    %v4291 = vunpack.c.h.b16 %v4213
    %v4292 = vunpack.c.l.b16 %v4214
    %v4293 = vunpack.c.h.b16 %v4214
    %v4294 = vunpack.c.l.b16 %v4215
    %v4295 = vunpack.c.h.b16 %v4215
    %v4296 = vunpack.c.l.b16 %v4216
    %v4297 = vunpack.c.h.b16 %v4216
    %v4298 = vunpack.c.l.b16 %v4217
    %v4299 = vunpack.c.h.b16 %v4217
    %v4300 = vunpack.c.l.b16 %v4218
    %v4301 = vunpack.c.h.b16 %v4218
    %v4302 = vunpack.c.l.b16 %v4219
    %v4303 = vunpack.c.h.b16 %v4219
    %v4304 = vunpack.c.l.b16 %v4220
    %v4305 = vunpack.c.h.b16 %v4220
    %v4306 = vunpack.c.l.b16 %v4221
    %v4307 = vunpack.c.h.b16 %v4221
    %v4308 = vunpack.c.l.b16 %v4222
    %v4309 = vunpack.c.h.b16 %v4222
    %v4310 = vunpack.c.l.b16 %v4223
    %v4311 = vunpack.c.h.b16 %v4223
    %v4312 = vunpack.c.l.b16 %v4224
    %v4313 = vunpack.c.h.b16 %v4224
    %v4314 = vunpack.c.l.b16 %v4225
    %v4315 = vunpack.c.h.b16 %v4225
    %v4316 = vunpack.c.l.b16 %v4226
    %v4317 = vunpack.c.h.b16 %v4226
    %v4318 = vunpack.c.l.b16 %v4227
    %v4319 = vunpack.c.h.b16 %v4227
    %v4320 = vunpack.c.l.b16 %v4228
    %v4321 = vunpack.c.h.b16 %v4228
    %v4322 = vunpack.c.l.b16 %v4229
    %v4323 = vunpack.c.h.b16 %v4229
    %v4324 = vunpack.c.l.b16 %v4230
    %v4325 = vunpack.c.h.b16 %v4230
    %v4326 = vunpack.c.l.b16 %v4231
    %v4327 = vunpack.c.h.b16 %v4231
    %v4328 = vunpack.c.l.b16 %v4232
    %v4329 = vunpack.c.h.b16 %v4232
    %v4330 = vunpack.c.l.b16 %v4233
    %v4331 = vunpack.c.h.b16 %v4233
    %v4332 = vunpack.c.l.b16 %v4234
    %v4333 = vunpack.c.h.b16 %v4234
    %v4334 = vunpack.c.l.b16 %v4235
    %v4335 = vunpack.c.h.b16 %v4235
    %v4336 = vpack.c.b16 %v4274, %v4272
    %v4337 = vpack.c.b16 %v4275, %v4273
    %v4338 = vpack.c.b16 %v4278, %v4276
    %v4339 = vpack.c.b16 %v4279, %v4277
    %v4340 = vpack.c.b16 %v4282, %v4280
    %v4341 = vpack.c.b16 %v4283, %v4281
    %v4342 = vpack.c.b16 %v4286, %v4284
    %v4343 = vpack.c.b16 %v4287, %v4285
    %v4344 = vpack.c.b16 %v4290, %v4288
    %v4345 = vpack.c.b16 %v4291, %v4289
    %v4346 = vpack.c.b16 %v4294, %v4292
    %v4347 = vpack.c.b16 %v4295, %v4293
    %v4348 = vpack.c.b16 %v4298, %v4296
    %v4349 = vpack.c.b16 %v4299, %v4297
    %v4350 = vpack.c.b16 %v4302, %v4300
    %v4351 = vpack.c.b16 %v4303, %v4301
    %v4352 = vpack.c.b16 %v4306, %v4304
    %v4353 = vpack.c.b16 %v4307, %v4305
    %v4354 = vpack.c.b16 %v4310, %v4308
    %v4355 = vpack.c.b16 %v4311, %v4309
    %v4356 = vpack.c.b16 %v4314, %v4312
    %v4357 = vpack.c.b16 %v4315, %v4313
    %v4358 = vpack.c.b16 %v4318, %v4316
    %v4359 = vpack.c.b16 %v4319, %v4317
    %v4360 = vpack.c.b16 %v4322, %v4320
    %v4361 = vpack.c.b16 %v4323, %v4321
    %v4362 = vpack.c.b16 %v4326, %v4324
    %v4363 = vpack.c.b16 %v4327, %v4325
    %v4364 = vpack.c.b16 %v4330, %v4328
    %v4365 = vpack.c.b16 %v4331, %v4329
    %v4366 = vpack.c.b16 %v4334, %v4332
    %v4367 = vpack.c.b16 %v4335, %v4333
    %4400 = vmatprep.subr.bf16.mxu0 %v4351
    %4401 = vmatpush1.bf16.msra.mxu0 %v4350
    %4402 = vmatprep.subr.bf16.mxu0 %v4349
    %4403 = vmatpush1.bf16.msra.mxu0 %v4348
    %4404 = vmatprep.subr.bf16.mxu0 %v4347
    %4405 = vmatpush1.bf16.msra.mxu0 %v4346
    %4406 = vmatprep.subr.bf16.mxu0 %v4345
    %4407 = vmatpush1.bf16.msra.mxu0 %v4344
    %4408 = vmatprep.subr.bf16.mxu0 %v4343
    %4409 = vmatpush1.bf16.msra.mxu0 %v4342
    %4410 = vmatprep.subr.bf16.mxu0 %v4341
    %4411 = vmatpush1.bf16.msra.mxu0 %v4340
    %4412 = vmatprep.subr.bf16.mxu0 %v4339
    %4413 = vmatpush1.bf16.msra.mxu0 %v4338
    %4414 = vmatprep.subr.bf16.mxu0 %v4337
    %4415 = vmatpush1.bf16.msra.mxu0 %v4336
    %4416 = vmatprep.subr.bf16.mxu0 %v4367
    %4417 = vmatpush2.bf16.msra.mxu0 %v4366
    %4418 = vmatprep.subr.bf16.mxu0 %v4365
    %4419 = vmatpush2.bf16.msra.mxu0 %v4364
    %4420 = vmatprep.subr.bf16.mxu0 %v4363
    %4421 = vmatpush2.bf16.msra.mxu0 %v4362
    %4422 = vmatprep.subr.bf16.mxu0 %v4361
    %4423 = vmatpush2.bf16.msra.mxu0 %v4360
    %4424 = vmatprep.subr.bf16.mxu0 %v4359
    %4425 = vmatpush2.bf16.msra.mxu0 %v4358
    %4426 = vmatprep.subr.bf16.mxu0 %v4357
    %4427 = vmatpush2.bf16.msra.mxu0 %v4356
    %4428 = vmatprep.subr.bf16.mxu0 %v4355
    %4429 = vmatpush2.bf16.msra.mxu0 %v4354
    %4430 = vmatprep.subr.bf16.mxu0 %v4353
    %4431 = vmatpush2.bf16.msra.mxu0 %v4352
    %4432 = vmatprep.mubr.bf16.mxu0 %v4237
    %4433 = vmatmul.mubr.bf16.gmra.mxu0 %v4236
    %v4434 = vpop.f32.mrf.mxu0
    %v4435 = vadd.f32 0.0, %v4434
    %v4436 = vpop.f32.mrf.mxu0
    %v4437 = vadd.f32 0.0, %v4436
    %v4438 = vpop.f32.mrf.mxu0
    %v4439 = vpop.f32.mrf.mxu0
    %4440 = vdwg.mxu0
    %v4441 = vadd.f32 %v4198, %v4435
    %v4442 = vadd.f32 %v4200, %v4437
    %v4443 = vld [vmem:[#allocation40] sm:$0x3]
    %v4445 = vlaneseq
    %v4446 = vshrl.u32 %v4445, 7
    %v4447 = vsub.s32 0, %v4446
    %v4448 = vrot.slane %v4443, %v4447
    %v4449 = vlaneseq
    %v4450 = vshrl.u32 %v4449, 7
    %v4451 = vsub.s32 1, %v4450
    %v4452 = vrot.slane %v4443, %v4451
    %v4455 = vmul.f32 %v4441, %v4448
    %v4456 = vmul.f32 %v4442, %v4452
    %v4457 = vld [vmem:[#allocation38] sm:$0x3]
    %v4459 = vlaneseq
    %v4460 = vshrl.u32 %v4459, 7
    %v4461 = vsub.s32 0, %v4460
    %v4462 = vrot.slane %v4457, %v4461
    %v4463 = vlaneseq
    %v4464 = vshrl.u32 %v4463, 7
    %v4465 = vsub.s32 1, %v4464
    %v4466 = vrot.slane %v4457, %v4465
    %v4469 = vadd.f32 %v4455, %v4462
    %v4470 = vadd.f32 %v4456, %v4466
    %v4471 = vadd.f32 %v4469, %v3675
    %v4472 = vadd.f32 %v4470, %v3676
    %v4473 = vmax.f32 %v4471, 0.0
    %v4474 = vmax.f32 %v4472, 0.0
    %v4477 = vcombine.low %v4473, %v4474
    %v4479 = vunpack.c.l.s4 1966171168
    %v4480 = vunpack.c.0.s8 %v4479
    %v4481 = vlaneseq
    %v4482 = vshrl.u32 %v4481, 7
    %v4483 = vsub.s32 %v4480, %v4482
    %v4484 = vrot.slane %v4477, %v4483
    %v4486 = vunpack.c.l.s4 1966171168
    %v4487 = vunpack.c.0.s8 %v4486
    %v4488 = vlaneseq
    %v4489 = vshrl.u32 %v4488, 7
    %v4490 = vsub.s32 %v4487, %v4489
    %v4491 = vrot.slane %v4484, %v4490
    %v4493 = vlaneseq
    %vm4494 = vcmp.ge.s32.totalorder %v4493, 0
    %vm4495 = vcmp.lt.s32.totalorder %v4493, 256
    %vm4496 = vmand %vm4494, %vm4495
    %4497 = vst.msk [vmem:[#allocation52] ss:$2 sm:$0x3] %vm4496, %v4491
    %v4498 = vcombine.high %v4484, %v4484
    %v4500 = vunpack.c.l.s4 1966171168
    %v4501 = vunpack.c.0.s8 %v4500
    %v4502 = vlaneseq
    %v4503 = vshrl.u32 %v4502, 7
    %v4504 = vsub.s32 %v4501, %v4503
    %v4505 = vrot.slane %v4498, %v4504
    %s4507 = scalar_lea.vmem [#allocation52], 1
    %4508 = vst.msk [vmem:[%s4507] ss:$2 sm:$0x3] %vm4496, %v4505
    // Predicated region
    $region330: #{tpu_custom_call.1} parent=1 // pred_check
      _
    $region331: #{tpu_custom_call.1} parent=1 // pred_check_branch
      %4510 = sbr.rel (0) target = $region333
    $region332: #{tpu_custom_call.1} parent=1 // pred_region
      %s4512 = ssub.s32 64, 64
      %4513 = vsyncadd [#allocation4], %s4512
      %s4515 = sshll.u32 [#allocation52], 4
      %s4516 = int_to_ptr.vmem [resolvable:$true] %s4515
      %4518 = dma.vmem_to_hbm [thread:$0]  %s4516, 64, %s101, [#allocation4]
    $region333: #{tpu_custom_call.1} parent=1 // pred_fallthru
      _
    // Predicated region
    $region334: #{tpu_custom_call.1} parent=1 // pred_check
      _
    $region335: #{tpu_custom_call.1} parent=1 // pred_check_branch
      %4520 = sbr.rel (0) target = $region337
    $region336: #{tpu_custom_call.1} parent=1 // pred_region
      %4521 = dma.done [#allocation4], 64
    $region337: #{tpu_custom_call.1} parent=1 // pred_fallthru
      _
    %4522 = vsyncpa [#allocation3], 1
    %4523 = vsyncpa [#allocation6], 1
    %4524 = vsyncpa [#allocation9], 1
    %4525 = vsyncpa [#allocation12], 1
    %4526 = vsyncpa [#allocation15], 1
    %4527 = vsyncpa [#allocation18], 1
    %4528 = vsyncpa [#allocation21], 1
    %4529 = vsyncpa [#allocation24], 1
    %4530 = vsyncpa [#allocation27], 1
    %4531 = vsyncpa [#allocation30], 1
    %4532 = vsyncpa [#allocation33], 1
    %4533 = vsyncpa [#allocation36], 1
    %4534 = vsyncpa [#allocation39], 1
    %4535 = vsyncpa [#allocation42], 1
    %4536 = vsyncpa [#allocation45], 1
    %4537 = vsyncpa [#allocation48], 1
    %4538 = vsyncpa [#allocation51], 1
    %4539 = vsyncpa [#allocation4], 1

</llo_original>
